<compile_context>
chip_gen: v7x
topology: tpu7x:2x2x1
jax: 0.10.0
libtpu: 0.0.40
codegen_flags: <defaults>
</compile_context>

<pallas_src>
import functools

import jax
import jax.numpy as jnp
from jax import lax
from jax.experimental import pallas as pl
from jax.experimental.pallas import tpu as pltpu

_LN_EPS = 1e-5                 # torch.nn.LayerNorm default eps
_INV_SQRT2 = 0.7071067811865476


def _layernorm_f32(x, gamma, beta):
    """LayerNorm over the last axis, computed in f32."""
    x = x.astype(jnp.float32)
    mu = jnp.mean(x, axis=-1, keepdims=True)
    var = jnp.mean(jnp.square(x - mu), axis=-1, keepdims=True)
    return (x - mu) * lax.rsqrt(var + _LN_EPS) * gamma + beta


def _vmem_limit_bytes(estimate):
    return int(min(max(2 * estimate, 16 * 1024 * 1024), 64 * 1024 * 1024))


def _pick_row_tile(m):
    """Largest lane/sublane-friendly row tile that divides m and (when
    possible) leaves >=2 grid steps so both TCs on v7x get work."""
    cap = max(m // 2, 128)
    for t in (512, 256, 128, 64, 32, 16, 8):
        if t <= cap and m % t == 0:
            return t
    return m  # ragged fallback: single full-size block


# ---------------------------------------------------------------------------
# Kernel A: out = x_q + MHA(norm1(x_q), norm1_q(x_kv))      (one batch / step)
# ---------------------------------------------------------------------------
def _attn_block_kernel(num_heads, head_dim,
                       xq_ref, xkv_ref,
                       g1_ref, b1_ref, g1q_ref, b1q_ref,
                       wq_ref, bq_ref, wk_ref, bk_ref, wv_ref, bv_ref,
                       wo_ref, bo_ref,
                       out_ref):
    xq = xq_ref[0]                               # (Nq, C)  f32
    xkv = xkv_ref[0]                             # (Nkv, C) f32

    # Pre-norms in f32, single cast to bf16 for the MXU.
    xq_n = _layernorm_f32(xq, g1_ref[...], b1_ref[...]).astype(jnp.bfloat16)
    xkv_n = _layernorm_f32(xkv, g1q_ref[...], b1q_ref[...]).astype(jnp.bfloat16)

    # Q/K/V projections: bf16 operands, f32 accumulation, f32 bias add.
    q = jnp.dot(xq_n, wq_ref[...], preferred_element_type=jnp.float32) + bq_ref[...]
    k = jnp.dot(xkv_n, wk_ref[...], preferred_element_type=jnp.float32) + bk_ref[...]
    v = jnp.dot(xkv_n, wv_ref[...], preferred_element_type=jnp.float32) + bv_ref[...]

    q = q * (head_dim ** -0.5)

    wo = wo_ref[...]                             # (C, C) bf16, resident
    nq, c = xq.shape
    acc = jnp.zeros((nq, c), jnp.float32)        # attention output accumulator

    # Static per-head loop; head_dim is a multiple of 128 so every slice below
    # is lane/sublane aligned (no relayouts).
    for h in range(num_heads):
        lo = h * head_dim
        hi = lo + head_dim
        qh = q[:, lo:hi].astype(jnp.bfloat16)    # (Nq, Dh)
        kh = k[:, lo:hi].astype(jnp.bfloat16)    # (Nkv, Dh)
        vh = v[:, lo:hi].astype(jnp.bfloat16)    # (Nkv, Dh)

        # scores = qh @ kh^T (contract head dim), f32 accumulation on the MXU.
        s = lax.dot_general(qh, kh, (((1,), (1,)), ((), ())),
                            preferred_element_type=jnp.float32)   # (Nq, Nkv)
        m = jnp.max(s, axis=-1, keepdims=True)
        p = jnp.exp(s - m)                                        # EUP
        p = p * pl.reciprocal(jnp.sum(p, axis=-1, keepdims=True), approx=True)

        ctx = jnp.dot(p.astype(jnp.bfloat16), vh,
                      preferred_element_type=jnp.float32)         # (Nq, Dh)
        # Fold each head directly into the output projection: ctx @ Wo[rows h].
        acc += jnp.dot(ctx.astype(jnp.bfloat16), wo[lo:hi, :],
                       preferred_element_type=jnp.float32)

    # + proj bias, + residual (dropout / drop_path are identity at p = 0).
    out_ref[0] = (xq + acc + bo_ref[...]).astype(out_ref.dtype)


# ---------------------------------------------------------------------------
# Kernel B: out = x + fc2(GELU(fc1(norm2(x))))               (row tile / step)
# ---------------------------------------------------------------------------
def _mlp_block_kernel(x_ref, g2_ref, b2_ref, w1_ref, bb1_ref, w2_ref, bb2_ref,
                      out_ref):
    x = x_ref[...]                                              # (tm, C) f32
    xn = _layernorm_f32(x, g2_ref[...], b2_ref[...]).astype(jnp.bfloat16)
    h = jnp.dot(xn, w1_ref[...], preferred_element_type=jnp.float32) + bb1_ref[...]
    # Exact (erf) GELU — matches torch.nn.GELU default semantics.
    h = 0.5 * h * (1.0 + lax.erf(h * _INV_SQRT2))
    o = jnp.dot(h.astype(jnp.bfloat16), w2_ref[...],
                preferred_element_type=jnp.float32) + bb2_ref[...]
    out_ref[...] = (x + o).astype(out_ref.dtype)                # residual add


# ---------------------------------------------------------------------------
# Wrappers
# ---------------------------------------------------------------------------
def _attention_stage(x_q, x_kv, p, num_heads):
    B, Nq, C = x_q.shape
    Nkv = x_kv.shape[1]
    assert C % num_heads == 0
    assert C % 128 == 0 and Nq % 8 == 0 and Nkv % 8 == 0, "lane/sublane alignment"
    head_dim = C // num_heads

    f32 = jnp.float32
    row = lambda a: a.reshape(1, -1).astype(f32)      # LN params / biases as (1, C)
    wbf16 = lambda a: a.astype(jnp.bfloat16)          # weights shipped as bf16

    kernel = functools.partial(_attn_block_kernel, num_heads, head_dim)

    def const_spec(shape):
        return pl.BlockSpec(shape, lambda b: (0,) * len(shape))

    in_specs = [
        pl.BlockSpec((1, Nq, C), lambda b: (b, 0, 0)),    # x_q  batch tile
        pl.BlockSpec((1, Nkv, C), lambda b: (b, 0, 0)),   # x_kv batch tile
        const_spec((1, C)), const_spec((1, C)),           # norm1 gamma / beta
        const_spec((1, C)), const_spec((1, C)),           # norm1_q gamma / beta
        const_spec((C, C)), const_spec((1, C)),           # Wq, bq
        const_spec((C, C)), const_spec((1, C)),           # Wk, bk
        const_spec((C, C)), const_spec((1, C)),           # Wv, bv
        const_spec((C, C)), const_spec((1, C)),           # Wo, bo
    ]
    out_specs = pl.BlockSpec((1, Nq, C), lambda b: (b, 0, 0))

    # Resident VMEM estimate: double-buffered streams + f32 intermediates.
    est = (2 * Nq * C * 4 + 2 * Nkv * C * 4 + 2 * Nq * C * 4       # x_q/x_kv/out
           + 2 * 4 * C * C * 2                                     # 4 bf16 weights
           + (Nq + 2 * Nkv) * C * 4                                # q, k, v (f32)
           + 2 * Nq * Nkv * 4 + Nq * C * 4)                        # scores + acc
    cost = pl.CostEstimate(
        flops=int(2 * B * (2 * Nq * C * C + 2 * Nkv * C * C + 2 * Nq * Nkv * C)),
        transcendentals=int(B * num_heads * Nq * Nkv),
        bytes_accessed=int(4 * B * Nq * C * 2 + 4 * B * Nkv * C
                           + 2 * 4 * C * C + 4 * 12 * C),
    )

    return pl.pallas_call(
        kernel,
        out_shape=jax.ShapeDtypeStruct((B, Nq, C), x_q.dtype),
        grid_spec=pltpu.PrefetchScalarGridSpec(
            num_scalar_prefetch=0,
            grid=(B,),
            in_specs=in_specs,
            out_specs=out_specs,
        ),
        compiler_params=pltpu.CompilerParams(
            dimension_semantics=("parallel",),
            vmem_limit_bytes=_vmem_limit_bytes(est)),
        cost_estimate=cost,
    )(x_q.astype(f32), x_kv.astype(f32),
      row(p["norm1_g"]), row(p["norm1_b"]),
      row(p["norm1q_g"]), row(p["norm1q_b"]),
      wbf16(p["wq"]), row(p["bq"]),
      wbf16(p["wk"]), row(p["bk"]),
      wbf16(p["wv"]), row(p["bv"]),
      wbf16(p["wo"]), row(p["bo"]))


def _mlp_stage(x, p):
    B, N, C = x.shape
    Hd = p["w1"].shape[1]
    assert C % 128 == 0 and Hd % 128 == 0, "lane alignment"
    M = B * N
    tm = _pick_row_tile(M)

    f32 = jnp.float32
    row = lambda a: a.reshape(1, -1).astype(f32)
    wbf16 = lambda a: a.astype(jnp.bfloat16)

    x2 = x.reshape(M, C)

    # TODO(synk): for GPT-size Hd on v7x (64 MiB VMEM), add an H-tiled grid axis
    #             for fc1/fc2 instead of holding both weight matrices resident.
    est = (4 * tm * C * 4                      # x + out tiles, double-buffered
           + 2 * 2 * (C * Hd + Hd * C)         # bf16 weights, double-buffered
           + 2 * tm * Hd * 4                   # f32 hidden activation (+slack)
           + 8 * (C + Hd) * 4)
    cost = pl.CostEstimate(
        flops=int(2 * M * (C * Hd + Hd * C) + 12 * M * C),
        transcendentals=int(M * Hd),           # erf
        bytes_accessed=int(2 * 4 * M * C + 2 * (C * Hd + Hd * C)
                           + 4 * (3 * C + Hd)),
    )

    out2 = pl.pallas_call(
        _mlp_block_kernel,
        out_shape=jax.ShapeDtypeStruct((M, C), x.dtype),
        grid_spec=pltpu.PrefetchScalarGridSpec(
            num_scalar_prefetch=0,
            grid=(M // tm,),
            in_specs=[
                pl.BlockSpec((tm, C), lambda i: (i, 0)),      # rows of x
                pl.BlockSpec((1, C), lambda i: (0, 0)),       # norm2 gamma
                pl.BlockSpec((1, C), lambda i: (0, 0)),       # norm2 beta
                pl.BlockSpec((C, Hd), lambda i: (0, 0)),      # W1 (bf16, resident)
                pl.BlockSpec((1, Hd), lambda i: (0, 0)),      # b1
                pl.BlockSpec((Hd, C), lambda i: (0, 0)),      # W2 (bf16, resident)
                pl.BlockSpec((1, C), lambda i: (0, 0)),       # b2
            ],
            out_specs=pl.BlockSpec((tm, C), lambda i: (i, 0)),
        ),
        compiler_params=pltpu.CompilerParams(
            dimension_semantics=("parallel",),
            vmem_limit_bytes=_vmem_limit_bytes(est)),
        cost_estimate=cost,
    )(x2.astype(f32), row(p["norm2_g"]), row(p["norm2_b"]),
      wbf16(p["w1"]), row(p["b1"]), wbf16(p["w2"]), row(p["b2"]))
    return out2.reshape(B, N, C)


def cross_attention_block_pallas(x_q, x_kv, params, *, num_heads,
                                 attn_mask=None, padding_mask=None):
    """CrossAttentionBlock.forward with layer_scale_type=None, drop=drop_path=0."""
    # TODO(synk): attn_mask / padding_mask and the layer_scale / DropPath(>0)
    #             branches are not implemented (module defaults: None / 0.0).
    assert attn_mask is None and padding_mask is None
    x = _attention_stage(x_q, x_kv, params, num_heads)   # x_q + attn(norm1(x_q), norm1_q(x_kv))
    return _mlp_stage(x, params)                         # x + mlp(norm2(x))


# ---------------------------------------------------------------------------
# Pure-JAX f32 reference of the same forward pass
# ---------------------------------------------------------------------------
def _block_reference(x_q, x_kv, p, num_heads):
    def ln(x, g, b):
        mu = jnp.mean(x, axis=-1, keepdims=True)
        var = jnp.mean(jnp.square(x - mu), axis=-1, keepdims=True)
        return (x - mu) / jnp.sqrt(var + _LN_EPS) * g + b

    B, Nq, C = x_q.shape
    Nkv = x_kv.shape[1]
    Dh = C // num_heads

    xq_n = ln(x_q, p["norm1_g"], p["norm1_b"])
    xkv_n = ln(x_kv, p["norm1q_g"], p["norm1q_b"])
    q = (xq_n @ p["wq"] + p["bq"]).reshape(B, Nq, num_heads, Dh) * (Dh ** -0.5)
    k = (xkv_n @ p["wk"] + p["bk"]).reshape(B, Nkv, num_heads, Dh)
    v = (xkv_n @ p["wv"] + p["bv"]).reshape(B, Nkv, num_heads, Dh)
    s = jnp.einsum("bqhd,bkhd->bhqk", q, k)
    a = jax.nn.softmax(s, axis=-1)
    ctx = jnp.einsum("bhqk,bkhd->bqhd", a, v).reshape(B, Nq, C)
    x = x_q + (ctx @ p["wo"] + p["bo"])

    xn = ln(x, p["norm2_g"], p["norm2_b"])
    h = xn @ p["w1"] + p["b1"]
    h = 0.5 * h * (1.0 + lax.erf(h / jnp.sqrt(2.0)))
    return x + (h @ p["w2"] + p["b2"])


if __name__ == "__main__":
    # Small but lane-dense shapes: dim and mlp hidden are multiples of 128,
    # head_dim = 128 so per-head slices are lane aligned.
    B, Nq, Nkv, C = 2, 128, 256, 256
    num_heads = 2
    Hd = int(C * 4.0)            # mlp_ratio = 4.0

    key = jax.random.PRNGKey(0)
    keys = jax.random.split(key, 20)
    nrm = lambda k, shape: jax.random.normal(k, shape, dtype=jnp.float32)
    sc = 0.05

    x_q = nrm(keys[0], (B, Nq, C))
    x_kv = nrm(keys[1], (B, Nkv, C))
    params = {
        "norm1_g": 1.0 + 0.1 * nrm(keys[2], (C,)),
        "norm1_b": 0.05 * nrm(keys[3], (C,)),
        "norm1q_g": 1.0 + 0.1 * nrm(keys[4], (C,)),
        "norm1q_b": 0.05 * nrm(keys[5], (C,)),
        "wq": sc * nrm(keys[6], (C, C)),
        "bq": 0.02 * nrm(keys[7], (C,)),
        "wk": sc * nrm(keys[8], (C, C)),
        "bk": 0.02 * nrm(keys[9], (C,)),
        "wv": sc * nrm(keys[10], (C, C)),
        "bv": 0.02 * nrm(keys[11], (C,)),
        "wo": sc * nrm(keys[12], (C, C)),
        "bo": 0.02 * nrm(keys[13], (C,)),
        "norm2_g": 1.0 + 0.1 * nrm(keys[14], (C,)),
        "norm2_b": 0.05 * nrm(keys[15], (C,)),
        "w1": sc * nrm(keys[16], (C, Hd)),
        "b1": 0.02 * nrm(keys[17], (Hd,)),
        "w2": sc * nrm(keys[18], (Hd, C)),
        "b2": 0.02 * nrm(keys[19], (C,)),
    }

    out = cross_attention_block_pallas(x_q, x_kv, params, num_heads=num_heads)
    out = jax.block_until_ready(out)

    ref = _block_reference(x_q, x_kv, params, num_heads)
    assert out.shape == (B, Nq, C)
    # Tolerance accounts for bf16 MXU operands (f32 accumulation) + approx
    # reciprocal in softmax vs the pure-f32 reference.
    max_err = float(jnp.max(jnp.abs(out - ref)))
    assert jnp.allclose(out, ref, atol=1e-1, rtol=5e-2), f"max abs err {max_err}"

    print("KERNEL_OK")
</pallas_src>

<mosaic_0001>
module attributes {stable_mosaic.version = 11 : i64} {
  func.func @_attn_block_kernel(%arg0: i32, %arg1: memref<1x128x256xf32, #tpu.memory_space<vmem>>, %arg2: memref<1x256x256xf32, #tpu.memory_space<vmem>>, %arg3: memref<1x256xf32, #tpu.memory_space<vmem>>, %arg4: memref<1x256xf32, #tpu.memory_space<vmem>>, %arg5: memref<1x256xf32, #tpu.memory_space<vmem>>, %arg6: memref<1x256xf32, #tpu.memory_space<vmem>>, %arg7: memref<256x256xbf16, #tpu.memory_space<vmem>>, %arg8: memref<1x256xf32, #tpu.memory_space<vmem>>, %arg9: memref<256x256xbf16, #tpu.memory_space<vmem>>, %arg10: memref<1x256xf32, #tpu.memory_space<vmem>>, %arg11: memref<256x256xbf16, #tpu.memory_space<vmem>>, %arg12: memref<1x256xf32, #tpu.memory_space<vmem>>, %arg13: memref<256x256xbf16, #tpu.memory_space<vmem>>, %arg14: memref<1x256xf32, #tpu.memory_space<vmem>>, %arg15: memref<1x128x256xf32, #tpu.memory_space<vmem>>) attributes {dimension_semantics = [#tpu.dimension_semantics<parallel>], iteration_bounds = array<i64: 2>, scalar_prefetch = 0 : i64, scratch_operands = 0 : i64, tpu.core_type = #tpu.core_type<tc>, window_params = [{transform_indices = @transform_0, window_bounds = array<i64: 1, 128, 256>}, {transform_indices = @transform_1, window_bounds = array<i64: 1, 256, 256>}, {pipeline_mode = #tpu.pipeline_mode<synchronous>, transform_indices = @transform_2, window_bounds = array<i64: 1, 256>}, {pipeline_mode = #tpu.pipeline_mode<synchronous>, transform_indices = @transform_3, window_bounds = array<i64: 1, 256>}, {pipeline_mode = #tpu.pipeline_mode<synchronous>, transform_indices = @transform_4, window_bounds = array<i64: 1, 256>}, {pipeline_mode = #tpu.pipeline_mode<synchronous>, transform_indices = @transform_5, window_bounds = array<i64: 1, 256>}, {pipeline_mode = #tpu.pipeline_mode<synchronous>, transform_indices = @transform_6, window_bounds = array<i64: 256, 256>}, {pipeline_mode = #tpu.pipeline_mode<synchronous>, transform_indices = @transform_7, window_bounds = array<i64: 1, 256>}, {pipeline_mode = #tpu.pipeline_mode<synchronous>, transform_indices = @transform_8, window_bounds = array<i64: 256, 256>}, {pipeline_mode = #tpu.pipeline_mode<synchronous>, transform_indices = @transform_9, window_bounds = array<i64: 1, 256>}, {pipeline_mode = #tpu.pipeline_mode<synchronous>, transform_indices = @transform_10, window_bounds = array<i64: 256, 256>}, {pipeline_mode = #tpu.pipeline_mode<synchronous>, transform_indices = @transform_11, window_bounds = array<i64: 1, 256>}, {pipeline_mode = #tpu.pipeline_mode<synchronous>, transform_indices = @transform_12, window_bounds = array<i64: 256, 256>}, {pipeline_mode = #tpu.pipeline_mode<synchronous>, transform_indices = @transform_13, window_bounds = array<i64: 1, 256>}, {transform_indices = @transform_14, window_bounds = array<i64: 1, 128, 256>}]} {
    %c0 = arith.constant 0 : index
    %c0_0 = arith.constant 0 : index
    %c0_1 = arith.constant 0 : index
    %0 = vector.load %arg1[%c0, %c0_0, %c0_1] : memref<1x128x256xf32, #tpu.memory_space<vmem>>, vector<1x128x256xf32>
    %1 = vector.shape_cast %0 : vector<1x128x256xf32> to vector<128x256xf32>
    %c0_2 = arith.constant 0 : index
    %c0_3 = arith.constant 0 : index
    %c0_4 = arith.constant 0 : index
    %2 = vector.load %arg2[%c0_2, %c0_3, %c0_4] : memref<1x256x256xf32, #tpu.memory_space<vmem>>, vector<1x256x256xf32>
    %3 = vector.shape_cast %2 : vector<1x256x256xf32> to vector<256x256xf32>
    %c0_5 = arith.constant 0 : index
    %c0_6 = arith.constant 0 : index
    %4 = vector.load %arg3[%c0_5, %c0_6] : memref<1x256xf32, #tpu.memory_space<vmem>>, vector<1x256xf32>
    %c0_7 = arith.constant 0 : index
    %c0_8 = arith.constant 0 : index
    %5 = vector.load %arg4[%c0_7, %c0_8] : memref<1x256xf32, #tpu.memory_space<vmem>>, vector<1x256xf32>
    %cst = arith.constant dense<0.000000e+00> : vector<128xf32>
    %6 = vector.multi_reduction <add>, %1, %cst [1] : vector<128x256xf32> to vector<128xf32>
    %7 = vector.shape_cast %6 : vector<128xf32> to vector<128x1xf32>
    %cst_9 = arith.constant 2.560000e+02 : f32
    %8 = vector.broadcast %cst_9 : f32 to vector<128x1xf32>
    %9 = arith.divf %7, %8 : vector<128x1xf32>
    %10 = vector.broadcast %9 : vector<128x1xf32> to vector<128x256xf32>
    %11 = arith.subf %1, %10 : vector<128x256xf32>
    %12 = arith.mulf %11, %11 : vector<128x256xf32>
    %cst_10 = arith.constant dense<0.000000e+00> : vector<128xf32>
    %13 = vector.multi_reduction <add>, %12, %cst_10 [1] : vector<128x256xf32> to vector<128xf32>
    %14 = vector.shape_cast %13 : vector<128xf32> to vector<128x1xf32>
    %cst_11 = arith.constant 2.560000e+02 : f32
    %15 = vector.broadcast %cst_11 : f32 to vector<128x1xf32>
    %16 = arith.divf %14, %15 : vector<128x1xf32>
    %17 = vector.broadcast %9 : vector<128x1xf32> to vector<128x256xf32>
    %18 = arith.subf %1, %17 : vector<128x256xf32>
    %cst_12 = arith.constant 9.99999974E-6 : f32
    %19 = vector.broadcast %cst_12 : f32 to vector<128x1xf32>
    %20 = arith.addf %16, %19 : vector<128x1xf32>
    %21 = math.rsqrt %20 : vector<128x1xf32>
    %22 = vector.broadcast %21 : vector<128x1xf32> to vector<128x256xf32>
    %23 = arith.mulf %18, %22 : vector<128x256xf32>
    %24 = vector.broadcast %4 : vector<1x256xf32> to vector<128x256xf32>
    %25 = arith.mulf %23, %24 : vector<128x256xf32>
    %26 = vector.broadcast %5 : vector<1x256xf32> to vector<128x256xf32>
    %27 = arith.addf %25, %26 : vector<128x256xf32>
    %28 = arith.truncf %27 : vector<128x256xf32> to vector<128x256xbf16>
    %c0_13 = arith.constant 0 : index
    %c0_14 = arith.constant 0 : index
    %29 = vector.load %arg5[%c0_13, %c0_14] : memref<1x256xf32, #tpu.memory_space<vmem>>, vector<1x256xf32>
    %c0_15 = arith.constant 0 : index
    %c0_16 = arith.constant 0 : index
    %30 = vector.load %arg6[%c0_15, %c0_16] : memref<1x256xf32, #tpu.memory_space<vmem>>, vector<1x256xf32>
    %cst_17 = arith.constant dense<0.000000e+00> : vector<256xf32>
    %31 = vector.multi_reduction <add>, %3, %cst_17 [1] : vector<256x256xf32> to vector<256xf32>
    %32 = vector.shape_cast %31 : vector<256xf32> to vector<256x1xf32>
    %cst_18 = arith.constant 2.560000e+02 : f32
    %33 = vector.broadcast %cst_18 : f32 to vector<256x1xf32>
    %34 = arith.divf %32, %33 : vector<256x1xf32>
    %35 = vector.broadcast %34 : vector<256x1xf32> to vector<256x256xf32>
    %36 = arith.subf %3, %35 : vector<256x256xf32>
    %37 = arith.mulf %36, %36 : vector<256x256xf32>
    %cst_19 = arith.constant dense<0.000000e+00> : vector<256xf32>
    %38 = vector.multi_reduction <add>, %37, %cst_19 [1] : vector<256x256xf32> to vector<256xf32>
    %39 = vector.shape_cast %38 : vector<256xf32> to vector<256x1xf32>
    %cst_20 = arith.constant 2.560000e+02 : f32
    %40 = vector.broadcast %cst_20 : f32 to vector<256x1xf32>
    %41 = arith.divf %39, %40 : vector<256x1xf32>
    %42 = vector.broadcast %34 : vector<256x1xf32> to vector<256x256xf32>
    %43 = arith.subf %3, %42 : vector<256x256xf32>
    %cst_21 = arith.constant 9.99999974E-6 : f32
    %44 = vector.broadcast %cst_21 : f32 to vector<256x1xf32>
    %45 = arith.addf %41, %44 : vector<256x1xf32>
    %46 = math.rsqrt %45 : vector<256x1xf32>
    %47 = vector.broadcast %46 : vector<256x1xf32> to vector<256x256xf32>
    %48 = arith.mulf %43, %47 : vector<256x256xf32>
    %49 = vector.broadcast %29 : vector<1x256xf32> to vector<256x256xf32>
    %50 = arith.mulf %48, %49 : vector<256x256xf32>
    %51 = vector.broadcast %30 : vector<1x256xf32> to vector<256x256xf32>
    %52 = arith.addf %50, %51 : vector<256x256xf32>
    %53 = arith.truncf %52 : vector<256x256xf32> to vector<256x256xbf16>
    %c0_22 = arith.constant 0 : index
    %c0_23 = arith.constant 0 : index
    %54 = vector.load %arg7[%c0_22, %c0_23] : memref<256x256xbf16, #tpu.memory_space<vmem>>, vector<256x256xbf16>
    %cst_24 = arith.constant dense<0.000000e+00> : vector<128x256xf32>
    %55 = tpu.matmul %28, %54, %cst_24 {dimension_numbers = #tpu.dot_dimension_numbers<[1], [0], [0], [1], [0, 0, 1, 1], [], []>} : vector<128x256xbf16>, vector<256x256xbf16>, vector<128x256xf32> -> vector<128x256xf32>
    %c0_25 = arith.constant 0 : index
    %c0_26 = arith.constant 0 : index
    %56 = vector.load %arg8[%c0_25, %c0_26] : memref<1x256xf32, #tpu.memory_space<vmem>>, vector<1x256xf32>
    %57 = vector.broadcast %56 : vector<1x256xf32> to vector<128x256xf32>
    %58 = arith.addf %55, %57 : vector<128x256xf32>
    %c0_27 = arith.constant 0 : index
    %c0_28 = arith.constant 0 : index
    %59 = vector.load %arg9[%c0_27, %c0_28] : memref<256x256xbf16, #tpu.memory_space<vmem>>, vector<256x256xbf16>
    %cst_29 = arith.constant dense<0.000000e+00> : vector<256x256xf32>
    %60 = tpu.matmul %53, %59, %cst_29 {dimension_numbers = #tpu.dot_dimension_numbers<[1], [0], [0], [1], [0, 0, 1, 1], [], []>} : vector<256x256xbf16>, vector<256x256xbf16>, vector<256x256xf32> -> vector<256x256xf32>
    %c0_30 = arith.constant 0 : index
    %c0_31 = arith.constant 0 : index
    %61 = vector.load %arg10[%c0_30, %c0_31] : memref<1x256xf32, #tpu.memory_space<vmem>>, vector<1x256xf32>
    %62 = vector.broadcast %61 : vector<1x256xf32> to vector<256x256xf32>
    %63 = arith.addf %60, %62 : vector<256x256xf32>
    %c0_32 = arith.constant 0 : index
    %c0_33 = arith.constant 0 : index
    %64 = vector.load %arg11[%c0_32, %c0_33] : memref<256x256xbf16, #tpu.memory_space<vmem>>, vector<256x256xbf16>
    %cst_34 = arith.constant dense<0.000000e+00> : vector<256x256xf32>
    %65 = tpu.matmul %53, %64, %cst_34 {dimension_numbers = #tpu.dot_dimension_numbers<[1], [0], [0], [1], [0, 0, 1, 1], [], []>} : vector<256x256xbf16>, vector<256x256xbf16>, vector<256x256xf32> -> vector<256x256xf32>
    %c0_35 = arith.constant 0 : index
    %c0_36 = arith.constant 0 : index
    %66 = vector.load %arg12[%c0_35, %c0_36] : memref<1x256xf32, #tpu.memory_space<vmem>>, vector<1x256xf32>
    %67 = vector.broadcast %66 : vector<1x256xf32> to vector<256x256xf32>
    %68 = arith.addf %65, %67 : vector<256x256xf32>
    %cst_37 = arith.constant 0.0883883461 : f32
    %69 = vector.broadcast %cst_37 : f32 to vector<128x256xf32>
    %70 = arith.mulf %58, %69 : vector<128x256xf32>
    %c0_38 = arith.constant 0 : index
    %c0_39 = arith.constant 0 : index
    %71 = vector.load %arg13[%c0_38, %c0_39] : memref<256x256xbf16, #tpu.memory_space<vmem>>, vector<256x256xbf16>
    %cst_40 = arith.constant 0.000000e+00 : f32
    %72 = vector.broadcast %cst_40 : f32 to vector<128x256xf32>
    %73 = vector.extract_strided_slice %70 {offsets = [0, 0], sizes = [128, 128], strides = [1, 1]} : vector<128x256xf32> to vector<128x128xf32>
    %74 = arith.truncf %73 : vector<128x128xf32> to vector<128x128xbf16>
    %75 = vector.extract_strided_slice %63 {offsets = [0, 0], sizes = [256, 128], strides = [1, 1]} : vector<256x256xf32> to vector<256x128xf32>
    %76 = arith.truncf %75 : vector<256x128xf32> to vector<256x128xbf16>
    %77 = vector.extract_strided_slice %68 {offsets = [0, 0], sizes = [256, 128], strides = [1, 1]} : vector<256x256xf32> to vector<256x128xf32>
    %78 = arith.truncf %77 : vector<256x128xf32> to vector<256x128xbf16>
    %cst_41 = arith.constant dense<0.000000e+00> : vector<128x256xf32>
    %79 = tpu.matmul %74, %76, %cst_41 {dimension_numbers = #tpu.dot_dimension_numbers<[1], [1], [0], [0], [0, 0, 1, 0], [], []>} : vector<128x128xbf16>, vector<256x128xbf16>, vector<128x256xf32> -> vector<128x256xf32>
    %cst_42 = arith.constant dense<0xFF800000> : vector<128xf32>
    %80 = vector.multi_reduction <maximumf>, %79, %cst_42 [1] : vector<128x256xf32> to vector<128xf32>
    %81 = vector.shape_cast %80 : vector<128xf32> to vector<128x1xf32>
    %82 = vector.broadcast %81 : vector<128x1xf32> to vector<128x256xf32>
    %83 = arith.subf %79, %82 : vector<128x256xf32>
    %84 = math.exp %83 : vector<128x256xf32>
    %cst_43 = arith.constant dense<0.000000e+00> : vector<128xf32>
    %85 = vector.multi_reduction <add>, %84, %cst_43 [1] : vector<128x256xf32> to vector<128xf32>
    %86 = vector.shape_cast %85 : vector<128xf32> to vector<128x1xf32>
    %87 = tpu.reciprocal %86 {approx = true} : vector<128x1xf32> -> vector<128x1xf32>
    %88 = vector.broadcast %87 : vector<128x1xf32> to vector<128x256xf32>
    %89 = arith.mulf %84, %88 : vector<128x256xf32>
    %90 = arith.truncf %89 : vector<128x256xf32> to vector<128x256xbf16>
    %cst_44 = arith.constant dense<0.000000e+00> : vector<128x128xf32>
    %91 = tpu.matmul %90, %78, %cst_44 {dimension_numbers = #tpu.dot_dimension_numbers<[1], [0], [0], [1], [0, 0, 1, 1], [], []>} : vector<128x256xbf16>, vector<256x128xbf16>, vector<128x128xf32> -> vector<128x128xf32>
    %92 = arith.truncf %91 : vector<128x128xf32> to vector<128x128xbf16>
    %93 = vector.extract_strided_slice %71 {offsets = [0, 0], sizes = [128, 256], strides = [1, 1]} : vector<256x256xbf16> to vector<128x256xbf16>
    %cst_45 = arith.constant dense<0.000000e+00> : vector<128x256xf32>
    %94 = tpu.matmul %92, %93, %cst_45 {dimension_numbers = #tpu.dot_dimension_numbers<[1], [0], [0], [1], [0, 0, 1, 1], [], []>} : vector<128x128xbf16>, vector<128x256xbf16>, vector<128x256xf32> -> vector<128x256xf32>
    %95 = arith.addf %72, %94 : vector<128x256xf32>
    %96 = vector.extract_strided_slice %70 {offsets = [0, 128], sizes = [128, 128], strides = [1, 1]} : vector<128x256xf32> to vector<128x128xf32>
    %97 = arith.truncf %96 : vector<128x128xf32> to vector<128x128xbf16>
    %98 = vector.extract_strided_slice %63 {offsets = [0, 128], sizes = [256, 128], strides = [1, 1]} : vector<256x256xf32> to vector<256x128xf32>
    %99 = arith.truncf %98 : vector<256x128xf32> to vector<256x128xbf16>
    %100 = vector.extract_strided_slice %68 {offsets = [0, 128], sizes = [256, 128], strides = [1, 1]} : vector<256x256xf32> to vector<256x128xf32>
    %101 = arith.truncf %100 : vector<256x128xf32> to vector<256x128xbf16>
    %cst_46 = arith.constant dense<0.000000e+00> : vector<128x256xf32>
    %102 = tpu.matmul %97, %99, %cst_46 {dimension_numbers = #tpu.dot_dimension_numbers<[1], [1], [0], [0], [0, 0, 1, 0], [], []>} : vector<128x128xbf16>, vector<256x128xbf16>, vector<128x256xf32> -> vector<128x256xf32>
    %cst_47 = arith.constant dense<0xFF800000> : vector<128xf32>
    %103 = vector.multi_reduction <maximumf>, %102, %cst_47 [1] : vector<128x256xf32> to vector<128xf32>
    %104 = vector.shape_cast %103 : vector<128xf32> to vector<128x1xf32>
    %105 = vector.broadcast %104 : vector<128x1xf32> to vector<128x256xf32>
    %106 = arith.subf %102, %105 : vector<128x256xf32>
    %107 = math.exp %106 : vector<128x256xf32>
    %cst_48 = arith.constant dense<0.000000e+00> : vector<128xf32>
    %108 = vector.multi_reduction <add>, %107, %cst_48 [1] : vector<128x256xf32> to vector<128xf32>
    %109 = vector.shape_cast %108 : vector<128xf32> to vector<128x1xf32>
    %110 = tpu.reciprocal %109 {approx = true} : vector<128x1xf32> -> vector<128x1xf32>
    %111 = vector.broadcast %110 : vector<128x1xf32> to vector<128x256xf32>
    %112 = arith.mulf %107, %111 : vector<128x256xf32>
    %113 = arith.truncf %112 : vector<128x256xf32> to vector<128x256xbf16>
    %cst_49 = arith.constant dense<0.000000e+00> : vector<128x128xf32>
    %114 = tpu.matmul %113, %101, %cst_49 {dimension_numbers = #tpu.dot_dimension_numbers<[1], [0], [0], [1], [0, 0, 1, 1], [], []>} : vector<128x256xbf16>, vector<256x128xbf16>, vector<128x128xf32> -> vector<128x128xf32>
    %115 = arith.truncf %114 : vector<128x128xf32> to vector<128x128xbf16>
    %116 = vector.extract_strided_slice %71 {offsets = [128, 0], sizes = [128, 256], strides = [1, 1]} : vector<256x256xbf16> to vector<128x256xbf16>
    %cst_50 = arith.constant dense<0.000000e+00> : vector<128x256xf32>
    %117 = tpu.matmul %115, %116, %cst_50 {dimension_numbers = #tpu.dot_dimension_numbers<[1], [0], [0], [1], [0, 0, 1, 1], [], []>} : vector<128x128xbf16>, vector<128x256xbf16>, vector<128x256xf32> -> vector<128x256xf32>
    %118 = arith.addf %95, %117 : vector<128x256xf32>
    %119 = arith.addf %1, %118 : vector<128x256xf32>
    %c0_51 = arith.constant 0 : index
    %c0_52 = arith.constant 0 : index
    %120 = vector.load %arg14[%c0_51, %c0_52] : memref<1x256xf32, #tpu.memory_space<vmem>>, vector<1x256xf32>
    %121 = vector.broadcast %120 : vector<1x256xf32> to vector<128x256xf32>
    %122 = arith.addf %119, %121 : vector<128x256xf32>
    %c0_53 = arith.constant 0 : index
    %c0_54 = arith.constant 0 : index
    %c0_55 = arith.constant 0 : index
    %123 = vector.load %arg15[%c0_53, %c0_54, %c0_55] : memref<1x128x256xf32, #tpu.memory_space<vmem>>, vector<1x128x256xf32>
    %124 = vector.shape_cast %123 : vector<1x128x256xf32> to vector<128x256xf32>
    %125 = vector.shape_cast %122 : vector<128x256xf32> to vector<1x128x256xf32>
    tpu.vector_store %arg15[%c0_53, %c0_54, %c0_55], %125 {strides = array<i32>} : memref<1x128x256xf32, #tpu.memory_space<vmem>>, vector<1x128x256xf32>,
    return
  }
  func.func @transform_0(%arg0: i32) -> (i32, i32, i32) {
    %c0_i32 = arith.constant 0 : i32
    %c0_i32_0 = arith.constant 0 : i32
    %c0_i32_1 = arith.constant 0 : i32
    return %arg0, %c0_i32, %c0_i32_0 : i32, i32, i32
  }
  func.func @transform_1(%arg0: i32) -> (i32, i32, i32) {
    %c0_i32 = arith.constant 0 : i32
    %c0_i32_0 = arith.constant 0 : i32
    %c0_i32_1 = arith.constant 0 : i32
    return %arg0, %c0_i32, %c0_i32_0 : i32, i32, i32
  }
  func.func @transform_2(%arg0: i32) -> (i32, i32) {
    %c0_i32 = arith.constant 0 : i32
    %c0_i32_0 = arith.constant 0 : i32
    %c0_i32_1 = arith.constant 0 : i32
    return %c0_i32, %c0_i32_0 : i32, i32
  }
  func.func @transform_3(%arg0: i32) -> (i32, i32) {
    %c0_i32 = arith.constant 0 : i32
    %c0_i32_0 = arith.constant 0 : i32
    %c0_i32_1 = arith.constant 0 : i32
    return %c0_i32, %c0_i32_0 : i32, i32
  }
  func.func @transform_4(%arg0: i32) -> (i32, i32) {
    %c0_i32 = arith.constant 0 : i32
    %c0_i32_0 = arith.constant 0 : i32
    %c0_i32_1 = arith.constant 0 : i32
    return %c0_i32, %c0_i32_0 : i32, i32
  }
  func.func @transform_5(%arg0: i32) -> (i32, i32) {
    %c0_i32 = arith.constant 0 : i32
    %c0_i32_0 = arith.constant 0 : i32
    %c0_i32_1 = arith.constant 0 : i32
    return %c0_i32, %c0_i32_0 : i32, i32
  }
  func.func @transform_6(%arg0: i32) -> (i32, i32) {
    %c0_i32 = arith.constant 0 : i32
    %c0_i32_0 = arith.constant 0 : i32
    %c0_i32_1 = arith.constant 0 : i32
    return %c0_i32, %c0_i32_0 : i32, i32
  }
  func.func @transform_7(%arg0: i32) -> (i32, i32) {
    %c0_i32 = arith.constant 0 : i32
    %c0_i32_0 = arith.constant 0 : i32
    %c0_i32_1 = arith.constant 0 : i32
    return %c0_i32, %c0_i32_0 : i32, i32
  }
  func.func @transform_8(%arg0: i32) -> (i32, i32) {
    %c0_i32 = arith.constant 0 : i32
    %c0_i32_0 = arith.constant 0 : i32
    %c0_i32_1 = arith.constant 0 : i32
    return %c0_i32, %c0_i32_0 : i32, i32
  }
  func.func @transform_9(%arg0: i32) -> (i32, i32) {
    %c0_i32 = arith.constant 0 : i32
    %c0_i32_0 = arith.constant 0 : i32
    %c0_i32_1 = arith.constant 0 : i32
    return %c0_i32, %c0_i32_0 : i32, i32
  }
  func.func @transform_10(%arg0: i32) -> (i32, i32) {
    %c0_i32 = arith.constant 0 : i32
    %c0_i32_0 = arith.constant 0 : i32
    %c0_i32_1 = arith.constant 0 : i32
    return %c0_i32, %c0_i32_0 : i32, i32
  }
  func.func @transform_11(%arg0: i32) -> (i32, i32) {
    %c0_i32 = arith.constant 0 : i32
    %c0_i32_0 = arith.constant 0 : i32
    %c0_i32_1 = arith.constant 0 : i32
    return %c0_i32, %c0_i32_0 : i32, i32
  }
  func.func @transform_12(%arg0: i32) -> (i32, i32) {
    %c0_i32 = arith.constant 0 : i32
    %c0_i32_0 = arith.constant 0 : i32
    %c0_i32_1 = arith.constant 0 : i32
    return %c0_i32, %c0_i32_0 : i32, i32
  }
  func.func @transform_13(%arg0: i32) -> (i32, i32) {
    %c0_i32 = arith.constant 0 : i32
    %c0_i32_0 = arith.constant 0 : i32
    %c0_i32_1 = arith.constant 0 : i32
    return %c0_i32, %c0_i32_0 : i32, i32
  }
  func.func @transform_14(%arg0: i32) -> (i32, i32, i32) {
    %c0_i32 = arith.constant 0 : i32
    %c0_i32_0 = arith.constant 0 : i32
    %c0_i32_1 = arith.constant 0 : i32
    return %arg0, %c0_i32, %c0_i32_0 : i32, i32, i32
  }
}

</mosaic_0001>

<llo_original>
// kernel: tpu_custom_call.1
$region0: #{tpu_custom_call.1}
  #allocation0 [shape = 'u32[]', space=smem, size = 0x4, offset = 0x4, fixed_abs, tag = 'smem constant byte address 0x4 - core index']
  #allocation1 [shape = 'u32[144,128]{1,0:T(1,128)}', space=vmem, size = 0x12000, scoped, tag = 'internal scratch']
  %s0 = inlined_call_operand.hbm [shape: f32[2,128,256], index: 0, kind: input, shape index: {}]
  %s1 = inlined_call_operand.hbm [shape: f32[2,256,256], index: 1, kind: input, shape index: {}]
  %s2 = inlined_call_operand.vmem [shape: f32[1,256], index: 2, kind: input, shape index: {}]
  %s3 = inlined_call_operand.vmem [shape: f32[1,256], index: 3, kind: input, shape index: {}]
  %s4 = inlined_call_operand.vmem [shape: f32[1,256], index: 4, kind: input, shape index: {}]
  %s5 = inlined_call_operand.vmem [shape: f32[1,256], index: 5, kind: input, shape index: {}]
  %s6 = inlined_call_operand.hbm [shape: bf16[256,256], index: 6, kind: input, shape index: {}]
  %s7 = inlined_call_operand.vmem [shape: f32[1,256], index: 7, kind: input, shape index: {}]
  %s8 = inlined_call_operand.hbm [shape: bf16[256,256], index: 8, kind: input, shape index: {}]
  %s9 = inlined_call_operand.vmem [shape: f32[1,256], index: 9, kind: input, shape index: {}]
  %s10 = inlined_call_operand.hbm [shape: bf16[256,256], index: 10, kind: input, shape index: {}]
  %s11 = inlined_call_operand.vmem [shape: f32[1,256], index: 11, kind: input, shape index: {}]
  %s12 = inlined_call_operand.hbm [shape: bf16[256,256], index: 12, kind: input, shape index: {}]
  %s13 = inlined_call_operand.vmem [shape: f32[1,256], index: 13, kind: input, shape index: {}]
  %s14 = inlined_call_operand.hbm [shape: f32[2,128,256], index: 14, kind: output, shape index: {}]
  %s15 = sld [smem:[#allocation0]]
  $region113: #{tpu_custom_call.1} parent=0
    _
  %s17 = ssub.s32 1, %s15
  %s18 = scalar_select 0, %s17, %s15
  $region1: #{tpu_custom_call.1} parent=0
    #allocation2 [shape = 'u8[262144]{0}', space=vmem, size = 0x40000, scoped, tag = 'input window, operand 0']
    #allocation3 [shape = 's32[2]{0}', space=sflag, size = 0x8, scoped, tag = 'scoped memory for tpu_custom_call.1']
    #allocation4 [shape = 's32[2]{0}', space=sflag, size = 0x8, scoped, tag = 'scoped memory for tpu_custom_call.1']
    #allocation5 [shape = 'u8[524288]{0}', space=vmem, size = 0x80000, scoped, tag = 'input window, operand 1']
    #allocation6 [shape = 's32[2]{0}', space=sflag, size = 0x8, scoped, tag = 'scoped memory for tpu_custom_call.1']
    #allocation7 [shape = 'u8[131072]{0}', space=vmem, size = 0x20000, scoped, tag = 'input window, operand 6, single buffered']
    #allocation8 [shape = 'u8[131072]{0}', space=vmem, size = 0x20000, scoped, tag = 'input window, operand 8, single buffered']
    #allocation9 [shape = 's32[1]{0}', space=sflag, size = 0x4, scoped, tag = 'scoped memory for tpu_custom_call.1']
    #allocation10 [shape = 'u8[131072]{0}', space=vmem, size = 0x20000, scoped, tag = 'input window, operand 10, single buffered']
    #allocation11 [shape = 'u8[131072]{0}', space=vmem, size = 0x20000, scoped, tag = 'input window, operand 12, single buffered']
    #allocation12 [shape = 's32[1]{0}', space=sflag, size = 0x4, scoped, tag = 'scoped memory for tpu_custom_call.1']
    #allocation13 [shape = 'u8[262144]{0}', space=vmem, size = 0x40000, scoped, tag = 'output window, operand 0']
    %19 = vsyncpa [#allocation3], 0
    %s20 = scalar_lea.sflag [#allocation3], 1
    %21 = vsyncpa %s20, 0
    %22 = vsyncpa [#allocation6], 0
    %s23 = scalar_lea.sflag [#allocation6], 1
    %24 = vsyncpa %s23, 0
    %25 = vsyncpa [#allocation9], 0
    %26 = vsyncpa [#allocation12], 0
    %27 = vsyncpa [#allocation4], 0
    %s28 = scalar_lea.sflag [#allocation4], 1
    %29 = vsyncpa %s28, 0
    loop: start=0, step=1, limit=4
    $region2: #{tpu_custom_call.1} parent=1 // loop_pre_header
      _
    $region3: #{tpu_custom_call.1} parent=1 // loop_header
      %s31 = sphi 0, %s35
      %p32 = scmp.ge.s32.totalorder %s31, 4
      %s41 = sphi 0, %s43
      %s44 = sphi 0, %s41
      %s45 = sphi 0, %s44
      %s61 = sphi 0, %s45
      %s67 = sphi 0, %s69
      %s70 = sphi 0, %s67
      %s71 = sphi 0, %s70
      %s87 = sphi 0, %s71
      %s91 = sphi 0, %s91
      %s93 = sphi 0, %s91
      %s94 = sphi 0, %s93
      %s108 = sphi 0, %s94
      %s112 = sphi 0, %s112
      %s114 = sphi 0, %s112
      %s115 = sphi 0, %s114
      %s129 = sphi 0, %s115
      %s133 = sphi 0, %s133
      %s135 = sphi 0, %s133
      %s136 = sphi 0, %s135
      %s150 = sphi 0, %s136
      %s154 = sphi 0, %s154
      %s156 = sphi 0, %s154
      %s157 = sphi 0, %s156
      %s171 = sphi 0, %s157
      %s175 = sphi 0, %s175
      %s177 = sphi 0, %s175
      %s178 = sphi 0, %s177
      %s192 = sphi 0, %s178
      %s196 = sphi 0, %s196
      %s198 = sphi 0, %s196
      %s199 = sphi 0, %s198
      %s213 = sphi 0, %s199
      %s217 = sphi 0, %s217
      %s219 = sphi 0, %s217
      %s220 = sphi 0, %s219
      %s234 = sphi 0, %s220
      %s238 = sphi 0, %s238
      %s240 = sphi 0, %s238
      %s241 = sphi 0, %s240
      %s255 = sphi 0, %s241
      %s259 = sphi 0, %s259
      %s261 = sphi 0, %s259
      %s262 = sphi 0, %s261
      %s276 = sphi 0, %s262
      %s280 = sphi 0, %s280
      %s282 = sphi 0, %s280
      %s283 = sphi 0, %s282
      %s297 = sphi 0, %s283
      %s301 = sphi 0, %s301
      %s303 = sphi 0, %s301
      %s304 = sphi 0, %s303
      %s318 = sphi 0, %s304
      %s322 = sphi 0, %s322
      %s324 = sphi 0, %s322
      %s325 = sphi 0, %s324
      %s339 = sphi 0, %s325
      %s345 = sphi 0, %s347
      %s348 = sphi 0, %s345
      %s349 = sphi 0, %s348
      %s365 = sphi 0, %s349
    $region4: #{tpu_custom_call.1} parent=1 // loop_header_branch
      %34 = sbr.rel (%p32) target = $region8
    $region5: #{tpu_custom_call.1} parent=1 // loop_body
      %s36 = ssub.s32 %s31, 1
      %s37 = ssub.s32 %s31, 2
      %s38 = sadd.s32 %s31, 1
      %s39 = ssub.s32 %s31, %s38
      %p40 = scmp.eq.s32.totalorder %s39, 0
      %s42 = sadd.s32 %s41, 1
      %s43 = scalar_select %p40, %s41, %s42
      %p46 = pneg %p40
      %p47 = scmp.eq.s32.totalorder %s31, 1
      %p48 = por %p46, %p47
      %p49 = scmp.ne.s32.totalorder %s41, %s44
      %p50 = scmp.eq.s32.totalorder %s31, 0
      %p51 = por %p49, %p50
      %p52 = scmp.ne.s32.totalorder %s41, %s44
      %p53 = scmp.eq.s32.totalorder %s36, 1
      %p54 = por %p52, %p53
      %p55 = scmp.ne.s32.totalorder %s44, %s45
      %p56 = scmp.eq.s32.totalorder %s36, 0
      %p57 = por %p55, %p56
      %p58 = scmp.ne.s32.totalorder %s44, %s45
      %p59 = scmp.eq.s32.totalorder %s37, 1
      %p60 = por %p58, %p59
      %p62 = scmp.ne.s32.totalorder %s45, %s61
      %p63 = scmp.eq.s32.totalorder %s37, 0
      %p64 = por %p62, %p63
      %s65 = ssub.s32 %s31, %s38
      %p66 = scmp.eq.s32.totalorder %s65, 0
      %s68 = sadd.s32 %s67, 1
      %s69 = scalar_select %p66, %s67, %s68
      %p72 = pneg %p66
      %p73 = scmp.eq.s32.totalorder %s31, 1
      %p74 = por %p72, %p73
      %p75 = scmp.ne.s32.totalorder %s67, %s70
      %p76 = scmp.eq.s32.totalorder %s31, 0
      %p77 = por %p75, %p76
      %p78 = scmp.ne.s32.totalorder %s67, %s70
      %p79 = scmp.eq.s32.totalorder %s36, 1
      %p80 = por %p78, %p79
      %p81 = scmp.ne.s32.totalorder %s70, %s71
      %p82 = scmp.eq.s32.totalorder %s36, 0
      %p83 = por %p81, %p82
      %p84 = scmp.ne.s32.totalorder %s70, %s71
      %p85 = scmp.eq.s32.totalorder %s37, 1
      %p86 = por %p84, %p85
      %p88 = scmp.ne.s32.totalorder %s71, %s87
      %p89 = scmp.eq.s32.totalorder %s37, 0
      %p90 = por %p88, %p89
      %s92 = sadd.s32 %s91, 1
      %p95 = scmp.eq.s32.totalorder %s31, 1
      %p96 = scmp.ne.s32.totalorder %s91, %s93
      %p97 = scmp.eq.s32.totalorder %s31, 0
      %p98 = por %p96, %p97
      %p99 = scmp.ne.s32.totalorder %s91, %s93
      %p100 = scmp.eq.s32.totalorder %s36, 1
      %p101 = por %p99, %p100
      %p102 = scmp.ne.s32.totalorder %s93, %s94
      %p103 = scmp.eq.s32.totalorder %s36, 0
      %p104 = por %p102, %p103
      %p105 = scmp.ne.s32.totalorder %s93, %s94
      %p106 = scmp.eq.s32.totalorder %s37, 1
      %p107 = por %p105, %p106
      %p109 = scmp.ne.s32.totalorder %s94, %s108
      %p110 = scmp.eq.s32.totalorder %s37, 0
      %p111 = por %p109, %p110
      %s113 = sadd.s32 %s112, 1
      %p116 = scmp.eq.s32.totalorder %s31, 1
      %p117 = scmp.ne.s32.totalorder %s112, %s114
      %p118 = scmp.eq.s32.totalorder %s31, 0
      %p119 = por %p117, %p118
      %p120 = scmp.ne.s32.totalorder %s112, %s114
      %p121 = scmp.eq.s32.totalorder %s36, 1
      %p122 = por %p120, %p121
      %p123 = scmp.ne.s32.totalorder %s114, %s115
      %p124 = scmp.eq.s32.totalorder %s36, 0
      %p125 = por %p123, %p124
      %p126 = scmp.ne.s32.totalorder %s114, %s115
      %p127 = scmp.eq.s32.totalorder %s37, 1
      %p128 = por %p126, %p127
      %p130 = scmp.ne.s32.totalorder %s115, %s129
      %p131 = scmp.eq.s32.totalorder %s37, 0
      %p132 = por %p130, %p131
      %s134 = sadd.s32 %s133, 1
      %p137 = scmp.eq.s32.totalorder %s31, 1
      %p138 = scmp.ne.s32.totalorder %s133, %s135
      %p139 = scmp.eq.s32.totalorder %s31, 0
      %p140 = por %p138, %p139
      %p141 = scmp.ne.s32.totalorder %s133, %s135
      %p142 = scmp.eq.s32.totalorder %s36, 1
      %p143 = por %p141, %p142
      %p144 = scmp.ne.s32.totalorder %s135, %s136
      %p145 = scmp.eq.s32.totalorder %s36, 0
      %p146 = por %p144, %p145
      %p147 = scmp.ne.s32.totalorder %s135, %s136
      %p148 = scmp.eq.s32.totalorder %s37, 1
      %p149 = por %p147, %p148
      %p151 = scmp.ne.s32.totalorder %s136, %s150
      %p152 = scmp.eq.s32.totalorder %s37, 0
      %p153 = por %p151, %p152
      %s155 = sadd.s32 %s154, 1
      %p158 = scmp.eq.s32.totalorder %s31, 1
      %p159 = scmp.ne.s32.totalorder %s154, %s156
      %p160 = scmp.eq.s32.totalorder %s31, 0
      %p161 = por %p159, %p160
      %p162 = scmp.ne.s32.totalorder %s154, %s156
      %p163 = scmp.eq.s32.totalorder %s36, 1
      %p164 = por %p162, %p163
      %p165 = scmp.ne.s32.totalorder %s156, %s157
      %p166 = scmp.eq.s32.totalorder %s36, 0
      %p167 = por %p165, %p166
      %p168 = scmp.ne.s32.totalorder %s156, %s157
      %p169 = scmp.eq.s32.totalorder %s37, 1
      %p170 = por %p168, %p169
      %p172 = scmp.ne.s32.totalorder %s157, %s171
      %p173 = scmp.eq.s32.totalorder %s37, 0
      %p174 = por %p172, %p173
      %s176 = sadd.s32 %s175, 1
      %p179 = scmp.eq.s32.totalorder %s31, 1
      %p180 = scmp.ne.s32.totalorder %s175, %s177
      %p181 = scmp.eq.s32.totalorder %s31, 0
      %p182 = por %p180, %p181
      %p183 = scmp.ne.s32.totalorder %s175, %s177
      %p184 = scmp.eq.s32.totalorder %s36, 1
      %p185 = por %p183, %p184
      %p186 = scmp.ne.s32.totalorder %s177, %s178
      %p187 = scmp.eq.s32.totalorder %s36, 0
      %p188 = por %p186, %p187
      %p189 = scmp.ne.s32.totalorder %s177, %s178
      %p190 = scmp.eq.s32.totalorder %s37, 1
      %p191 = por %p189, %p190
      %p193 = scmp.ne.s32.totalorder %s178, %s192
      %p194 = scmp.eq.s32.totalorder %s37, 0
      %p195 = por %p193, %p194
      %s197 = sadd.s32 %s196, 1
      %p200 = scmp.eq.s32.totalorder %s31, 1
      %p201 = scmp.ne.s32.totalorder %s196, %s198
      %p202 = scmp.eq.s32.totalorder %s31, 0
      %p203 = por %p201, %p202
      %p204 = scmp.ne.s32.totalorder %s196, %s198
      %p205 = scmp.eq.s32.totalorder %s36, 1
      %p206 = por %p204, %p205
      %p207 = scmp.ne.s32.totalorder %s198, %s199
      %p208 = scmp.eq.s32.totalorder %s36, 0
      %p209 = por %p207, %p208
      %p210 = scmp.ne.s32.totalorder %s198, %s199
      %p211 = scmp.eq.s32.totalorder %s37, 1
      %p212 = por %p210, %p211
      %p214 = scmp.ne.s32.totalorder %s199, %s213
      %p215 = scmp.eq.s32.totalorder %s37, 0
      %p216 = por %p214, %p215
      %s218 = sadd.s32 %s217, 1
      %p221 = scmp.eq.s32.totalorder %s31, 1
      %p222 = scmp.ne.s32.totalorder %s217, %s219
      %p223 = scmp.eq.s32.totalorder %s31, 0
      %p224 = por %p222, %p223
      %p225 = scmp.ne.s32.totalorder %s217, %s219
      %p226 = scmp.eq.s32.totalorder %s36, 1
      %p227 = por %p225, %p226
      %p228 = scmp.ne.s32.totalorder %s219, %s220
      %p229 = scmp.eq.s32.totalorder %s36, 0
      %p230 = por %p228, %p229
      %p231 = scmp.ne.s32.totalorder %s219, %s220
      %p232 = scmp.eq.s32.totalorder %s37, 1
      %p233 = por %p231, %p232
      %p235 = scmp.ne.s32.totalorder %s220, %s234
      %p236 = scmp.eq.s32.totalorder %s37, 0
      %p237 = por %p235, %p236
      %s239 = sadd.s32 %s238, 1
      %p242 = scmp.eq.s32.totalorder %s31, 1
      %p243 = scmp.ne.s32.totalorder %s238, %s240
      %p244 = scmp.eq.s32.totalorder %s31, 0
      %p245 = por %p243, %p244
      %p246 = scmp.ne.s32.totalorder %s238, %s240
      %p247 = scmp.eq.s32.totalorder %s36, 1
      %p248 = por %p246, %p247
      %p249 = scmp.ne.s32.totalorder %s240, %s241
      %p250 = scmp.eq.s32.totalorder %s36, 0
      %p251 = por %p249, %p250
      %p252 = scmp.ne.s32.totalorder %s240, %s241
      %p253 = scmp.eq.s32.totalorder %s37, 1
      %p254 = por %p252, %p253
      %p256 = scmp.ne.s32.totalorder %s241, %s255
      %p257 = scmp.eq.s32.totalorder %s37, 0
      %p258 = por %p256, %p257
      %s260 = sadd.s32 %s259, 1
      %p263 = scmp.eq.s32.totalorder %s31, 1
      %p264 = scmp.ne.s32.totalorder %s259, %s261
      %p265 = scmp.eq.s32.totalorder %s31, 0
      %p266 = por %p264, %p265
      %p267 = scmp.ne.s32.totalorder %s259, %s261
      %p268 = scmp.eq.s32.totalorder %s36, 1
      %p269 = por %p267, %p268
      %p270 = scmp.ne.s32.totalorder %s261, %s262
      %p271 = scmp.eq.s32.totalorder %s36, 0
      %p272 = por %p270, %p271
      %p273 = scmp.ne.s32.totalorder %s261, %s262
      %p274 = scmp.eq.s32.totalorder %s37, 1
      %p275 = por %p273, %p274
      %p277 = scmp.ne.s32.totalorder %s262, %s276
      %p278 = scmp.eq.s32.totalorder %s37, 0
      %p279 = por %p277, %p278
      %s281 = sadd.s32 %s280, 1
      %p284 = scmp.eq.s32.totalorder %s31, 1
      %p285 = scmp.ne.s32.totalorder %s280, %s282
      %p286 = scmp.eq.s32.totalorder %s31, 0
      %p287 = por %p285, %p286
      %p288 = scmp.ne.s32.totalorder %s280, %s282
      %p289 = scmp.eq.s32.totalorder %s36, 1
      %p290 = por %p288, %p289
      %p291 = scmp.ne.s32.totalorder %s282, %s283
      %p292 = scmp.eq.s32.totalorder %s36, 0
      %p293 = por %p291, %p292
      %p294 = scmp.ne.s32.totalorder %s282, %s283
      %p295 = scmp.eq.s32.totalorder %s37, 1
      %p296 = por %p294, %p295
      %p298 = scmp.ne.s32.totalorder %s283, %s297
      %p299 = scmp.eq.s32.totalorder %s37, 0
      %p300 = por %p298, %p299
      %s302 = sadd.s32 %s301, 1
      %p305 = scmp.eq.s32.totalorder %s31, 1
      %p306 = scmp.ne.s32.totalorder %s301, %s303
      %p307 = scmp.eq.s32.totalorder %s31, 0
      %p308 = por %p306, %p307
      %p309 = scmp.ne.s32.totalorder %s301, %s303
      %p310 = scmp.eq.s32.totalorder %s36, 1
      %p311 = por %p309, %p310
      %p312 = scmp.ne.s32.totalorder %s303, %s304
      %p313 = scmp.eq.s32.totalorder %s36, 0
      %p314 = por %p312, %p313
      %p315 = scmp.ne.s32.totalorder %s303, %s304
      %p316 = scmp.eq.s32.totalorder %s37, 1
      %p317 = por %p315, %p316
      %p319 = scmp.ne.s32.totalorder %s304, %s318
      %p320 = scmp.eq.s32.totalorder %s37, 0
      %p321 = por %p319, %p320
      %s323 = sadd.s32 %s322, 1
      %p326 = scmp.eq.s32.totalorder %s31, 1
      %p327 = scmp.ne.s32.totalorder %s322, %s324
      %p328 = scmp.eq.s32.totalorder %s31, 0
      %p329 = por %p327, %p328
      %p330 = scmp.ne.s32.totalorder %s322, %s324
      %p331 = scmp.eq.s32.totalorder %s36, 1
      %p332 = por %p330, %p331
      %p333 = scmp.ne.s32.totalorder %s324, %s325
      %p334 = scmp.eq.s32.totalorder %s36, 0
      %p335 = por %p333, %p334
      %p336 = scmp.ne.s32.totalorder %s324, %s325
      %p337 = scmp.eq.s32.totalorder %s37, 1
      %p338 = por %p336, %p337
      %p340 = scmp.ne.s32.totalorder %s325, %s339
      %p341 = scmp.eq.s32.totalorder %s37, 0
      %p342 = por %p340, %p341
      %s343 = ssub.s32 %s31, %s38
      %p344 = scmp.eq.s32.totalorder %s343, 0
      %s346 = sadd.s32 %s345, 1
      %s347 = scalar_select %p344, %s345, %s346
      %p350 = pneg %p344
      %p351 = scmp.eq.s32.totalorder %s31, 1
      %p352 = por %p350, %p351
      %p353 = scmp.ne.s32.totalorder %s345, %s348
      %p354 = scmp.eq.s32.totalorder %s31, 0
      %p355 = por %p353, %p354
      %p356 = scmp.ne.s32.totalorder %s345, %s348
      %p357 = scmp.eq.s32.totalorder %s36, 1
      %p358 = por %p356, %p357
      %p359 = scmp.ne.s32.totalorder %s348, %s349
      %p360 = scmp.eq.s32.totalorder %s36, 0
      %p361 = por %p359, %p360
      %p362 = scmp.ne.s32.totalorder %s348, %s349
      %p363 = scmp.eq.s32.totalorder %s37, 1
      %p364 = por %p362, %p363
      %p366 = scmp.ne.s32.totalorder %s349, %s365
      %p367 = scmp.eq.s32.totalorder %s37, 0
      %p368 = por %p366, %p367
      %p369 = scmp.le.s32.totalorder 1, %s31
      %p370 = scmp.lt.s32.totalorder %s31, 3
      %p371 = pnand %p369, %p370
      %p372 = pneg %p371
      // Predicated region
      $region9: #{tpu_custom_call.1} parent=5 // pred_check
        _
      $region10: #{tpu_custom_call.1} parent=5 // pred_check_branch
        %374 = sbr.rel (%p371) target = $region12
      $region11: #{tpu_custom_call.1} parent=5 // pred_region
        %s375 = ssub.s32 %s31, 1
        // Predicated region
        $region13: #{tpu_custom_call.1} parent=11 // pred_check
          %p376 = pneg %p104
        $region14: #{tpu_custom_call.1} parent=11 // pred_check_branch
          %378 = sbr.rel (%p376) target = $region16
        $region15: #{tpu_custom_call.1} parent=11 // pred_region
          _
        $region16: #{tpu_custom_call.1} parent=11 // pred_fallthru
          _
        // Predicated region
        $region17: #{tpu_custom_call.1} parent=11 // pred_check
          %p379 = pneg %p125
        $region18: #{tpu_custom_call.1} parent=11 // pred_check_branch
          %381 = sbr.rel (%p379) target = $region20
        $region19: #{tpu_custom_call.1} parent=11 // pred_region
          _
        $region20: #{tpu_custom_call.1} parent=11 // pred_fallthru
          _
        // Predicated region
        $region21: #{tpu_custom_call.1} parent=11 // pred_check
          %p382 = pneg %p146
        $region22: #{tpu_custom_call.1} parent=11 // pred_check_branch
          %384 = sbr.rel (%p382) target = $region24
        $region23: #{tpu_custom_call.1} parent=11 // pred_region
          _
        $region24: #{tpu_custom_call.1} parent=11 // pred_fallthru
          _
        // Predicated region
        $region25: #{tpu_custom_call.1} parent=11 // pred_check
          %p385 = pneg %p167
        $region26: #{tpu_custom_call.1} parent=11 // pred_check_branch
          %387 = sbr.rel (%p385) target = $region28
        $region27: #{tpu_custom_call.1} parent=11 // pred_region
          _
        $region28: #{tpu_custom_call.1} parent=11 // pred_fallthru
          _
        // Predicated region
        $region29: #{tpu_custom_call.1} parent=11 // pred_check
          %p388 = pneg %p188
        $region30: #{tpu_custom_call.1} parent=11 // pred_check_branch
          %390 = sbr.rel (%p388) target = $region32
        $region31: #{tpu_custom_call.1} parent=11 // pred_region
          %s392 = ssub.s32 4096, 4096
          %393 = vsyncadd [#allocation6], %s392
          %s394 = sshll.u32 [#allocation7], 4
          %s395 = int_to_ptr.vmem [resolvable:$true] %s394
          %400 = dma.hbm_to_vmem [thread:$0]  %s6, 4096, %s395, [#allocation6], 128, 128, 8
        $region32: #{tpu_custom_call.1} parent=11 // pred_fallthru
          _
        // Predicated region
        $region33: #{tpu_custom_call.1} parent=11 // pred_check
          %p401 = pneg %p209
        $region34: #{tpu_custom_call.1} parent=11 // pred_check_branch
          %403 = sbr.rel (%p401) target = $region36
        $region35: #{tpu_custom_call.1} parent=11 // pred_region
          _
        $region36: #{tpu_custom_call.1} parent=11 // pred_fallthru
          _
        // Predicated region
        $region37: #{tpu_custom_call.1} parent=11 // pred_check
          %p404 = pneg %p230
        $region38: #{tpu_custom_call.1} parent=11 // pred_check_branch
          %406 = sbr.rel (%p404) target = $region40
        $region39: #{tpu_custom_call.1} parent=11 // pred_region
          %s408 = ssub.s32 4096, 4096
          %409 = vsyncadd [#allocation9], %s408
          %s410 = sshll.u32 [#allocation8], 4
          %s411 = int_to_ptr.vmem [resolvable:$true] %s410
          %416 = dma.hbm_to_vmem [thread:$0]  %s8, 4096, %s411, [#allocation9], 128, 128, 8
        $region40: #{tpu_custom_call.1} parent=11 // pred_fallthru
          _
        // Predicated region
        $region41: #{tpu_custom_call.1} parent=11 // pred_check
          %p417 = pneg %p251
        $region42: #{tpu_custom_call.1} parent=11 // pred_check_branch
          %419 = sbr.rel (%p417) target = $region44
        $region43: #{tpu_custom_call.1} parent=11 // pred_region
          _
        $region44: #{tpu_custom_call.1} parent=11 // pred_fallthru
          _
        // Predicated region
        $region45: #{tpu_custom_call.1} parent=11 // pred_check
          %p420 = pneg %p272
        $region46: #{tpu_custom_call.1} parent=11 // pred_check_branch
          %422 = sbr.rel (%p420) target = $region48
        $region47: #{tpu_custom_call.1} parent=11 // pred_region
          %s424 = ssub.s32 4096, 4096
          %425 = vsyncadd [#allocation9], %s424
          %s426 = sshll.u32 [#allocation10], 4
          %s427 = int_to_ptr.vmem [resolvable:$true] %s426
          %432 = dma.hbm_to_vmem [thread:$0]  %s10, 4096, %s427, [#allocation9], 128, 128, 8
        $region48: #{tpu_custom_call.1} parent=11 // pred_fallthru
          _
        // Predicated region
        $region49: #{tpu_custom_call.1} parent=11 // pred_check
          %p433 = pneg %p293
        $region50: #{tpu_custom_call.1} parent=11 // pred_check_branch
          %435 = sbr.rel (%p433) target = $region52
        $region51: #{tpu_custom_call.1} parent=11 // pred_region
          _
        $region52: #{tpu_custom_call.1} parent=11 // pred_fallthru
          _
        // Predicated region
        $region53: #{tpu_custom_call.1} parent=11 // pred_check
          %p436 = pneg %p314
        $region54: #{tpu_custom_call.1} parent=11 // pred_check_branch
          %438 = sbr.rel (%p436) target = $region56
        $region55: #{tpu_custom_call.1} parent=11 // pred_region
          %s440 = ssub.s32 4096, 4096
          %441 = vsyncadd [#allocation12], %s440
          %s442 = sshll.u32 [#allocation11], 4
          %s443 = int_to_ptr.vmem [resolvable:$true] %s442
          %448 = dma.hbm_to_vmem [thread:$0]  %s12, 4096, %s443, [#allocation12], 128, 128, 8
        $region56: #{tpu_custom_call.1} parent=11 // pred_fallthru
          _
        // Predicated region
        $region57: #{tpu_custom_call.1} parent=11 // pred_check
          %p449 = pneg %p335
        $region58: #{tpu_custom_call.1} parent=11 // pred_check_branch
          %451 = sbr.rel (%p449) target = $region60
        $region59: #{tpu_custom_call.1} parent=11 // pred_region
          _
        $region60: #{tpu_custom_call.1} parent=11 // pred_fallthru
          _
      $region12: #{tpu_custom_call.1} parent=5 // pred_fallthru
        _
      %p452 = scmp.lt.s32.totalorder %s31, 2
      // Predicated region
      $region61: #{tpu_custom_call.1} parent=5 // pred_check
        %p453 = pneg %p452
      $region62: #{tpu_custom_call.1} parent=5 // pred_check_branch
        %455 = sbr.rel (%p453) target = $region64
      $region63: #{tpu_custom_call.1} parent=5 // pred_region
        // Predicated region
        $region65: #{tpu_custom_call.1} parent=63 // pred_check
          %p456 = pneg %p51
        $region66: #{tpu_custom_call.1} parent=63 // pred_check_branch
          %458 = sbr.rel (%p456) target = $region68
        $region67: #{tpu_custom_call.1} parent=63 // pred_region
          %s459 = sand.u32 %s41, 1
          %s460 = scalar_lea.sflag [#allocation3], %s459
          %s461 = sand.u32 %s41, 1
          %s462 = smul.addr %s461, 256
          %s463 = scalar_lea.vmem [#allocation2], %s462
          %s465 = ssub.s32 4096, 4096
          %466 = vsyncadd %s460, %s465
          %s467 = smul.addr %s31, 32
          %s468 = smul.addr %s467, 128
          %s469 = scalar_lea.hbm %s0, %s468
          %s470 = sshll.u32 %s463, 4
          %s471 = int_to_ptr.vmem [resolvable:$true] %s470
          %476 = dma.hbm_to_vmem [thread:$0]  %s469, 4096, %s471, %s460, 256, 256, 16
        $region68: #{tpu_custom_call.1} parent=63 // pred_fallthru
          _
        // Predicated region
        $region69: #{tpu_custom_call.1} parent=63 // pred_check
          %p477 = pneg %p77
        $region70: #{tpu_custom_call.1} parent=63 // pred_check_branch
          %479 = sbr.rel (%p477) target = $region72
        $region71: #{tpu_custom_call.1} parent=63 // pred_region
          %s480 = sand.u32 %s31, 1
          %s481 = scalar_lea.sflag [#allocation6], %s480
          %s482 = sand.u32 %s67, 1
          %s483 = smul.addr %s482, 512
          %s484 = scalar_lea.vmem [#allocation5], %s483
          %s486 = ssub.s32 8192, 8192
          %487 = vsyncadd %s481, %s486
          %s488 = smul.addr %s31, 64
          %s489 = smul.addr %s488, 128
          %s490 = scalar_lea.hbm %s1, %s489
          %s491 = sshll.u32 %s484, 4
          %s492 = int_to_ptr.vmem [resolvable:$true] %s491
          %497 = dma.hbm_to_vmem [thread:$0]  %s490, 8192, %s492, %s481, 256, 256, 16
        $region72: #{tpu_custom_call.1} parent=63 // pred_fallthru
          _
      $region64: #{tpu_custom_call.1} parent=5 // pred_fallthru
        _
      %p498 = scmp.le.s32.totalorder 1, %s31
      %p499 = scmp.lt.s32.totalorder %s31, 3
      %p500 = pnand %p498, %p499
      %p501 = pneg %p500
      // Predicated region
      $region73: #{tpu_custom_call.1} parent=5 // pred_check
        _
      $region74: #{tpu_custom_call.1} parent=5 // pred_check_branch
        %503 = sbr.rel (%p500) target = $region76
      $region75: #{tpu_custom_call.1} parent=5 // pred_region
        %s504 = ssub.s32 %s31, 1
        %s505 = sand.u32 %s44, 1
        %s506 = scalar_lea.sflag [#allocation3], %s505
        %s507 = sand.u32 %s44, 1
        %s508 = smul.addr %s507, 256
        %s509 = scalar_lea.vmem [#allocation2], %s508
        // Predicated region
        $region77: #{tpu_custom_call.1} parent=75 // pred_check
          %p510 = pneg %p57
        $region78: #{tpu_custom_call.1} parent=75 // pred_check_branch
          %512 = sbr.rel (%p510) target = $region80
        $region79: #{tpu_custom_call.1} parent=75 // pred_region
          %513 = dma.done %s506, 4096
        $region80: #{tpu_custom_call.1} parent=75 // pred_fallthru
          _
        %s514 = sand.u32 %s36, 1
        %s515 = scalar_lea.sflag [#allocation6], %s514
        %s516 = sand.u32 %s70, 1
        %s517 = smul.addr %s516, 512
        %s518 = scalar_lea.vmem [#allocation5], %s517
        // Predicated region
        $region81: #{tpu_custom_call.1} parent=75 // pred_check
          %p519 = pneg %p83
        $region82: #{tpu_custom_call.1} parent=75 // pred_check_branch
          %521 = sbr.rel (%p519) target = $region84
        $region83: #{tpu_custom_call.1} parent=75 // pred_region
          %522 = dma.done %s515, 8192
        $region84: #{tpu_custom_call.1} parent=75 // pred_fallthru
          _
        // Predicated region
        $region85: #{tpu_custom_call.1} parent=75 // pred_check
          %p523 = pneg %p188
        $region86: #{tpu_custom_call.1} parent=75 // pred_check_branch
          %525 = sbr.rel (%p523) target = $region88
        $region87: #{tpu_custom_call.1} parent=75 // pred_region
          %526 = dma.done [#allocation6], 4096
        $region88: #{tpu_custom_call.1} parent=75 // pred_fallthru
          _
        // Predicated region
        $region89: #{tpu_custom_call.1} parent=75 // pred_check
          %p527 = pneg %p230
        $region90: #{tpu_custom_call.1} parent=75 // pred_check_branch
          %529 = sbr.rel (%p527) target = $region92
        $region91: #{tpu_custom_call.1} parent=75 // pred_region
          %530 = dma.done [#allocation9], 4096
        $region92: #{tpu_custom_call.1} parent=75 // pred_fallthru
          _
        // Predicated region
        $region93: #{tpu_custom_call.1} parent=75 // pred_check
          %p531 = pneg %p272
        $region94: #{tpu_custom_call.1} parent=75 // pred_check_branch
          %533 = sbr.rel (%p531) target = $region96
        $region95: #{tpu_custom_call.1} parent=75 // pred_region
          %534 = dma.done [#allocation9], 4096
        $region96: #{tpu_custom_call.1} parent=75 // pred_fallthru
          _
        // Predicated region
        $region97: #{tpu_custom_call.1} parent=75 // pred_check
          %p535 = pneg %p314
        $region98: #{tpu_custom_call.1} parent=75 // pred_check_branch
          %537 = sbr.rel (%p535) target = $region100
        $region99: #{tpu_custom_call.1} parent=75 // pred_region
          %538 = dma.done [#allocation12], 4096
        $region100: #{tpu_custom_call.1} parent=75 // pred_fallthru
          _
        %s539 = sand.u32 %s44, 1
        %s540 = scalar_lea.sflag [#allocation3], %s539
        %s541 = sand.u32 %s44, 1
        %s542 = smul.addr %s541, 256
        %s543 = scalar_lea.vmem [#allocation2], %s542
        %p544 = pneg %p57
        %p545 = pneg %p54
        %s546 = sand.u32 %s36, 1
        %s547 = scalar_lea.sflag [#allocation6], %s546
        %s548 = sand.u32 %s70, 1
        %s549 = smul.addr %s548, 512
        %s550 = scalar_lea.vmem [#allocation5], %s549
        %p551 = pneg %p83
        %p552 = pneg %p80
        %p553 = pneg %p104
        %p554 = pneg %p101
        %p555 = pneg %p125
        %p556 = pneg %p122
        %p557 = pneg %p146
        %p558 = pneg %p143
        %p559 = pneg %p167
        %p560 = pneg %p164
        %p561 = pneg %p188
        %p562 = pneg %p185
        %p563 = pneg %p209
        %p564 = pneg %p206
        %p565 = pneg %p230
        %p566 = pneg %p227
        %p567 = pneg %p251
        %p568 = pneg %p248
        %p569 = pneg %p272
        %p570 = pneg %p269
        %p571 = pneg %p293
        %p572 = pneg %p290
        %p573 = pneg %p314
        %p574 = pneg %p311
        %p575 = pneg %p335
        %p576 = pneg %p332
        %p577 = pneg %p361
        %p578 = pneg %p358
        %s579 = sand.u32 %s348, 1
        %s580 = scalar_lea.sflag [#allocation4], %s579
        %s581 = sand.u32 %s348, 1
        %s582 = smul.addr %s581, 256
        %s583 = scalar_lea.vmem [#allocation13], %s582
        %v585 = vld [vmem:[%s509] sm:$0xff]
        %v586 = vld [vmem:[%s509 + $0x8] sm:$0xff]
        %v587 = vld [vmem:[%s509 + $0x10] sm:$0xff]
        %v588 = vld [vmem:[%s509 + $0x18] sm:$0xff]
        %v589 = vld [vmem:[%s509 + $0x20] sm:$0xff]
        %v590 = vld [vmem:[%s509 + $0x28] sm:$0xff]
        %v591 = vld [vmem:[%s509 + $0x30] sm:$0xff]
        %v592 = vld [vmem:[%s509 + $0x38] sm:$0xff]
        %v593 = vld [vmem:[%s509 + $0x40] sm:$0xff]
        %v594 = vld [vmem:[%s509 + $0x48] sm:$0xff]
        %v595 = vld [vmem:[%s509 + $0x50] sm:$0xff]
        %v596 = vld [vmem:[%s509 + $0x58] sm:$0xff]
        %v597 = vld [vmem:[%s509 + $0x60] sm:$0xff]
        %v598 = vld [vmem:[%s509 + $0x68] sm:$0xff]
        %v599 = vld [vmem:[%s509 + $0x70] sm:$0xff]
        %v600 = vld [vmem:[%s509 + $0x78] sm:$0xff]
        %v601 = vld [vmem:[%s509 + $0x80] sm:$0xff]
        %v602 = vld [vmem:[%s509 + $0x88] sm:$0xff]
        %v603 = vld [vmem:[%s509 + $0x90] sm:$0xff]
        %v604 = vld [vmem:[%s509 + $0x98] sm:$0xff]
        %v605 = vld [vmem:[%s509 + $0xa0] sm:$0xff]
        %v606 = vld [vmem:[%s509 + $0xa8] sm:$0xff]
        %v607 = vld [vmem:[%s509 + $0xb0] sm:$0xff]
        %v608 = vld [vmem:[%s509 + $0xb8] sm:$0xff]
        %v609 = vld [vmem:[%s509 + $0xc0] sm:$0xff]
        %v610 = vld [vmem:[%s509 + $0xc8] sm:$0xff]
        %v611 = vld [vmem:[%s509 + $0xd0] sm:$0xff]
        %v612 = vld [vmem:[%s509 + $0xd8] sm:$0xff]
        %v613 = vld [vmem:[%s509 + $0xe0] sm:$0xff]
        %v614 = vld [vmem:[%s509 + $0xe8] sm:$0xff]
        %v615 = vld [vmem:[%s509 + $0xf0] sm:$0xff]
        %v616 = vld [vmem:[%s509 + $0xf8] sm:$0xff]
        %v617 = vld [vmem:[%s518] sm:$0xff]
        %v618 = vld [vmem:[%s518 + $0x8] sm:$0xff]
        %v619 = vld [vmem:[%s518 + $0x10] sm:$0xff]
        %v620 = vld [vmem:[%s518 + $0x18] sm:$0xff]
        %v621 = vld [vmem:[%s518 + $0x20] sm:$0xff]
        %v622 = vld [vmem:[%s518 + $0x28] sm:$0xff]
        %v623 = vld [vmem:[%s518 + $0x30] sm:$0xff]
        %v624 = vld [vmem:[%s518 + $0x38] sm:$0xff]
        %v625 = vld [vmem:[%s518 + $0x40] sm:$0xff]
        %v626 = vld [vmem:[%s518 + $0x48] sm:$0xff]
        %v627 = vld [vmem:[%s518 + $0x50] sm:$0xff]
        %v628 = vld [vmem:[%s518 + $0x58] sm:$0xff]
        %v629 = vld [vmem:[%s518 + $0x60] sm:$0xff]
        %v630 = vld [vmem:[%s518 + $0x68] sm:$0xff]
        %v631 = vld [vmem:[%s518 + $0x70] sm:$0xff]
        %v632 = vld [vmem:[%s518 + $0x78] sm:$0xff]
        %v633 = vld [vmem:[%s518 + $0x80] sm:$0xff]
        %v634 = vld [vmem:[%s518 + $0x88] sm:$0xff]
        %v635 = vld [vmem:[%s518 + $0x90] sm:$0xff]
        %v636 = vld [vmem:[%s518 + $0x98] sm:$0xff]
        %v637 = vld [vmem:[%s518 + $0xa0] sm:$0xff]
        %v638 = vld [vmem:[%s518 + $0xa8] sm:$0xff]
        %v639 = vld [vmem:[%s518 + $0xb0] sm:$0xff]
        %v640 = vld [vmem:[%s518 + $0xb8] sm:$0xff]
        %v641 = vld [vmem:[%s518 + $0xc0] sm:$0xff]
        %v642 = vld [vmem:[%s518 + $0xc8] sm:$0xff]
        %v643 = vld [vmem:[%s518 + $0xd0] sm:$0xff]
        %v644 = vld [vmem:[%s518 + $0xd8] sm:$0xff]
        %v645 = vld [vmem:[%s518 + $0xe0] sm:$0xff]
        %v646 = vld [vmem:[%s518 + $0xe8] sm:$0xff]
        %v647 = vld [vmem:[%s518 + $0xf0] sm:$0xff]
        %v648 = vld [vmem:[%s518 + $0xf8] sm:$0xff]
        %v649 = vld [vmem:[%s518 + $0x100] sm:$0xff]
        %v650 = vld [vmem:[%s518 + $0x108] sm:$0xff]
        %v651 = vld [vmem:[%s518 + $0x110] sm:$0xff]
        %v652 = vld [vmem:[%s518 + $0x118] sm:$0xff]
        %v653 = vld [vmem:[%s518 + $0x120] sm:$0xff]
        %v654 = vld [vmem:[%s518 + $0x128] sm:$0xff]
        %v655 = vld [vmem:[%s518 + $0x130] sm:$0xff]
        %v656 = vld [vmem:[%s518 + $0x138] sm:$0xff]
        %v657 = vld [vmem:[%s518 + $0x140] sm:$0xff]
        %v658 = vld [vmem:[%s518 + $0x148] sm:$0xff]
        %v659 = vld [vmem:[%s518 + $0x150] sm:$0xff]
        %v660 = vld [vmem:[%s518 + $0x158] sm:$0xff]
        %v661 = vld [vmem:[%s518 + $0x160] sm:$0xff]
        %v662 = vld [vmem:[%s518 + $0x168] sm:$0xff]
        %v663 = vld [vmem:[%s518 + $0x170] sm:$0xff]
        %v664 = vld [vmem:[%s518 + $0x178] sm:$0xff]
        %v665 = vld [vmem:[%s518 + $0x180] sm:$0xff]
        %v666 = vld [vmem:[%s518 + $0x188] sm:$0xff]
        %v667 = vld [vmem:[%s518 + $0x190] sm:$0xff]
        %v668 = vld [vmem:[%s518 + $0x198] sm:$0xff]
        %v669 = vld [vmem:[%s518 + $0x1a0] sm:$0xff]
        %v670 = vld [vmem:[%s518 + $0x1a8] sm:$0xff]
        %v671 = vld [vmem:[%s518 + $0x1b0] sm:$0xff]
        %v672 = vld [vmem:[%s518 + $0x1b8] sm:$0xff]
        %v673 = vld [vmem:[%s518 + $0x1c0] sm:$0xff]
        %v674 = vld [vmem:[%s518 + $0x1c8] sm:$0xff]
        %v675 = vld [vmem:[%s518 + $0x1d0] sm:$0xff]
        %v676 = vld [vmem:[%s518 + $0x1d8] sm:$0xff]
        %v677 = vld [vmem:[%s518 + $0x1e0] sm:$0xff]
        %v678 = vld [vmem:[%s518 + $0x1e8] sm:$0xff]
        %v679 = vld [vmem:[%s518 + $0x1f0] sm:$0xff]
        %v680 = vld [vmem:[%s518 + $0x1f8] sm:$0xff]
        %v681 = vld [vmem:[%s2] sm:$0x3]
        %v682 = vld [vmem:[%s3] sm:$0x3]
        %v683 = vadd.f32 %v585, %v586
        %684 = vadd.xlane.f32.xlu0 %v683
        %v685 = vpop.xlane.xlu0 %684
        %v686 = vadd.f32 %v587, %v588
        %687 = vadd.xlane.f32.xlu0 %v686
        %v688 = vpop.xlane.xlu0 %687
        %v689 = vadd.f32 %v589, %v590
        %690 = vadd.xlane.f32.xlu0 %v689
        %v691 = vpop.xlane.xlu0 %690
        %v692 = vadd.f32 %v591, %v592
        %693 = vadd.xlane.f32.xlu0 %v692
        %v694 = vpop.xlane.xlu0 %693
        %v695 = vadd.f32 %v593, %v594
        %696 = vadd.xlane.f32.xlu0 %v695
        %v697 = vpop.xlane.xlu0 %696
        %v698 = vadd.f32 %v595, %v596
        %699 = vadd.xlane.f32.xlu0 %v698
        %v700 = vpop.xlane.xlu0 %699
        %v701 = vadd.f32 %v597, %v598
        %702 = vadd.xlane.f32.xlu0 %v701
        %v703 = vpop.xlane.xlu0 %702
        %v704 = vadd.f32 %v599, %v600
        %705 = vadd.xlane.f32.xlu0 %v704
        %v706 = vpop.xlane.xlu0 %705
        %v707 = vadd.f32 %v601, %v602
        %708 = vadd.xlane.f32.xlu0 %v707
        %v709 = vpop.xlane.xlu0 %708
        %v710 = vadd.f32 %v603, %v604
        %711 = vadd.xlane.f32.xlu0 %v710
        %v712 = vpop.xlane.xlu0 %711
        %v713 = vadd.f32 %v605, %v606
        %714 = vadd.xlane.f32.xlu0 %v713
        %v715 = vpop.xlane.xlu0 %714
        %v716 = vadd.f32 %v607, %v608
        %717 = vadd.xlane.f32.xlu0 %v716
        %v718 = vpop.xlane.xlu0 %717
        %v719 = vadd.f32 %v609, %v610
        %720 = vadd.xlane.f32.xlu0 %v719
        %v721 = vpop.xlane.xlu0 %720
        %v722 = vadd.f32 %v611, %v612
        %723 = vadd.xlane.f32.xlu0 %v722
        %v724 = vpop.xlane.xlu0 %723
        %v725 = vadd.f32 %v613, %v614
        %726 = vadd.xlane.f32.xlu0 %v725
        %v727 = vpop.xlane.xlu0 %726
        %v728 = vadd.f32 %v615, %v616
        %729 = vadd.xlane.f32.xlu0 %v728
        %v730 = vpop.xlane.xlu0 %729
        %v731 = vrcp.pop 256.0
        %v732 = vmul.f32 %v685, %v731
        %v733 = vmul.f32 %v688, %v731
        %v734 = vmul.f32 %v691, %v731
        %v735 = vmul.f32 %v694, %v731
        %v736 = vmul.f32 %v697, %v731
        %v737 = vmul.f32 %v700, %v731
        %v738 = vmul.f32 %v703, %v731
        %v739 = vmul.f32 %v706, %v731
        %v740 = vmul.f32 %v709, %v731
        %v741 = vmul.f32 %v712, %v731
        %v742 = vmul.f32 %v715, %v731
        %v743 = vmul.f32 %v718, %v731
        %v744 = vmul.f32 %v721, %v731
        %v745 = vmul.f32 %v724, %v731
        %v746 = vmul.f32 %v727, %v731
        %v747 = vmul.f32 %v730, %v731
        %v748 = vsub.f32 %v585, %v732
        %v749 = vsub.f32 %v586, %v732
        %v750 = vsub.f32 %v587, %v733
        %v751 = vsub.f32 %v588, %v733
        %v752 = vsub.f32 %v589, %v734
        %v753 = vsub.f32 %v590, %v734
        %v754 = vsub.f32 %v591, %v735
        %v755 = vsub.f32 %v592, %v735
        %v756 = vsub.f32 %v593, %v736
        %v757 = vsub.f32 %v594, %v736
        %v758 = vsub.f32 %v595, %v737
        %v759 = vsub.f32 %v596, %v737
        %v760 = vsub.f32 %v597, %v738
        %v761 = vsub.f32 %v598, %v738
        %v762 = vsub.f32 %v599, %v739
        %v763 = vsub.f32 %v600, %v739
        %v764 = vsub.f32 %v601, %v740
        %v765 = vsub.f32 %v602, %v740
        %v766 = vsub.f32 %v603, %v741
        %v767 = vsub.f32 %v604, %v741
        %v768 = vsub.f32 %v605, %v742
        %v769 = vsub.f32 %v606, %v742
        %v770 = vsub.f32 %v607, %v743
        %v771 = vsub.f32 %v608, %v743
        %v772 = vsub.f32 %v609, %v744
        %v773 = vsub.f32 %v610, %v744
        %v774 = vsub.f32 %v611, %v745
        %v775 = vsub.f32 %v612, %v745
        %v776 = vsub.f32 %v613, %v746
        %v777 = vsub.f32 %v614, %v746
        %v778 = vsub.f32 %v615, %v747
        %v779 = vsub.f32 %v616, %v747
        %v780 = vmul.f32 %v748, %v748
        %v781 = vmul.f32 %v749, %v749
        %v782 = vmul.f32 %v750, %v750
        %v783 = vmul.f32 %v751, %v751
        %v784 = vmul.f32 %v752, %v752
        %v785 = vmul.f32 %v753, %v753
        %v786 = vmul.f32 %v754, %v754
        %v787 = vmul.f32 %v755, %v755
        %v788 = vmul.f32 %v756, %v756
        %v789 = vmul.f32 %v757, %v757
        %v790 = vmul.f32 %v758, %v758
        %v791 = vmul.f32 %v759, %v759
        %v792 = vmul.f32 %v760, %v760
        %v793 = vmul.f32 %v761, %v761
        %v794 = vmul.f32 %v762, %v762
        %v795 = vmul.f32 %v763, %v763
        %v796 = vmul.f32 %v764, %v764
        %v797 = vmul.f32 %v765, %v765
        %v798 = vmul.f32 %v766, %v766
        %v799 = vmul.f32 %v767, %v767
        %v800 = vmul.f32 %v768, %v768
        %v801 = vmul.f32 %v769, %v769
        %v802 = vmul.f32 %v770, %v770
        %v803 = vmul.f32 %v771, %v771
        %v804 = vmul.f32 %v772, %v772
        %v805 = vmul.f32 %v773, %v773
        %v806 = vmul.f32 %v774, %v774
        %v807 = vmul.f32 %v775, %v775
        %v808 = vmul.f32 %v776, %v776
        %v809 = vmul.f32 %v777, %v777
        %v810 = vmul.f32 %v778, %v778
        %v811 = vmul.f32 %v779, %v779
        %v812 = vadd.f32 %v780, %v781
        %813 = vadd.xlane.f32.xlu0 %v812
        %v814 = vpop.xlane.xlu0 %813
        %v815 = vadd.f32 %v782, %v783
        %816 = vadd.xlane.f32.xlu0 %v815
        %v817 = vpop.xlane.xlu0 %816
        %v818 = vadd.f32 %v784, %v785
        %819 = vadd.xlane.f32.xlu0 %v818
        %v820 = vpop.xlane.xlu0 %819
        %v821 = vadd.f32 %v786, %v787
        %822 = vadd.xlane.f32.xlu0 %v821
        %v823 = vpop.xlane.xlu0 %822
        %v824 = vadd.f32 %v788, %v789
        %825 = vadd.xlane.f32.xlu0 %v824
        %v826 = vpop.xlane.xlu0 %825
        %v827 = vadd.f32 %v790, %v791
        %828 = vadd.xlane.f32.xlu0 %v827
        %v829 = vpop.xlane.xlu0 %828
        %v830 = vadd.f32 %v792, %v793
        %831 = vadd.xlane.f32.xlu0 %v830
        %v832 = vpop.xlane.xlu0 %831
        %v833 = vadd.f32 %v794, %v795
        %834 = vadd.xlane.f32.xlu0 %v833
        %v835 = vpop.xlane.xlu0 %834
        %v836 = vadd.f32 %v796, %v797
        %837 = vadd.xlane.f32.xlu0 %v836
        %v838 = vpop.xlane.xlu0 %837
        %v839 = vadd.f32 %v798, %v799
        %840 = vadd.xlane.f32.xlu0 %v839
        %v841 = vpop.xlane.xlu0 %840
        %v842 = vadd.f32 %v800, %v801
        %843 = vadd.xlane.f32.xlu0 %v842
        %v844 = vpop.xlane.xlu0 %843
        %v845 = vadd.f32 %v802, %v803
        %846 = vadd.xlane.f32.xlu0 %v845
        %v847 = vpop.xlane.xlu0 %846
        %v848 = vadd.f32 %v804, %v805
        %849 = vadd.xlane.f32.xlu0 %v848
        %v850 = vpop.xlane.xlu0 %849
        %v851 = vadd.f32 %v806, %v807
        %852 = vadd.xlane.f32.xlu0 %v851
        %v853 = vpop.xlane.xlu0 %852
        %v854 = vadd.f32 %v808, %v809
        %855 = vadd.xlane.f32.xlu0 %v854
        %v856 = vpop.xlane.xlu0 %855
        %v857 = vadd.f32 %v810, %v811
        %858 = vadd.xlane.f32.xlu0 %v857
        %v859 = vpop.xlane.xlu0 %858
        %v860 = vmul.f32 %v814, %v731
        %v861 = vmul.f32 %v817, %v731
        %v862 = vmul.f32 %v820, %v731
        %v863 = vmul.f32 %v823, %v731
        %v864 = vmul.f32 %v826, %v731
        %v865 = vmul.f32 %v829, %v731
        %v866 = vmul.f32 %v832, %v731
        %v867 = vmul.f32 %v835, %v731
        %v868 = vmul.f32 %v838, %v731
        %v869 = vmul.f32 %v841, %v731
        %v870 = vmul.f32 %v844, %v731
        %v871 = vmul.f32 %v847, %v731
        %v872 = vmul.f32 %v850, %v731
        %v873 = vmul.f32 %v853, %v731
        %v874 = vmul.f32 %v856, %v731
        %v875 = vmul.f32 %v859, %v731
        %v876 = vadd.f32 %v860, 1e-05
        %v877 = vadd.f32 %v861, 1e-05
        %v878 = vadd.f32 %v862, 1e-05
        %v879 = vadd.f32 %v863, 1e-05
        %v880 = vadd.f32 %v864, 1e-05
        %v881 = vadd.f32 %v865, 1e-05
        %v882 = vadd.f32 %v866, 1e-05
        %v883 = vadd.f32 %v867, 1e-05
        %v884 = vadd.f32 %v868, 1e-05
        %v885 = vadd.f32 %v869, 1e-05
        %v886 = vadd.f32 %v870, 1e-05
        %v887 = vadd.f32 %v871, 1e-05
        %v888 = vadd.f32 %v872, 1e-05
        %v889 = vadd.f32 %v873, 1e-05
        %v890 = vadd.f32 %v874, 1e-05
        %v891 = vadd.f32 %v875, 1e-05
        %v892 = vrsqrt.pop %v876
        %v893 = vrsqrt.pop %v877
        %v894 = vrsqrt.pop %v878
        %v895 = vrsqrt.pop %v879
        %v896 = vrsqrt.pop %v880
        %v897 = vrsqrt.pop %v881
        %v898 = vrsqrt.pop %v882
        %v899 = vrsqrt.pop %v883
        %v900 = vrsqrt.pop %v884
        %v901 = vrsqrt.pop %v885
        %v902 = vrsqrt.pop %v886
        %v903 = vrsqrt.pop %v887
        %v904 = vrsqrt.pop %v888
        %v905 = vrsqrt.pop %v889
        %v906 = vrsqrt.pop %v890
        %v907 = vrsqrt.pop %v891
        %v908 = vmul.f32 %v748, %v892
        %v909 = vmul.f32 %v749, %v892
        %v910 = vmul.f32 %v750, %v893
        %v911 = vmul.f32 %v751, %v893
        %v912 = vmul.f32 %v752, %v894
        %v913 = vmul.f32 %v753, %v894
        %v914 = vmul.f32 %v754, %v895
        %v915 = vmul.f32 %v755, %v895
        %v916 = vmul.f32 %v756, %v896
        %v917 = vmul.f32 %v757, %v896
        %v918 = vmul.f32 %v758, %v897
        %v919 = vmul.f32 %v759, %v897
        %v920 = vmul.f32 %v760, %v898
        %v921 = vmul.f32 %v761, %v898
        %v922 = vmul.f32 %v762, %v899
        %v923 = vmul.f32 %v763, %v899
        %v924 = vmul.f32 %v764, %v900
        %v925 = vmul.f32 %v765, %v900
        %v926 = vmul.f32 %v766, %v901
        %v927 = vmul.f32 %v767, %v901
        %v928 = vmul.f32 %v768, %v902
        %v929 = vmul.f32 %v769, %v902
        %v930 = vmul.f32 %v770, %v903
        %v931 = vmul.f32 %v771, %v903
        %v932 = vmul.f32 %v772, %v904
        %v933 = vmul.f32 %v773, %v904
        %v934 = vmul.f32 %v774, %v905
        %v935 = vmul.f32 %v775, %v905
        %v936 = vmul.f32 %v776, %v906
        %v937 = vmul.f32 %v777, %v906
        %v938 = vmul.f32 %v778, %v907
        %v939 = vmul.f32 %v779, %v907
        %v941 = vlaneseq
        %v942 = vshrl.u32 %v941, 7
        %v943 = vsub.s32 0, %v942
        %v944 = vrot.slane %v681, %v943
        %v945 = vlaneseq
        %v946 = vshrl.u32 %v945, 7
        %v947 = vsub.s32 1, %v946
        %v948 = vrot.slane %v681, %v947
        %v951 = vmul.f32 %v908, %v944
        %v952 = vmul.f32 %v909, %v948
        %v953 = vmul.f32 %v910, %v944
        %v954 = vmul.f32 %v911, %v948
        %v955 = vmul.f32 %v912, %v944
        %v956 = vmul.f32 %v913, %v948
        %v957 = vmul.f32 %v914, %v944
        %v958 = vmul.f32 %v915, %v948
        %v959 = vmul.f32 %v916, %v944
        %v960 = vmul.f32 %v917, %v948
        %v961 = vmul.f32 %v918, %v944
        %v962 = vmul.f32 %v919, %v948
        %v963 = vmul.f32 %v920, %v944
        %v964 = vmul.f32 %v921, %v948
        %v965 = vmul.f32 %v922, %v944
        %v966 = vmul.f32 %v923, %v948
        %v967 = vmul.f32 %v924, %v944
        %v968 = vmul.f32 %v925, %v948
        %v969 = vmul.f32 %v926, %v944
        %v970 = vmul.f32 %v927, %v948
        %v971 = vmul.f32 %v928, %v944
        %v972 = vmul.f32 %v929, %v948
        %v973 = vmul.f32 %v930, %v944
        %v974 = vmul.f32 %v931, %v948
        %v975 = vmul.f32 %v932, %v944
        %v976 = vmul.f32 %v933, %v948
        %v977 = vmul.f32 %v934, %v944
        %v978 = vmul.f32 %v935, %v948
        %v979 = vmul.f32 %v936, %v944
        %v980 = vmul.f32 %v937, %v948
        %v981 = vmul.f32 %v938, %v944
        %v982 = vmul.f32 %v939, %v948
        %v984 = vlaneseq
        %v985 = vshrl.u32 %v984, 7
        %v986 = vsub.s32 0, %v985
        %v987 = vrot.slane %v682, %v986
        %v988 = vlaneseq
        %v989 = vshrl.u32 %v988, 7
        %v990 = vsub.s32 1, %v989
        %v991 = vrot.slane %v682, %v990
        %v994 = vadd.f32 %v951, %v987
        %v995 = vadd.f32 %v952, %v991
        %v996 = vadd.f32 %v953, %v987
        %v997 = vadd.f32 %v954, %v991
        %v998 = vadd.f32 %v955, %v987
        %v999 = vadd.f32 %v956, %v991
        %v1000 = vadd.f32 %v957, %v987
        %v1001 = vadd.f32 %v958, %v991
        %v1002 = vadd.f32 %v959, %v987
        %v1003 = vadd.f32 %v960, %v991
        %v1004 = vadd.f32 %v961, %v987
        %v1005 = vadd.f32 %v962, %v991
        %v1006 = vadd.f32 %v963, %v987
        %v1007 = vadd.f32 %v964, %v991
        %v1008 = vadd.f32 %v965, %v987
        %v1009 = vadd.f32 %v966, %v991
        %v1010 = vadd.f32 %v967, %v987
        %v1011 = vadd.f32 %v968, %v991
        %v1012 = vadd.f32 %v969, %v987
        %v1013 = vadd.f32 %v970, %v991
        %v1014 = vadd.f32 %v971, %v987
        %v1015 = vadd.f32 %v972, %v991
        %v1016 = vadd.f32 %v973, %v987
        %v1017 = vadd.f32 %v974, %v991
        %v1018 = vadd.f32 %v975, %v987
        %v1019 = vadd.f32 %v976, %v991
        %v1020 = vadd.f32 %v977, %v987
        %v1021 = vadd.f32 %v978, %v991
        %v1022 = vadd.f32 %v979, %v987
        %v1023 = vadd.f32 %v980, %v991
        %v1024 = vadd.f32 %v981, %v987
        %v1025 = vadd.f32 %v982, %v991
        %v1026 = vpack.c.bf16 %v996, %v994
        %v1027 = vpack.c.bf16 %v997, %v995
        %v1028 = vpack.c.bf16 %v1000, %v998
        %v1029 = vpack.c.bf16 %v1001, %v999
        %v1030 = vpack.c.bf16 %v1004, %v1002
        %v1031 = vpack.c.bf16 %v1005, %v1003
        %v1032 = vpack.c.bf16 %v1008, %v1006
        %v1033 = vpack.c.bf16 %v1009, %v1007
        %v1034 = vpack.c.bf16 %v1012, %v1010
        %v1035 = vpack.c.bf16 %v1013, %v1011
        %v1036 = vpack.c.bf16 %v1016, %v1014
        %v1037 = vpack.c.bf16 %v1017, %v1015
        %v1038 = vpack.c.bf16 %v1020, %v1018
        %v1039 = vpack.c.bf16 %v1021, %v1019
        %v1040 = vpack.c.bf16 %v1024, %v1022
        %v1041 = vpack.c.bf16 %v1025, %v1023
        %v1042 = vld [vmem:[%s4] sm:$0x3]
        %v1043 = vld [vmem:[%s5] sm:$0x3]
        %v1044 = vadd.f32 %v617, %v618
        %1045 = vadd.xlane.f32.xlu0 %v1044
        %v1046 = vpop.xlane.xlu0 %1045
        %v1047 = vadd.f32 %v619, %v620
        %1048 = vadd.xlane.f32.xlu0 %v1047
        %v1049 = vpop.xlane.xlu0 %1048
        %v1050 = vadd.f32 %v621, %v622
        %1051 = vadd.xlane.f32.xlu0 %v1050
        %v1052 = vpop.xlane.xlu0 %1051
        %v1053 = vadd.f32 %v623, %v624
        %1054 = vadd.xlane.f32.xlu0 %v1053
        %v1055 = vpop.xlane.xlu0 %1054
        %v1056 = vadd.f32 %v625, %v626
        %1057 = vadd.xlane.f32.xlu0 %v1056
        %v1058 = vpop.xlane.xlu0 %1057
        %v1059 = vadd.f32 %v627, %v628
        %1060 = vadd.xlane.f32.xlu0 %v1059
        %v1061 = vpop.xlane.xlu0 %1060
        %v1062 = vadd.f32 %v629, %v630
        %1063 = vadd.xlane.f32.xlu0 %v1062
        %v1064 = vpop.xlane.xlu0 %1063
        %v1065 = vadd.f32 %v631, %v632
        %1066 = vadd.xlane.f32.xlu0 %v1065
        %v1067 = vpop.xlane.xlu0 %1066
        %v1068 = vadd.f32 %v633, %v634
        %1069 = vadd.xlane.f32.xlu0 %v1068
        %v1070 = vpop.xlane.xlu0 %1069
        %v1071 = vadd.f32 %v635, %v636
        %1072 = vadd.xlane.f32.xlu0 %v1071
        %v1073 = vpop.xlane.xlu0 %1072
        %v1074 = vadd.f32 %v637, %v638
        %1075 = vadd.xlane.f32.xlu0 %v1074
        %v1076 = vpop.xlane.xlu0 %1075
        %v1077 = vadd.f32 %v639, %v640
        %1078 = vadd.xlane.f32.xlu0 %v1077
        %v1079 = vpop.xlane.xlu0 %1078
        %v1080 = vadd.f32 %v641, %v642
        %1081 = vadd.xlane.f32.xlu0 %v1080
        %v1082 = vpop.xlane.xlu0 %1081
        %v1083 = vadd.f32 %v643, %v644
        %1084 = vadd.xlane.f32.xlu0 %v1083
        %v1085 = vpop.xlane.xlu0 %1084
        %v1086 = vadd.f32 %v645, %v646
        %1087 = vadd.xlane.f32.xlu0 %v1086
        %v1088 = vpop.xlane.xlu0 %1087
        %v1089 = vadd.f32 %v647, %v648
        %1090 = vadd.xlane.f32.xlu0 %v1089
        %v1091 = vpop.xlane.xlu0 %1090
        %v1092 = vadd.f32 %v649, %v650
        %1093 = vadd.xlane.f32.xlu0 %v1092
        %v1094 = vpop.xlane.xlu0 %1093
        %v1095 = vadd.f32 %v651, %v652
        %1096 = vadd.xlane.f32.xlu0 %v1095
        %v1097 = vpop.xlane.xlu0 %1096
        %v1098 = vadd.f32 %v653, %v654
        %1099 = vadd.xlane.f32.xlu0 %v1098
        %v1100 = vpop.xlane.xlu0 %1099
        %v1101 = vadd.f32 %v655, %v656
        %1102 = vadd.xlane.f32.xlu0 %v1101
        %v1103 = vpop.xlane.xlu0 %1102
        %v1104 = vadd.f32 %v657, %v658
        %1105 = vadd.xlane.f32.xlu0 %v1104
        %v1106 = vpop.xlane.xlu0 %1105
        %v1107 = vadd.f32 %v659, %v660
        %1108 = vadd.xlane.f32.xlu0 %v1107
        %v1109 = vpop.xlane.xlu0 %1108
        %v1110 = vadd.f32 %v661, %v662
        %1111 = vadd.xlane.f32.xlu0 %v1110
        %v1112 = vpop.xlane.xlu0 %1111
        %v1113 = vadd.f32 %v663, %v664
        %1114 = vadd.xlane.f32.xlu0 %v1113
        %v1115 = vpop.xlane.xlu0 %1114
        %v1116 = vadd.f32 %v665, %v666
        %1117 = vadd.xlane.f32.xlu0 %v1116
        %v1118 = vpop.xlane.xlu0 %1117
        %v1119 = vadd.f32 %v667, %v668
        %1120 = vadd.xlane.f32.xlu0 %v1119
        %v1121 = vpop.xlane.xlu0 %1120
        %v1122 = vadd.f32 %v669, %v670
        %1123 = vadd.xlane.f32.xlu0 %v1122
        %v1124 = vpop.xlane.xlu0 %1123
        %v1125 = vadd.f32 %v671, %v672
        %1126 = vadd.xlane.f32.xlu0 %v1125
        %v1127 = vpop.xlane.xlu0 %1126
        %v1128 = vadd.f32 %v673, %v674
        %1129 = vadd.xlane.f32.xlu0 %v1128
        %v1130 = vpop.xlane.xlu0 %1129
        %v1131 = vadd.f32 %v675, %v676
        %1132 = vadd.xlane.f32.xlu0 %v1131
        %v1133 = vpop.xlane.xlu0 %1132
        %v1134 = vadd.f32 %v677, %v678
        %1135 = vadd.xlane.f32.xlu0 %v1134
        %v1136 = vpop.xlane.xlu0 %1135
        %v1137 = vadd.f32 %v679, %v680
        %1138 = vadd.xlane.f32.xlu0 %v1137
        %v1139 = vpop.xlane.xlu0 %1138
        %v1140 = vmul.f32 %v1046, %v731
        %v1141 = vmul.f32 %v1049, %v731
        %v1142 = vmul.f32 %v1052, %v731
        %v1143 = vmul.f32 %v1055, %v731
        %v1144 = vmul.f32 %v1058, %v731
        %v1145 = vmul.f32 %v1061, %v731
        %v1146 = vmul.f32 %v1064, %v731
        %v1147 = vmul.f32 %v1067, %v731
        %v1148 = vmul.f32 %v1070, %v731
        %v1149 = vmul.f32 %v1073, %v731
        %v1150 = vmul.f32 %v1076, %v731
        %v1151 = vmul.f32 %v1079, %v731
        %v1152 = vmul.f32 %v1082, %v731
        %v1153 = vmul.f32 %v1085, %v731
        %v1154 = vmul.f32 %v1088, %v731
        %v1155 = vmul.f32 %v1091, %v731
        %v1156 = vmul.f32 %v1094, %v731
        %v1157 = vmul.f32 %v1097, %v731
        %v1158 = vmul.f32 %v1100, %v731
        %v1159 = vmul.f32 %v1103, %v731
        %v1160 = vmul.f32 %v1106, %v731
        %v1161 = vmul.f32 %v1109, %v731
        %v1162 = vmul.f32 %v1112, %v731
        %v1163 = vmul.f32 %v1115, %v731
        %v1164 = vmul.f32 %v1118, %v731
        %v1165 = vmul.f32 %v1121, %v731
        %v1166 = vmul.f32 %v1124, %v731
        %v1167 = vmul.f32 %v1127, %v731
        %v1168 = vmul.f32 %v1130, %v731
        %v1169 = vmul.f32 %v1133, %v731
        %v1170 = vmul.f32 %v1136, %v731
        %v1171 = vmul.f32 %v1139, %v731
        %v1172 = vsub.f32 %v617, %v1140
        %v1173 = vsub.f32 %v618, %v1140
        %v1174 = vsub.f32 %v619, %v1141
        %v1175 = vsub.f32 %v620, %v1141
        %v1176 = vsub.f32 %v621, %v1142
        %v1177 = vsub.f32 %v622, %v1142
        %v1178 = vsub.f32 %v623, %v1143
        %v1179 = vsub.f32 %v624, %v1143
        %v1180 = vsub.f32 %v625, %v1144
        %v1181 = vsub.f32 %v626, %v1144
        %v1182 = vsub.f32 %v627, %v1145
        %v1183 = vsub.f32 %v628, %v1145
        %v1184 = vsub.f32 %v629, %v1146
        %v1185 = vsub.f32 %v630, %v1146
        %v1186 = vsub.f32 %v631, %v1147
        %v1187 = vsub.f32 %v632, %v1147
        %v1188 = vsub.f32 %v633, %v1148
        %v1189 = vsub.f32 %v634, %v1148
        %v1190 = vsub.f32 %v635, %v1149
        %v1191 = vsub.f32 %v636, %v1149
        %v1192 = vsub.f32 %v637, %v1150
        %v1193 = vsub.f32 %v638, %v1150
        %v1194 = vsub.f32 %v639, %v1151
        %v1195 = vsub.f32 %v640, %v1151
        %v1196 = vsub.f32 %v641, %v1152
        %v1197 = vsub.f32 %v642, %v1152
        %v1198 = vsub.f32 %v643, %v1153
        %v1199 = vsub.f32 %v644, %v1153
        %v1200 = vsub.f32 %v645, %v1154
        %v1201 = vsub.f32 %v646, %v1154
        %v1202 = vsub.f32 %v647, %v1155
        %v1203 = vsub.f32 %v648, %v1155
        %v1204 = vsub.f32 %v649, %v1156
        %v1205 = vsub.f32 %v650, %v1156
        %v1206 = vsub.f32 %v651, %v1157
        %v1207 = vsub.f32 %v652, %v1157
        %v1208 = vsub.f32 %v653, %v1158
        %v1209 = vsub.f32 %v654, %v1158
        %v1210 = vsub.f32 %v655, %v1159
        %v1211 = vsub.f32 %v656, %v1159
        %v1212 = vsub.f32 %v657, %v1160
        %v1213 = vsub.f32 %v658, %v1160
        %v1214 = vsub.f32 %v659, %v1161
        %v1215 = vsub.f32 %v660, %v1161
        %v1216 = vsub.f32 %v661, %v1162
        %v1217 = vsub.f32 %v662, %v1162
        %v1218 = vsub.f32 %v663, %v1163
        %v1219 = vsub.f32 %v664, %v1163
        %v1220 = vsub.f32 %v665, %v1164
        %v1221 = vsub.f32 %v666, %v1164
        %v1222 = vsub.f32 %v667, %v1165
        %v1223 = vsub.f32 %v668, %v1165
        %v1224 = vsub.f32 %v669, %v1166
        %v1225 = vsub.f32 %v670, %v1166
        %v1226 = vsub.f32 %v671, %v1167
        %v1227 = vsub.f32 %v672, %v1167
        %v1228 = vsub.f32 %v673, %v1168
        %v1229 = vsub.f32 %v674, %v1168
        %v1230 = vsub.f32 %v675, %v1169
        %v1231 = vsub.f32 %v676, %v1169
        %v1232 = vsub.f32 %v677, %v1170
        %v1233 = vsub.f32 %v678, %v1170
        %v1234 = vsub.f32 %v679, %v1171
        %v1235 = vsub.f32 %v680, %v1171
        %v1236 = vmul.f32 %v1172, %v1172
        %v1237 = vmul.f32 %v1173, %v1173
        %v1238 = vmul.f32 %v1174, %v1174
        %v1239 = vmul.f32 %v1175, %v1175
        %v1240 = vmul.f32 %v1176, %v1176
        %v1241 = vmul.f32 %v1177, %v1177
        %v1242 = vmul.f32 %v1178, %v1178
        %v1243 = vmul.f32 %v1179, %v1179
        %v1244 = vmul.f32 %v1180, %v1180
        %v1245 = vmul.f32 %v1181, %v1181
        %v1246 = vmul.f32 %v1182, %v1182
        %v1247 = vmul.f32 %v1183, %v1183
        %v1248 = vmul.f32 %v1184, %v1184
        %v1249 = vmul.f32 %v1185, %v1185
        %v1250 = vmul.f32 %v1186, %v1186
        %v1251 = vmul.f32 %v1187, %v1187
        %v1252 = vmul.f32 %v1188, %v1188
        %v1253 = vmul.f32 %v1189, %v1189
        %v1254 = vmul.f32 %v1190, %v1190
        %v1255 = vmul.f32 %v1191, %v1191
        %v1256 = vmul.f32 %v1192, %v1192
        %v1257 = vmul.f32 %v1193, %v1193
        %v1258 = vmul.f32 %v1194, %v1194
        %v1259 = vmul.f32 %v1195, %v1195
        %v1260 = vmul.f32 %v1196, %v1196
        %v1261 = vmul.f32 %v1197, %v1197
        %v1262 = vmul.f32 %v1198, %v1198
        %v1263 = vmul.f32 %v1199, %v1199
        %v1264 = vmul.f32 %v1200, %v1200
        %v1265 = vmul.f32 %v1201, %v1201
        %v1266 = vmul.f32 %v1202, %v1202
        %v1267 = vmul.f32 %v1203, %v1203
        %v1268 = vmul.f32 %v1204, %v1204
        %v1269 = vmul.f32 %v1205, %v1205
        %v1270 = vmul.f32 %v1206, %v1206
        %v1271 = vmul.f32 %v1207, %v1207
        %v1272 = vmul.f32 %v1208, %v1208
        %v1273 = vmul.f32 %v1209, %v1209
        %v1274 = vmul.f32 %v1210, %v1210
        %v1275 = vmul.f32 %v1211, %v1211
        %v1276 = vmul.f32 %v1212, %v1212
        %v1277 = vmul.f32 %v1213, %v1213
        %v1278 = vmul.f32 %v1214, %v1214
        %v1279 = vmul.f32 %v1215, %v1215
        %v1280 = vmul.f32 %v1216, %v1216
        %v1281 = vmul.f32 %v1217, %v1217
        %v1282 = vmul.f32 %v1218, %v1218
        %v1283 = vmul.f32 %v1219, %v1219
        %v1284 = vmul.f32 %v1220, %v1220
        %v1285 = vmul.f32 %v1221, %v1221
        %v1286 = vmul.f32 %v1222, %v1222
        %v1287 = vmul.f32 %v1223, %v1223
        %v1288 = vmul.f32 %v1224, %v1224
        %v1289 = vmul.f32 %v1225, %v1225
        %v1290 = vmul.f32 %v1226, %v1226
        %v1291 = vmul.f32 %v1227, %v1227
        %v1292 = vmul.f32 %v1228, %v1228
        %v1293 = vmul.f32 %v1229, %v1229
        %v1294 = vmul.f32 %v1230, %v1230
        %v1295 = vmul.f32 %v1231, %v1231
        %v1296 = vmul.f32 %v1232, %v1232
        %v1297 = vmul.f32 %v1233, %v1233
        %v1298 = vmul.f32 %v1234, %v1234
        %v1299 = vmul.f32 %v1235, %v1235
        %v1300 = vadd.f32 %v1236, %v1237
        %1301 = vadd.xlane.f32.xlu0 %v1300
        %v1302 = vpop.xlane.xlu0 %1301
        %v1303 = vadd.f32 %v1238, %v1239
        %1304 = vadd.xlane.f32.xlu0 %v1303
        %v1305 = vpop.xlane.xlu0 %1304
        %v1306 = vadd.f32 %v1240, %v1241
        %1307 = vadd.xlane.f32.xlu0 %v1306
        %v1308 = vpop.xlane.xlu0 %1307
        %v1309 = vadd.f32 %v1242, %v1243
        %1310 = vadd.xlane.f32.xlu0 %v1309
        %v1311 = vpop.xlane.xlu0 %1310
        %v1312 = vadd.f32 %v1244, %v1245
        %1313 = vadd.xlane.f32.xlu0 %v1312
        %v1314 = vpop.xlane.xlu0 %1313
        %v1315 = vadd.f32 %v1246, %v1247
        %1316 = vadd.xlane.f32.xlu0 %v1315
        %v1317 = vpop.xlane.xlu0 %1316
        %v1318 = vadd.f32 %v1248, %v1249
        %1319 = vadd.xlane.f32.xlu0 %v1318
        %v1320 = vpop.xlane.xlu0 %1319
        %v1321 = vadd.f32 %v1250, %v1251
        %1322 = vadd.xlane.f32.xlu0 %v1321
        %v1323 = vpop.xlane.xlu0 %1322
        %v1324 = vadd.f32 %v1252, %v1253
        %1325 = vadd.xlane.f32.xlu0 %v1324
        %v1326 = vpop.xlane.xlu0 %1325
        %v1327 = vadd.f32 %v1254, %v1255
        %1328 = vadd.xlane.f32.xlu0 %v1327
        %v1329 = vpop.xlane.xlu0 %1328
        %v1330 = vadd.f32 %v1256, %v1257
        %1331 = vadd.xlane.f32.xlu0 %v1330
        %v1332 = vpop.xlane.xlu0 %1331
        %v1333 = vadd.f32 %v1258, %v1259
        %1334 = vadd.xlane.f32.xlu0 %v1333
        %v1335 = vpop.xlane.xlu0 %1334
        %v1336 = vadd.f32 %v1260, %v1261
        %1337 = vadd.xlane.f32.xlu0 %v1336
        %v1338 = vpop.xlane.xlu0 %1337
        %v1339 = vadd.f32 %v1262, %v1263
        %1340 = vadd.xlane.f32.xlu0 %v1339
        %v1341 = vpop.xlane.xlu0 %1340
        %v1342 = vadd.f32 %v1264, %v1265
        %1343 = vadd.xlane.f32.xlu0 %v1342
        %v1344 = vpop.xlane.xlu0 %1343
        %v1345 = vadd.f32 %v1266, %v1267
        %1346 = vadd.xlane.f32.xlu0 %v1345
        %v1347 = vpop.xlane.xlu0 %1346
        %v1348 = vadd.f32 %v1268, %v1269
        %1349 = vadd.xlane.f32.xlu0 %v1348
        %v1350 = vpop.xlane.xlu0 %1349
        %v1351 = vadd.f32 %v1270, %v1271
        %1352 = vadd.xlane.f32.xlu0 %v1351
        %v1353 = vpop.xlane.xlu0 %1352
        %v1354 = vadd.f32 %v1272, %v1273
        %1355 = vadd.xlane.f32.xlu0 %v1354
        %v1356 = vpop.xlane.xlu0 %1355
        %v1357 = vadd.f32 %v1274, %v1275
        %1358 = vadd.xlane.f32.xlu0 %v1357
        %v1359 = vpop.xlane.xlu0 %1358
        %v1360 = vadd.f32 %v1276, %v1277
        %1361 = vadd.xlane.f32.xlu0 %v1360
        %v1362 = vpop.xlane.xlu0 %1361
        %v1363 = vadd.f32 %v1278, %v1279
        %1364 = vadd.xlane.f32.xlu0 %v1363
        %v1365 = vpop.xlane.xlu0 %1364
        %v1366 = vadd.f32 %v1280, %v1281
        %1367 = vadd.xlane.f32.xlu0 %v1366
        %v1368 = vpop.xlane.xlu0 %1367
        %v1369 = vadd.f32 %v1282, %v1283
        %1370 = vadd.xlane.f32.xlu0 %v1369
        %v1371 = vpop.xlane.xlu0 %1370
        %v1372 = vadd.f32 %v1284, %v1285
        %1373 = vadd.xlane.f32.xlu0 %v1372
        %v1374 = vpop.xlane.xlu0 %1373
        %v1375 = vadd.f32 %v1286, %v1287
        %1376 = vadd.xlane.f32.xlu0 %v1375
        %v1377 = vpop.xlane.xlu0 %1376
        %v1378 = vadd.f32 %v1288, %v1289
        %1379 = vadd.xlane.f32.xlu0 %v1378
        %v1380 = vpop.xlane.xlu0 %1379
        %v1381 = vadd.f32 %v1290, %v1291
        %1382 = vadd.xlane.f32.xlu0 %v1381
        %v1383 = vpop.xlane.xlu0 %1382
        %v1384 = vadd.f32 %v1292, %v1293
        %1385 = vadd.xlane.f32.xlu0 %v1384
        %v1386 = vpop.xlane.xlu0 %1385
        %v1387 = vadd.f32 %v1294, %v1295
        %1388 = vadd.xlane.f32.xlu0 %v1387
        %v1389 = vpop.xlane.xlu0 %1388
        %v1390 = vadd.f32 %v1296, %v1297
        %1391 = vadd.xlane.f32.xlu0 %v1390
        %v1392 = vpop.xlane.xlu0 %1391
        %v1393 = vadd.f32 %v1298, %v1299
        %1394 = vadd.xlane.f32.xlu0 %v1393
        %v1395 = vpop.xlane.xlu0 %1394
        %v1396 = vmul.f32 %v1302, %v731
        %v1397 = vmul.f32 %v1305, %v731
        %v1398 = vmul.f32 %v1308, %v731
        %v1399 = vmul.f32 %v1311, %v731
        %v1400 = vmul.f32 %v1314, %v731
        %v1401 = vmul.f32 %v1317, %v731
        %v1402 = vmul.f32 %v1320, %v731
        %v1403 = vmul.f32 %v1323, %v731
        %v1404 = vmul.f32 %v1326, %v731
        %v1405 = vmul.f32 %v1329, %v731
        %v1406 = vmul.f32 %v1332, %v731
        %v1407 = vmul.f32 %v1335, %v731
        %v1408 = vmul.f32 %v1338, %v731
        %v1409 = vmul.f32 %v1341, %v731
        %v1410 = vmul.f32 %v1344, %v731
        %v1411 = vmul.f32 %v1347, %v731
        %v1412 = vmul.f32 %v1350, %v731
        %v1413 = vmul.f32 %v1353, %v731
        %v1414 = vmul.f32 %v1356, %v731
        %v1415 = vmul.f32 %v1359, %v731
        %v1416 = vmul.f32 %v1362, %v731
        %v1417 = vmul.f32 %v1365, %v731
        %v1418 = vmul.f32 %v1368, %v731
        %v1419 = vmul.f32 %v1371, %v731
        %v1420 = vmul.f32 %v1374, %v731
        %v1421 = vmul.f32 %v1377, %v731
        %v1422 = vmul.f32 %v1380, %v731
        %v1423 = vmul.f32 %v1383, %v731
        %v1424 = vmul.f32 %v1386, %v731
        %v1425 = vmul.f32 %v1389, %v731
        %v1426 = vmul.f32 %v1392, %v731
        %v1427 = vmul.f32 %v1395, %v731
        %v1428 = vadd.f32 %v1396, 1e-05
        %v1429 = vadd.f32 %v1397, 1e-05
        %v1430 = vadd.f32 %v1398, 1e-05
        %v1431 = vadd.f32 %v1399, 1e-05
        %v1432 = vadd.f32 %v1400, 1e-05
        %v1433 = vadd.f32 %v1401, 1e-05
        %v1434 = vadd.f32 %v1402, 1e-05
        %v1435 = vadd.f32 %v1403, 1e-05
        %v1436 = vadd.f32 %v1404, 1e-05
        %v1437 = vadd.f32 %v1405, 1e-05
        %v1438 = vadd.f32 %v1406, 1e-05
        %v1439 = vadd.f32 %v1407, 1e-05
        %v1440 = vadd.f32 %v1408, 1e-05
        %v1441 = vadd.f32 %v1409, 1e-05
        %v1442 = vadd.f32 %v1410, 1e-05
        %v1443 = vadd.f32 %v1411, 1e-05
        %v1444 = vadd.f32 %v1412, 1e-05
        %v1445 = vadd.f32 %v1413, 1e-05
        %v1446 = vadd.f32 %v1414, 1e-05
        %v1447 = vadd.f32 %v1415, 1e-05
        %v1448 = vadd.f32 %v1416, 1e-05
        %v1449 = vadd.f32 %v1417, 1e-05
        %v1450 = vadd.f32 %v1418, 1e-05
        %v1451 = vadd.f32 %v1419, 1e-05
        %v1452 = vadd.f32 %v1420, 1e-05
        %v1453 = vadd.f32 %v1421, 1e-05
        %v1454 = vadd.f32 %v1422, 1e-05
        %v1455 = vadd.f32 %v1423, 1e-05
        %v1456 = vadd.f32 %v1424, 1e-05
        %v1457 = vadd.f32 %v1425, 1e-05
        %v1458 = vadd.f32 %v1426, 1e-05
        %v1459 = vadd.f32 %v1427, 1e-05
        %v1460 = vrsqrt.pop %v1428
        %v1461 = vrsqrt.pop %v1429
        %v1462 = vrsqrt.pop %v1430
        %v1463 = vrsqrt.pop %v1431
        %v1464 = vrsqrt.pop %v1432
        %v1465 = vrsqrt.pop %v1433
        %v1466 = vrsqrt.pop %v1434
        %v1467 = vrsqrt.pop %v1435
        %v1468 = vrsqrt.pop %v1436
        %v1469 = vrsqrt.pop %v1437
        %v1470 = vrsqrt.pop %v1438
        %v1471 = vrsqrt.pop %v1439
        %v1472 = vrsqrt.pop %v1440
        %v1473 = vrsqrt.pop %v1441
        %v1474 = vrsqrt.pop %v1442
        %v1475 = vrsqrt.pop %v1443
        %v1476 = vrsqrt.pop %v1444
        %v1477 = vrsqrt.pop %v1445
        %v1478 = vrsqrt.pop %v1446
        %v1479 = vrsqrt.pop %v1447
        %v1480 = vrsqrt.pop %v1448
        %v1481 = vrsqrt.pop %v1449
        %v1482 = vrsqrt.pop %v1450
        %v1483 = vrsqrt.pop %v1451
        %v1484 = vrsqrt.pop %v1452
        %v1485 = vrsqrt.pop %v1453
        %v1486 = vrsqrt.pop %v1454
        %v1487 = vrsqrt.pop %v1455
        %v1488 = vrsqrt.pop %v1456
        %v1489 = vrsqrt.pop %v1457
        %v1490 = vrsqrt.pop %v1458
        %v1491 = vrsqrt.pop %v1459
        %v1492 = vmul.f32 %v1172, %v1460
        %v1493 = vmul.f32 %v1173, %v1460
        %v1494 = vmul.f32 %v1174, %v1461
        %v1495 = vmul.f32 %v1175, %v1461
        %v1496 = vmul.f32 %v1176, %v1462
        %v1497 = vmul.f32 %v1177, %v1462
        %v1498 = vmul.f32 %v1178, %v1463
        %v1499 = vmul.f32 %v1179, %v1463
        %v1500 = vmul.f32 %v1180, %v1464
        %v1501 = vmul.f32 %v1181, %v1464
        %v1502 = vmul.f32 %v1182, %v1465
        %v1503 = vmul.f32 %v1183, %v1465
        %v1504 = vmul.f32 %v1184, %v1466
        %v1505 = vmul.f32 %v1185, %v1466
        %v1506 = vmul.f32 %v1186, %v1467
        %v1507 = vmul.f32 %v1187, %v1467
        %v1508 = vmul.f32 %v1188, %v1468
        %v1509 = vmul.f32 %v1189, %v1468
        %v1510 = vmul.f32 %v1190, %v1469
        %v1511 = vmul.f32 %v1191, %v1469
        %v1512 = vmul.f32 %v1192, %v1470
        %v1513 = vmul.f32 %v1193, %v1470
        %v1514 = vmul.f32 %v1194, %v1471
        %v1515 = vmul.f32 %v1195, %v1471
        %v1516 = vmul.f32 %v1196, %v1472
        %v1517 = vmul.f32 %v1197, %v1472
        %v1518 = vmul.f32 %v1198, %v1473
        %v1519 = vmul.f32 %v1199, %v1473
        %v1520 = vmul.f32 %v1200, %v1474
        %v1521 = vmul.f32 %v1201, %v1474
        %v1522 = vmul.f32 %v1202, %v1475
        %v1523 = vmul.f32 %v1203, %v1475
        %v1524 = vmul.f32 %v1204, %v1476
        %v1525 = vmul.f32 %v1205, %v1476
        %v1526 = vmul.f32 %v1206, %v1477
        %v1527 = vmul.f32 %v1207, %v1477
        %v1528 = vmul.f32 %v1208, %v1478
        %v1529 = vmul.f32 %v1209, %v1478
        %v1530 = vmul.f32 %v1210, %v1479
        %v1531 = vmul.f32 %v1211, %v1479
        %v1532 = vmul.f32 %v1212, %v1480
        %v1533 = vmul.f32 %v1213, %v1480
        %v1534 = vmul.f32 %v1214, %v1481
        %v1535 = vmul.f32 %v1215, %v1481
        %v1536 = vmul.f32 %v1216, %v1482
        %v1537 = vmul.f32 %v1217, %v1482
        %v1538 = vmul.f32 %v1218, %v1483
        %v1539 = vmul.f32 %v1219, %v1483
        %v1540 = vmul.f32 %v1220, %v1484
        %v1541 = vmul.f32 %v1221, %v1484
        %v1542 = vmul.f32 %v1222, %v1485
        %v1543 = vmul.f32 %v1223, %v1485
        %v1544 = vmul.f32 %v1224, %v1486
        %v1545 = vmul.f32 %v1225, %v1486
        %v1546 = vmul.f32 %v1226, %v1487
        %v1547 = vmul.f32 %v1227, %v1487
        %v1548 = vmul.f32 %v1228, %v1488
        %v1549 = vmul.f32 %v1229, %v1488
        %v1550 = vmul.f32 %v1230, %v1489
        %v1551 = vmul.f32 %v1231, %v1489
        %v1552 = vmul.f32 %v1232, %v1490
        %v1553 = vmul.f32 %v1233, %v1490
        %v1554 = vmul.f32 %v1234, %v1491
        %v1555 = vmul.f32 %v1235, %v1491
        %v1557 = vlaneseq
        %v1558 = vshrl.u32 %v1557, 7
        %v1559 = vsub.s32 0, %v1558
        %v1560 = vrot.slane %v1042, %v1559
        %v1561 = vlaneseq
        %v1562 = vshrl.u32 %v1561, 7
        %v1563 = vsub.s32 1, %v1562
        %v1564 = vrot.slane %v1042, %v1563
        %v1567 = vmul.f32 %v1492, %v1560
        %v1568 = vmul.f32 %v1493, %v1564
        %v1569 = vmul.f32 %v1494, %v1560
        %v1570 = vmul.f32 %v1495, %v1564
        %v1571 = vmul.f32 %v1496, %v1560
        %v1572 = vmul.f32 %v1497, %v1564
        %v1573 = vmul.f32 %v1498, %v1560
        %v1574 = vmul.f32 %v1499, %v1564
        %v1575 = vmul.f32 %v1500, %v1560
        %v1576 = vmul.f32 %v1501, %v1564
        %v1577 = vmul.f32 %v1502, %v1560
        %v1578 = vmul.f32 %v1503, %v1564
        %v1579 = vmul.f32 %v1504, %v1560
        %v1580 = vmul.f32 %v1505, %v1564
        %v1581 = vmul.f32 %v1506, %v1560
        %v1582 = vmul.f32 %v1507, %v1564
        %v1583 = vmul.f32 %v1508, %v1560
        %v1584 = vmul.f32 %v1509, %v1564
        %v1585 = vmul.f32 %v1510, %v1560
        %v1586 = vmul.f32 %v1511, %v1564
        %v1587 = vmul.f32 %v1512, %v1560
        %v1588 = vmul.f32 %v1513, %v1564
        %v1589 = vmul.f32 %v1514, %v1560
        %v1590 = vmul.f32 %v1515, %v1564
        %v1591 = vmul.f32 %v1516, %v1560
        %v1592 = vmul.f32 %v1517, %v1564
        %v1593 = vmul.f32 %v1518, %v1560
        %v1594 = vmul.f32 %v1519, %v1564
        %v1595 = vmul.f32 %v1520, %v1560
        %v1596 = vmul.f32 %v1521, %v1564
        %v1597 = vmul.f32 %v1522, %v1560
        %v1598 = vmul.f32 %v1523, %v1564
        %v1599 = vmul.f32 %v1524, %v1560
        %v1600 = vmul.f32 %v1525, %v1564
        %v1601 = vmul.f32 %v1526, %v1560
        %v1602 = vmul.f32 %v1527, %v1564
        %v1603 = vmul.f32 %v1528, %v1560
        %v1604 = vmul.f32 %v1529, %v1564
        %v1605 = vmul.f32 %v1530, %v1560
        %v1606 = vmul.f32 %v1531, %v1564
        %v1607 = vmul.f32 %v1532, %v1560
        %v1608 = vmul.f32 %v1533, %v1564
        %v1609 = vmul.f32 %v1534, %v1560
        %v1610 = vmul.f32 %v1535, %v1564
        %v1611 = vmul.f32 %v1536, %v1560
        %v1612 = vmul.f32 %v1537, %v1564
        %v1613 = vmul.f32 %v1538, %v1560
        %v1614 = vmul.f32 %v1539, %v1564
        %v1615 = vmul.f32 %v1540, %v1560
        %v1616 = vmul.f32 %v1541, %v1564
        %v1617 = vmul.f32 %v1542, %v1560
        %v1618 = vmul.f32 %v1543, %v1564
        %v1619 = vmul.f32 %v1544, %v1560
        %v1620 = vmul.f32 %v1545, %v1564
        %v1621 = vmul.f32 %v1546, %v1560
        %v1622 = vmul.f32 %v1547, %v1564
        %v1623 = vmul.f32 %v1548, %v1560
        %v1624 = vmul.f32 %v1549, %v1564
        %v1625 = vmul.f32 %v1550, %v1560
        %v1626 = vmul.f32 %v1551, %v1564
        %v1627 = vmul.f32 %v1552, %v1560
        %v1628 = vmul.f32 %v1553, %v1564
        %v1629 = vmul.f32 %v1554, %v1560
        %v1630 = vmul.f32 %v1555, %v1564
        %v1632 = vlaneseq
        %v1633 = vshrl.u32 %v1632, 7
        %v1634 = vsub.s32 0, %v1633
        %v1635 = vrot.slane %v1043, %v1634
        %v1636 = vlaneseq
        %v1637 = vshrl.u32 %v1636, 7
        %v1638 = vsub.s32 1, %v1637
        %v1639 = vrot.slane %v1043, %v1638
        %v1642 = vadd.f32 %v1567, %v1635
        %v1643 = vadd.f32 %v1568, %v1639
        %v1644 = vadd.f32 %v1569, %v1635
        %v1645 = vadd.f32 %v1570, %v1639
        %v1646 = vadd.f32 %v1571, %v1635
        %v1647 = vadd.f32 %v1572, %v1639
        %v1648 = vadd.f32 %v1573, %v1635
        %v1649 = vadd.f32 %v1574, %v1639
        %v1650 = vadd.f32 %v1575, %v1635
        %v1651 = vadd.f32 %v1576, %v1639
        %v1652 = vadd.f32 %v1577, %v1635
        %v1653 = vadd.f32 %v1578, %v1639
        %v1654 = vadd.f32 %v1579, %v1635
        %v1655 = vadd.f32 %v1580, %v1639
        %v1656 = vadd.f32 %v1581, %v1635
        %v1657 = vadd.f32 %v1582, %v1639
        %v1658 = vadd.f32 %v1583, %v1635
        %v1659 = vadd.f32 %v1584, %v1639
        %v1660 = vadd.f32 %v1585, %v1635
        %v1661 = vadd.f32 %v1586, %v1639
        %v1662 = vadd.f32 %v1587, %v1635
        %v1663 = vadd.f32 %v1588, %v1639
        %v1664 = vadd.f32 %v1589, %v1635
        %v1665 = vadd.f32 %v1590, %v1639
        %v1666 = vadd.f32 %v1591, %v1635
        %v1667 = vadd.f32 %v1592, %v1639
        %v1668 = vadd.f32 %v1593, %v1635
        %v1669 = vadd.f32 %v1594, %v1639
        %v1670 = vadd.f32 %v1595, %v1635
        %v1671 = vadd.f32 %v1596, %v1639
        %v1672 = vadd.f32 %v1597, %v1635
        %v1673 = vadd.f32 %v1598, %v1639
        %v1674 = vadd.f32 %v1599, %v1635
        %v1675 = vadd.f32 %v1600, %v1639
        %v1676 = vadd.f32 %v1601, %v1635
        %v1677 = vadd.f32 %v1602, %v1639
        %v1678 = vadd.f32 %v1603, %v1635
        %v1679 = vadd.f32 %v1604, %v1639
        %v1680 = vadd.f32 %v1605, %v1635
        %v1681 = vadd.f32 %v1606, %v1639
        %v1682 = vadd.f32 %v1607, %v1635
        %v1683 = vadd.f32 %v1608, %v1639
        %v1684 = vadd.f32 %v1609, %v1635
        %v1685 = vadd.f32 %v1610, %v1639
        %v1686 = vadd.f32 %v1611, %v1635
        %v1687 = vadd.f32 %v1612, %v1639
        %v1688 = vadd.f32 %v1613, %v1635
        %v1689 = vadd.f32 %v1614, %v1639
        %v1690 = vadd.f32 %v1615, %v1635
        %v1691 = vadd.f32 %v1616, %v1639
        %v1692 = vadd.f32 %v1617, %v1635
        %v1693 = vadd.f32 %v1618, %v1639
        %v1694 = vadd.f32 %v1619, %v1635
        %v1695 = vadd.f32 %v1620, %v1639
        %v1696 = vadd.f32 %v1621, %v1635
        %v1697 = vadd.f32 %v1622, %v1639
        %v1698 = vadd.f32 %v1623, %v1635
        %v1699 = vadd.f32 %v1624, %v1639
        %v1700 = vadd.f32 %v1625, %v1635
        %v1701 = vadd.f32 %v1626, %v1639
        %v1702 = vadd.f32 %v1627, %v1635
        %v1703 = vadd.f32 %v1628, %v1639
        %v1704 = vadd.f32 %v1629, %v1635
        %v1705 = vadd.f32 %v1630, %v1639
        %v1706 = vpack.c.bf16 %v1644, %v1642
        %v1707 = vpack.c.bf16 %v1645, %v1643
        %v1708 = vpack.c.bf16 %v1648, %v1646
        %v1709 = vpack.c.bf16 %v1649, %v1647
        %v1710 = vpack.c.bf16 %v1652, %v1650
        %v1711 = vpack.c.bf16 %v1653, %v1651
        %v1712 = vpack.c.bf16 %v1656, %v1654
        %v1713 = vpack.c.bf16 %v1657, %v1655
        %v1714 = vpack.c.bf16 %v1660, %v1658
        %v1715 = vpack.c.bf16 %v1661, %v1659
        %v1716 = vpack.c.bf16 %v1664, %v1662
        %v1717 = vpack.c.bf16 %v1665, %v1663
        %v1718 = vpack.c.bf16 %v1668, %v1666
        %v1719 = vpack.c.bf16 %v1669, %v1667
        %v1720 = vpack.c.bf16 %v1672, %v1670
        %v1721 = vpack.c.bf16 %v1673, %v1671
        %v1722 = vpack.c.bf16 %v1676, %v1674
        %v1723 = vpack.c.bf16 %v1677, %v1675
        %v1724 = vpack.c.bf16 %v1680, %v1678
        %v1725 = vpack.c.bf16 %v1681, %v1679
        %v1726 = vpack.c.bf16 %v1684, %v1682
        %v1727 = vpack.c.bf16 %v1685, %v1683
        %v1728 = vpack.c.bf16 %v1688, %v1686
        %v1729 = vpack.c.bf16 %v1689, %v1687
        %v1730 = vpack.c.bf16 %v1692, %v1690
        %v1731 = vpack.c.bf16 %v1693, %v1691
        %v1732 = vpack.c.bf16 %v1696, %v1694
        %v1733 = vpack.c.bf16 %v1697, %v1695
        %v1734 = vpack.c.bf16 %v1700, %v1698
        %v1735 = vpack.c.bf16 %v1701, %v1699
        %v1736 = vpack.c.bf16 %v1704, %v1702
        %v1737 = vpack.c.bf16 %v1705, %v1703
        %v1738 = vld [vmem:[#allocation7] sm:$0xff]
        %v1739 = vld [vmem:[#allocation7 + $0x8] sm:$0xff]
        %v1740 = vld [vmem:[#allocation7 + $0x10] sm:$0xff]
        %v1741 = vld [vmem:[#allocation7 + $0x18] sm:$0xff]
        %v1742 = vld [vmem:[#allocation7 + $0x20] sm:$0xff]
        %v1743 = vld [vmem:[#allocation7 + $0x28] sm:$0xff]
        %v1744 = vld [vmem:[#allocation7 + $0x30] sm:$0xff]
        %v1745 = vld [vmem:[#allocation7 + $0x38] sm:$0xff]
        %v1746 = vld [vmem:[#allocation7 + $0x40] sm:$0xff]
        %v1747 = vld [vmem:[#allocation7 + $0x48] sm:$0xff]
        %v1748 = vld [vmem:[#allocation7 + $0x50] sm:$0xff]
        %v1749 = vld [vmem:[#allocation7 + $0x58] sm:$0xff]
        %v1750 = vld [vmem:[#allocation7 + $0x60] sm:$0xff]
        %v1751 = vld [vmem:[#allocation7 + $0x68] sm:$0xff]
        %v1752 = vld [vmem:[#allocation7 + $0x70] sm:$0xff]
        %v1753 = vld [vmem:[#allocation7 + $0x78] sm:$0xff]
        %v1754 = vld [vmem:[#allocation7 + $0x80] sm:$0xff]
        %v1755 = vld [vmem:[#allocation7 + $0x88] sm:$0xff]
        %v1756 = vld [vmem:[#allocation7 + $0x90] sm:$0xff]
        %v1757 = vld [vmem:[#allocation7 + $0x98] sm:$0xff]
        %v1758 = vld [vmem:[#allocation7 + $0xa0] sm:$0xff]
        %v1759 = vld [vmem:[#allocation7 + $0xa8] sm:$0xff]
        %v1760 = vld [vmem:[#allocation7 + $0xb0] sm:$0xff]
        %v1761 = vld [vmem:[#allocation7 + $0xb8] sm:$0xff]
        %v1762 = vld [vmem:[#allocation7 + $0xc0] sm:$0xff]
        %v1763 = vld [vmem:[#allocation7 + $0xc8] sm:$0xff]
        %v1764 = vld [vmem:[#allocation7 + $0xd0] sm:$0xff]
        %v1765 = vld [vmem:[#allocation7 + $0xd8] sm:$0xff]
        %v1766 = vld [vmem:[#allocation7 + $0xe0] sm:$0xff]
        %v1767 = vld [vmem:[#allocation7 + $0xe8] sm:$0xff]
        %v1768 = vld [vmem:[#allocation7 + $0xf0] sm:$0xff]
        %v1769 = vld [vmem:[#allocation7 + $0xf8] sm:$0xff]
        %v1770 = vld [vmem:[%s7] sm:$0x3]
        %v1772 = vlaneseq
        %v1773 = vshrl.u32 %v1772, 7
        %v1774 = vsub.s32 0, %v1773
        %v1775 = vrot.slane %v1770, %v1774
        %v1776 = vlaneseq
        %v1777 = vshrl.u32 %v1776, 7
        %v1778 = vsub.s32 1, %v1777
        %v1779 = vrot.slane %v1770, %v1778
        %v1814 = vunpack.c.l.b16 %v1738
        %v1815 = vunpack.c.h.b16 %v1738
        %v1816 = vunpack.c.l.b16 %v1739
        %v1817 = vunpack.c.h.b16 %v1739
        %v1818 = vunpack.c.l.b16 %v1740
        %v1819 = vunpack.c.h.b16 %v1740
        %v1820 = vunpack.c.l.b16 %v1741
        %v1821 = vunpack.c.h.b16 %v1741
        %v1822 = vunpack.c.l.b16 %v1742
        %v1823 = vunpack.c.h.b16 %v1742
        %v1824 = vunpack.c.l.b16 %v1743
        %v1825 = vunpack.c.h.b16 %v1743
        %v1826 = vunpack.c.l.b16 %v1744
        %v1827 = vunpack.c.h.b16 %v1744
        %v1828 = vunpack.c.l.b16 %v1745
        %v1829 = vunpack.c.h.b16 %v1745
        %v1830 = vunpack.c.l.b16 %v1746
        %v1831 = vunpack.c.h.b16 %v1746
        %v1832 = vunpack.c.l.b16 %v1747
        %v1833 = vunpack.c.h.b16 %v1747
        %v1834 = vunpack.c.l.b16 %v1748
        %v1835 = vunpack.c.h.b16 %v1748
        %v1836 = vunpack.c.l.b16 %v1749
        %v1837 = vunpack.c.h.b16 %v1749
        %v1838 = vunpack.c.l.b16 %v1750
        %v1839 = vunpack.c.h.b16 %v1750
        %v1840 = vunpack.c.l.b16 %v1751
        %v1841 = vunpack.c.h.b16 %v1751
        %v1842 = vunpack.c.l.b16 %v1752
        %v1843 = vunpack.c.h.b16 %v1752
        %v1844 = vunpack.c.l.b16 %v1753
        %v1845 = vunpack.c.h.b16 %v1753
        %v1846 = vunpack.c.l.b16 %v1754
        %v1847 = vunpack.c.h.b16 %v1754
        %v1848 = vunpack.c.l.b16 %v1755
        %v1849 = vunpack.c.h.b16 %v1755
        %v1850 = vunpack.c.l.b16 %v1756
        %v1851 = vunpack.c.h.b16 %v1756
        %v1852 = vunpack.c.l.b16 %v1757
        %v1853 = vunpack.c.h.b16 %v1757
        %v1854 = vunpack.c.l.b16 %v1758
        %v1855 = vunpack.c.h.b16 %v1758
        %v1856 = vunpack.c.l.b16 %v1759
        %v1857 = vunpack.c.h.b16 %v1759
        %v1858 = vunpack.c.l.b16 %v1760
        %v1859 = vunpack.c.h.b16 %v1760
        %v1860 = vunpack.c.l.b16 %v1761
        %v1861 = vunpack.c.h.b16 %v1761
        %v1862 = vunpack.c.l.b16 %v1762
        %v1863 = vunpack.c.h.b16 %v1762
        %v1864 = vunpack.c.l.b16 %v1763
        %v1865 = vunpack.c.h.b16 %v1763
        %v1866 = vunpack.c.l.b16 %v1764
        %v1867 = vunpack.c.h.b16 %v1764
        %v1868 = vunpack.c.l.b16 %v1765
        %v1869 = vunpack.c.h.b16 %v1765
        %v1870 = vunpack.c.l.b16 %v1766
        %v1871 = vunpack.c.h.b16 %v1766
        %v1872 = vunpack.c.l.b16 %v1767
        %v1873 = vunpack.c.h.b16 %v1767
        %v1874 = vunpack.c.l.b16 %v1768
        %v1875 = vunpack.c.h.b16 %v1768
        %v1876 = vunpack.c.l.b16 %v1769
        %v1877 = vunpack.c.h.b16 %v1769
        %v1878 = vpack.c.b16 %v1816, %v1814
        %v1879 = vpack.c.b16 %v1817, %v1815
        %v1880 = vpack.c.b16 %v1820, %v1818
        %v1881 = vpack.c.b16 %v1821, %v1819
        %v1882 = vpack.c.b16 %v1824, %v1822
        %v1883 = vpack.c.b16 %v1825, %v1823
        %v1884 = vpack.c.b16 %v1828, %v1826
        %v1885 = vpack.c.b16 %v1829, %v1827
        %v1886 = vpack.c.b16 %v1832, %v1830
        %v1887 = vpack.c.b16 %v1833, %v1831
        %v1888 = vpack.c.b16 %v1836, %v1834
        %v1889 = vpack.c.b16 %v1837, %v1835
        %v1890 = vpack.c.b16 %v1840, %v1838
        %v1891 = vpack.c.b16 %v1841, %v1839
        %v1892 = vpack.c.b16 %v1844, %v1842
        %v1893 = vpack.c.b16 %v1845, %v1843
        %v1894 = vpack.c.b16 %v1848, %v1846
        %v1895 = vpack.c.b16 %v1849, %v1847
        %v1896 = vpack.c.b16 %v1852, %v1850
        %v1897 = vpack.c.b16 %v1853, %v1851
        %v1898 = vpack.c.b16 %v1856, %v1854
        %v1899 = vpack.c.b16 %v1857, %v1855
        %v1900 = vpack.c.b16 %v1860, %v1858
        %v1901 = vpack.c.b16 %v1861, %v1859
        %v1902 = vpack.c.b16 %v1864, %v1862
        %v1903 = vpack.c.b16 %v1865, %v1863
        %v1904 = vpack.c.b16 %v1868, %v1866
        %v1905 = vpack.c.b16 %v1869, %v1867
        %v1906 = vpack.c.b16 %v1872, %v1870
        %v1907 = vpack.c.b16 %v1873, %v1871
        %v1908 = vpack.c.b16 %v1876, %v1874
        %v1909 = vpack.c.b16 %v1877, %v1875
        %1942 = vmatprep.subr.bf16.mxu0 %v1879
        %1943 = vmatpush1.bf16.msra.mxu0 %v1878
        %1944 = vmatprep.subr.bf16.mxu0 %v1881
        %1945 = vmatpush1.bf16.msra.mxu0 %v1880
        %1946 = vmatprep.subr.bf16.mxu0 %v1883
        %1947 = vmatpush1.bf16.msra.mxu0 %v1882
        %1948 = vmatprep.subr.bf16.mxu0 %v1885
        %1949 = vmatpush1.bf16.msra.mxu0 %v1884
        %1950 = vmatprep.subr.bf16.mxu0 %v1887
        %1951 = vmatpush1.bf16.msra.mxu0 %v1886
        %1952 = vmatprep.subr.bf16.mxu0 %v1889
        %1953 = vmatpush1.bf16.msra.mxu0 %v1888
        %1954 = vmatprep.subr.bf16.mxu0 %v1891
        %1955 = vmatpush1.bf16.msra.mxu0 %v1890
        %1956 = vmatprep.subr.bf16.mxu0 %v1893
        %1957 = vmatpush1.bf16.msra.mxu0 %v1892
        %1958 = vmatprep.subr.bf16.mxu0 %v1895
        %1959 = vmatpush1.bf16.msra.mxu0 %v1894
        %1960 = vmatprep.subr.bf16.mxu0 %v1897
        %1961 = vmatpush1.bf16.msra.mxu0 %v1896
        %1962 = vmatprep.subr.bf16.mxu0 %v1899
        %1963 = vmatpush1.bf16.msra.mxu0 %v1898
        %1964 = vmatprep.subr.bf16.mxu0 %v1901
        %1965 = vmatpush1.bf16.msra.mxu0 %v1900
        %1966 = vmatprep.subr.bf16.mxu0 %v1903
        %1967 = vmatpush1.bf16.msra.mxu0 %v1902
        %1968 = vmatprep.subr.bf16.mxu0 %v1905
        %1969 = vmatpush1.bf16.msra.mxu0 %v1904
        %1970 = vmatprep.subr.bf16.mxu0 %v1907
        %1971 = vmatpush1.bf16.msra.mxu0 %v1906
        %1972 = vmatprep.subr.bf16.mxu0 %v1909
        %1973 = vmatpush1.bf16.msra.mxu0 %v1908
        %1974 = vmatprep.mubr.bf16.mxu0 %v1027
        %1975 = vmatmul.mubr.bf16.gmra.mrb[0].mxu0 %v1026
        %v1976 = vpop.f32.mrb[0].mxu0
        %v1977 = vadd.f32 %v1775, %v1976
        %v1978 = vpop.f32.mrb[0].mxu0
        %v1979 = vadd.f32 %v1779, %v1978
        %v1980 = vpop.f32.mrb[0].mxu0
        %v1981 = vadd.f32 %v1775, %v1980
        %v1982 = vpop.f32.mrb[0].mxu0
        %v1983 = vadd.f32 %v1779, %v1982
        %1984 = vmatprep.mubr.bf16.mxu0 %v1029
        %1985 = vmatmul.mubr.bf16.gmra.mrb[0].mxu0 %v1028
        %v1986 = vpop.f32.mrb[0].mxu0
        %v1987 = vadd.f32 %v1775, %v1986
        %v1988 = vpop.f32.mrb[0].mxu0
        %v1989 = vadd.f32 %v1779, %v1988
        %v1990 = vpop.f32.mrb[0].mxu0
        %v1991 = vadd.f32 %v1775, %v1990
        %v1992 = vpop.f32.mrb[0].mxu0
        %v1993 = vadd.f32 %v1779, %v1992
        %1994 = vmatprep.mubr.bf16.mxu0 %v1031
        %1995 = vmatmul.mubr.bf16.gmra.mrb[0].mxu0 %v1030
        %v1996 = vpop.f32.mrb[0].mxu0
        %v1997 = vadd.f32 %v1775, %v1996
        %v1998 = vpop.f32.mrb[0].mxu0
        %v1999 = vadd.f32 %v1779, %v1998
        %v2000 = vpop.f32.mrb[0].mxu0
        %v2001 = vadd.f32 %v1775, %v2000
        %v2002 = vpop.f32.mrb[0].mxu0
        %v2003 = vadd.f32 %v1779, %v2002
        %2004 = vmatprep.mubr.bf16.mxu0 %v1033
        %2005 = vmatmul.mubr.bf16.gmra.mrb[0].mxu0 %v1032
        %v2006 = vpop.f32.mrb[0].mxu0
        %v2007 = vadd.f32 %v1775, %v2006
        %v2008 = vpop.f32.mrb[0].mxu0
        %v2009 = vadd.f32 %v1779, %v2008
        %v2010 = vpop.f32.mrb[0].mxu0
        %v2011 = vadd.f32 %v1775, %v2010
        %v2012 = vpop.f32.mrb[0].mxu0
        %v2013 = vadd.f32 %v1779, %v2012
        %2014 = vmatprep.mubr.bf16.mxu0 %v1035
        %2015 = vmatmul.mubr.bf16.gmra.mrb[0].mxu0 %v1034
        %v2016 = vpop.f32.mrb[0].mxu0
        %v2017 = vadd.f32 %v1775, %v2016
        %v2018 = vpop.f32.mrb[0].mxu0
        %v2019 = vadd.f32 %v1779, %v2018
        %v2020 = vpop.f32.mrb[0].mxu0
        %v2021 = vadd.f32 %v1775, %v2020
        %v2022 = vpop.f32.mrb[0].mxu0
        %v2023 = vadd.f32 %v1779, %v2022
        %2024 = vmatprep.mubr.bf16.mxu0 %v1037
        %2025 = vmatmul.mubr.bf16.gmra.mrb[0].mxu0 %v1036
        %v2026 = vpop.f32.mrb[0].mxu0
        %v2027 = vadd.f32 %v1775, %v2026
        %v2028 = vpop.f32.mrb[0].mxu0
        %v2029 = vadd.f32 %v1779, %v2028
        %v2030 = vpop.f32.mrb[0].mxu0
        %v2031 = vadd.f32 %v1775, %v2030
        %v2032 = vpop.f32.mrb[0].mxu0
        %v2033 = vadd.f32 %v1779, %v2032
        %2034 = vmatprep.mubr.bf16.mxu0 %v1039
        %2035 = vmatmul.mubr.bf16.gmra.mrb[0].mxu0 %v1038
        %v2036 = vpop.f32.mrb[0].mxu0
        %v2037 = vadd.f32 %v1775, %v2036
        %v2038 = vpop.f32.mrb[0].mxu0
        %v2039 = vadd.f32 %v1779, %v2038
        %v2040 = vpop.f32.mrb[0].mxu0
        %v2041 = vadd.f32 %v1775, %v2040
        %v2042 = vpop.f32.mrb[0].mxu0
        %v2043 = vadd.f32 %v1779, %v2042
        %2044 = vmatprep.mubr.bf16.mxu0 %v1041
        %2045 = vmatmul.mubr.bf16.gmra.mrb[0].mxu0 %v1040
        %v2046 = vpop.f32.mrb[0].mxu0
        %v2047 = vadd.f32 %v1775, %v2046
        %v2048 = vpop.f32.mrb[0].mxu0
        %v2049 = vadd.f32 %v1779, %v2048
        %v2050 = vpop.f32.mrb[0].mxu0
        %v2051 = vadd.f32 %v1775, %v2050
        %v2052 = vpop.f32.mrb[0].mxu0
        %v2053 = vadd.f32 %v1779, %v2052
        %2054 = vdwg.mxu0
        %v2055 = vld [vmem:[#allocation8] sm:$0xff]
        %v2056 = vld [vmem:[#allocation8 + $0x8] sm:$0xff]
        %v2057 = vld [vmem:[#allocation8 + $0x10] sm:$0xff]
        %v2058 = vld [vmem:[#allocation8 + $0x18] sm:$0xff]
        %v2059 = vld [vmem:[#allocation8 + $0x20] sm:$0xff]
        %v2060 = vld [vmem:[#allocation8 + $0x28] sm:$0xff]
        %v2061 = vld [vmem:[#allocation8 + $0x30] sm:$0xff]
        %v2062 = vld [vmem:[#allocation8 + $0x38] sm:$0xff]
        %v2063 = vld [vmem:[#allocation8 + $0x40] sm:$0xff]
        %v2064 = vld [vmem:[#allocation8 + $0x48] sm:$0xff]
        %v2065 = vld [vmem:[#allocation8 + $0x50] sm:$0xff]
        %v2066 = vld [vmem:[#allocation8 + $0x58] sm:$0xff]
        %v2067 = vld [vmem:[#allocation8 + $0x60] sm:$0xff]
        %v2068 = vld [vmem:[#allocation8 + $0x68] sm:$0xff]
        %v2069 = vld [vmem:[#allocation8 + $0x70] sm:$0xff]
        %v2070 = vld [vmem:[#allocation8 + $0x78] sm:$0xff]
        %v2071 = vld [vmem:[#allocation8 + $0x80] sm:$0xff]
        %v2072 = vld [vmem:[#allocation8 + $0x88] sm:$0xff]
        %v2073 = vld [vmem:[#allocation8 + $0x90] sm:$0xff]
        %v2074 = vld [vmem:[#allocation8 + $0x98] sm:$0xff]
        %v2075 = vld [vmem:[#allocation8 + $0xa0] sm:$0xff]
        %v2076 = vld [vmem:[#allocation8 + $0xa8] sm:$0xff]
        %v2077 = vld [vmem:[#allocation8 + $0xb0] sm:$0xff]
        %v2078 = vld [vmem:[#allocation8 + $0xb8] sm:$0xff]
        %v2079 = vld [vmem:[#allocation8 + $0xc0] sm:$0xff]
        %v2080 = vld [vmem:[#allocation8 + $0xc8] sm:$0xff]
        %v2081 = vld [vmem:[#allocation8 + $0xd0] sm:$0xff]
        %v2082 = vld [vmem:[#allocation8 + $0xd8] sm:$0xff]
        %v2083 = vld [vmem:[#allocation8 + $0xe0] sm:$0xff]
        %v2084 = vld [vmem:[#allocation8 + $0xe8] sm:$0xff]
        %v2085 = vld [vmem:[#allocation8 + $0xf0] sm:$0xff]
        %v2086 = vld [vmem:[#allocation8 + $0xf8] sm:$0xff]
        %v2087 = vld [vmem:[%s9] sm:$0x3]
        %v2089 = vlaneseq
        %v2090 = vshrl.u32 %v2089, 7
        %v2091 = vsub.s32 0, %v2090
        %v2092 = vrot.slane %v2087, %v2091
        %v2093 = vlaneseq
        %v2094 = vshrl.u32 %v2093, 7
        %v2095 = vsub.s32 1, %v2094
        %v2096 = vrot.slane %v2087, %v2095
        %v2131 = vunpack.c.l.b16 %v2055
        %v2132 = vunpack.c.h.b16 %v2055
        %v2133 = vunpack.c.l.b16 %v2056
        %v2134 = vunpack.c.h.b16 %v2056
        %v2135 = vunpack.c.l.b16 %v2057
        %v2136 = vunpack.c.h.b16 %v2057
        %v2137 = vunpack.c.l.b16 %v2058
        %v2138 = vunpack.c.h.b16 %v2058
        %v2139 = vunpack.c.l.b16 %v2059
        %v2140 = vunpack.c.h.b16 %v2059
        %v2141 = vunpack.c.l.b16 %v2060
        %v2142 = vunpack.c.h.b16 %v2060
        %v2143 = vunpack.c.l.b16 %v2061
        %v2144 = vunpack.c.h.b16 %v2061
        %v2145 = vunpack.c.l.b16 %v2062
        %v2146 = vunpack.c.h.b16 %v2062
        %v2147 = vunpack.c.l.b16 %v2063
        %v2148 = vunpack.c.h.b16 %v2063
        %v2149 = vunpack.c.l.b16 %v2064
        %v2150 = vunpack.c.h.b16 %v2064
        %v2151 = vunpack.c.l.b16 %v2065
        %v2152 = vunpack.c.h.b16 %v2065
        %v2153 = vunpack.c.l.b16 %v2066
        %v2154 = vunpack.c.h.b16 %v2066
        %v2155 = vunpack.c.l.b16 %v2067
        %v2156 = vunpack.c.h.b16 %v2067
        %v2157 = vunpack.c.l.b16 %v2068
        %v2158 = vunpack.c.h.b16 %v2068
        %v2159 = vunpack.c.l.b16 %v2069
        %v2160 = vunpack.c.h.b16 %v2069
        %v2161 = vunpack.c.l.b16 %v2070
        %v2162 = vunpack.c.h.b16 %v2070
        %v2163 = vunpack.c.l.b16 %v2071
        %v2164 = vunpack.c.h.b16 %v2071
        %v2165 = vunpack.c.l.b16 %v2072
        %v2166 = vunpack.c.h.b16 %v2072
        %v2167 = vunpack.c.l.b16 %v2073
        %v2168 = vunpack.c.h.b16 %v2073
        %v2169 = vunpack.c.l.b16 %v2074
        %v2170 = vunpack.c.h.b16 %v2074
        %v2171 = vunpack.c.l.b16 %v2075
        %v2172 = vunpack.c.h.b16 %v2075
        %v2173 = vunpack.c.l.b16 %v2076
        %v2174 = vunpack.c.h.b16 %v2076
        %v2175 = vunpack.c.l.b16 %v2077
        %v2176 = vunpack.c.h.b16 %v2077
        %v2177 = vunpack.c.l.b16 %v2078
        %v2178 = vunpack.c.h.b16 %v2078
        %v2179 = vunpack.c.l.b16 %v2079
        %v2180 = vunpack.c.h.b16 %v2079
        %v2181 = vunpack.c.l.b16 %v2080
        %v2182 = vunpack.c.h.b16 %v2080
        %v2183 = vunpack.c.l.b16 %v2081
        %v2184 = vunpack.c.h.b16 %v2081
        %v2185 = vunpack.c.l.b16 %v2082
        %v2186 = vunpack.c.h.b16 %v2082
        %v2187 = vunpack.c.l.b16 %v2083
        %v2188 = vunpack.c.h.b16 %v2083
        %v2189 = vunpack.c.l.b16 %v2084
        %v2190 = vunpack.c.h.b16 %v2084
        %v2191 = vunpack.c.l.b16 %v2085
        %v2192 = vunpack.c.h.b16 %v2085
        %v2193 = vunpack.c.l.b16 %v2086
        %v2194 = vunpack.c.h.b16 %v2086
        %v2195 = vpack.c.b16 %v2133, %v2131
        %v2196 = vpack.c.b16 %v2134, %v2132
        %v2197 = vpack.c.b16 %v2137, %v2135
        %v2198 = vpack.c.b16 %v2138, %v2136
        %v2199 = vpack.c.b16 %v2141, %v2139
        %v2200 = vpack.c.b16 %v2142, %v2140
        %v2201 = vpack.c.b16 %v2145, %v2143
        %v2202 = vpack.c.b16 %v2146, %v2144
        %v2203 = vpack.c.b16 %v2149, %v2147
        %v2204 = vpack.c.b16 %v2150, %v2148
        %v2205 = vpack.c.b16 %v2153, %v2151
        %v2206 = vpack.c.b16 %v2154, %v2152
        %v2207 = vpack.c.b16 %v2157, %v2155
        %v2208 = vpack.c.b16 %v2158, %v2156
        %v2209 = vpack.c.b16 %v2161, %v2159
        %v2210 = vpack.c.b16 %v2162, %v2160
        %v2211 = vpack.c.b16 %v2165, %v2163
        %v2212 = vpack.c.b16 %v2166, %v2164
        %v2213 = vpack.c.b16 %v2169, %v2167
        %v2214 = vpack.c.b16 %v2170, %v2168
        %v2215 = vpack.c.b16 %v2173, %v2171
        %v2216 = vpack.c.b16 %v2174, %v2172
        %v2217 = vpack.c.b16 %v2177, %v2175
        %v2218 = vpack.c.b16 %v2178, %v2176
        %v2219 = vpack.c.b16 %v2181, %v2179
        %v2220 = vpack.c.b16 %v2182, %v2180
        %v2221 = vpack.c.b16 %v2185, %v2183
        %v2222 = vpack.c.b16 %v2186, %v2184
        %v2223 = vpack.c.b16 %v2189, %v2187
        %v2224 = vpack.c.b16 %v2190, %v2188
        %v2225 = vpack.c.b16 %v2193, %v2191
        %v2226 = vpack.c.b16 %v2194, %v2192
        %2259 = vmatprep.subr.bf16.mxu0 %v2196
        %2260 = vmatpush1.bf16.msra.mxu0 %v2195
        %2261 = vmatprep.subr.bf16.mxu0 %v2198
        %2262 = vmatpush1.bf16.msra.mxu0 %v2197
        %2263 = vmatprep.subr.bf16.mxu0 %v2200
        %2264 = vmatpush1.bf16.msra.mxu0 %v2199
        %2265 = vmatprep.subr.bf16.mxu0 %v2202
        %2266 = vmatpush1.bf16.msra.mxu0 %v2201
        %2267 = vmatprep.subr.bf16.mxu0 %v2204
        %2268 = vmatpush1.bf16.msra.mxu0 %v2203
        %2269 = vmatprep.subr.bf16.mxu0 %v2206
        %2270 = vmatpush1.bf16.msra.mxu0 %v2205
        %2271 = vmatprep.subr.bf16.mxu0 %v2208
        %2272 = vmatpush1.bf16.msra.mxu0 %v2207
        %2273 = vmatprep.subr.bf16.mxu0 %v2210
        %2274 = vmatpush1.bf16.msra.mxu0 %v2209
        %2275 = vmatprep.subr.bf16.mxu0 %v2212
        %2276 = vmatpush1.bf16.msra.mxu0 %v2211
        %2277 = vmatprep.subr.bf16.mxu0 %v2214
        %2278 = vmatpush1.bf16.msra.mxu0 %v2213
        %2279 = vmatprep.subr.bf16.mxu0 %v2216
        %2280 = vmatpush1.bf16.msra.mxu0 %v2215
        %2281 = vmatprep.subr.bf16.mxu0 %v2218
        %2282 = vmatpush1.bf16.msra.mxu0 %v2217
        %2283 = vmatprep.subr.bf16.mxu0 %v2220
        %2284 = vmatpush1.bf16.msra.mxu0 %v2219
        %2285 = vmatprep.subr.bf16.mxu0 %v2222
        %2286 = vmatpush1.bf16.msra.mxu0 %v2221
        %2287 = vmatprep.subr.bf16.mxu0 %v2224
        %2288 = vmatpush1.bf16.msra.mxu0 %v2223
        %2289 = vmatprep.subr.bf16.mxu0 %v2226
        %2290 = vmatpush1.bf16.msra.mxu0 %v2225
        %2291 = vmatprep.mubr.bf16.mxu0 %v1707
        %2292 = vmatmul.mubr.bf16.gmra.mrb[0].mxu0 %v1706
        %v2293 = vpop.f32.mrb[0].mxu0
        %v2294 = vadd.f32 %v2092, %v2293
        %v2295 = vpop.f32.mrb[0].mxu0
        %v2296 = vadd.f32 %v2096, %v2295
        %v2297 = vpop.f32.mrb[0].mxu0
        %v2298 = vadd.f32 %v2092, %v2297
        %v2299 = vpop.f32.mrb[0].mxu0
        %v2300 = vadd.f32 %v2096, %v2299
        %2301 = vmatprep.mubr.bf16.mxu0 %v1709
        %2302 = vmatmul.mubr.bf16.gmra.mrb[0].mxu0 %v1708
        %v2303 = vpop.f32.mrb[0].mxu0
        %v2304 = vadd.f32 %v2092, %v2303
        %v2305 = vpop.f32.mrb[0].mxu0
        %v2306 = vadd.f32 %v2096, %v2305
        %v2307 = vpop.f32.mrb[0].mxu0
        %v2308 = vadd.f32 %v2092, %v2307
        %v2309 = vpop.f32.mrb[0].mxu0
        %v2310 = vadd.f32 %v2096, %v2309
        %2311 = vmatprep.mubr.bf16.mxu0 %v1711
        %2312 = vmatmul.mubr.bf16.gmra.mrb[0].mxu0 %v1710
        %v2313 = vpop.f32.mrb[0].mxu0
        %v2314 = vadd.f32 %v2092, %v2313
        %v2315 = vpop.f32.mrb[0].mxu0
        %v2316 = vadd.f32 %v2096, %v2315
        %v2317 = vpop.f32.mrb[0].mxu0
        %v2318 = vadd.f32 %v2092, %v2317
        %v2319 = vpop.f32.mrb[0].mxu0
        %v2320 = vadd.f32 %v2096, %v2319
        %2321 = vmatprep.mubr.bf16.mxu0 %v1713
        %2322 = vmatmul.mubr.bf16.gmra.mrb[0].mxu0 %v1712
        %v2323 = vpop.f32.mrb[0].mxu0
        %v2324 = vadd.f32 %v2092, %v2323
        %v2325 = vpop.f32.mrb[0].mxu0
        %v2326 = vadd.f32 %v2096, %v2325
        %v2327 = vpop.f32.mrb[0].mxu0
        %v2328 = vadd.f32 %v2092, %v2327
        %v2329 = vpop.f32.mrb[0].mxu0
        %v2330 = vadd.f32 %v2096, %v2329
        %2331 = vmatprep.mubr.bf16.mxu0 %v1715
        %2332 = vmatmul.mubr.bf16.gmra.mrb[0].mxu0 %v1714
        %v2333 = vpop.f32.mrb[0].mxu0
        %v2334 = vadd.f32 %v2092, %v2333
        %v2335 = vpop.f32.mrb[0].mxu0
        %v2336 = vadd.f32 %v2096, %v2335
        %v2337 = vpop.f32.mrb[0].mxu0
        %v2338 = vadd.f32 %v2092, %v2337
        %v2339 = vpop.f32.mrb[0].mxu0
        %v2340 = vadd.f32 %v2096, %v2339
        %2341 = vmatprep.mubr.bf16.mxu0 %v1717
        %2342 = vmatmul.mubr.bf16.gmra.mrb[0].mxu0 %v1716
        %v2343 = vpop.f32.mrb[0].mxu0
        %v2344 = vadd.f32 %v2092, %v2343
        %v2345 = vpop.f32.mrb[0].mxu0
        %v2346 = vadd.f32 %v2096, %v2345
        %v2347 = vpop.f32.mrb[0].mxu0
        %v2348 = vadd.f32 %v2092, %v2347
        %v2349 = vpop.f32.mrb[0].mxu0
        %v2350 = vadd.f32 %v2096, %v2349
        %2351 = vmatprep.mubr.bf16.mxu0 %v1719
        %2352 = vmatmul.mubr.bf16.gmra.mrb[0].mxu0 %v1718
        %v2353 = vpop.f32.mrb[0].mxu0
        %v2354 = vadd.f32 %v2092, %v2353
        %v2355 = vpop.f32.mrb[0].mxu0
        %v2356 = vadd.f32 %v2096, %v2355
        %v2357 = vpop.f32.mrb[0].mxu0
        %v2358 = vadd.f32 %v2092, %v2357
        %v2359 = vpop.f32.mrb[0].mxu0
        %v2360 = vadd.f32 %v2096, %v2359
        %2361 = vmatprep.mubr.bf16.mxu0 %v1721
        %2362 = vmatmul.mubr.bf16.gmra.mrb[0].mxu0 %v1720
        %v2363 = vpop.f32.mrb[0].mxu0
        %v2364 = vadd.f32 %v2092, %v2363
        %v2365 = vpop.f32.mrb[0].mxu0
        %v2366 = vadd.f32 %v2096, %v2365
        %v2367 = vpop.f32.mrb[0].mxu0
        %v2368 = vadd.f32 %v2092, %v2367
        %v2369 = vpop.f32.mrb[0].mxu0
        %v2370 = vadd.f32 %v2096, %v2369
        %2371 = vmatprep.mubr.bf16.mxu0 %v1723
        %2372 = vmatmul.mubr.bf16.gmra.mrb[0].mxu0 %v1722
        %v2373 = vpop.f32.mrb[0].mxu0
        %v2374 = vadd.f32 %v2092, %v2373
        %v2375 = vpop.f32.mrb[0].mxu0
        %v2376 = vadd.f32 %v2096, %v2375
        %v2377 = vpop.f32.mrb[0].mxu0
        %v2378 = vadd.f32 %v2092, %v2377
        %v2379 = vpop.f32.mrb[0].mxu0
        %v2380 = vadd.f32 %v2096, %v2379
        %2381 = vmatprep.mubr.bf16.mxu0 %v1725
        %2382 = vmatmul.mubr.bf16.gmra.mrb[0].mxu0 %v1724
        %v2383 = vpop.f32.mrb[0].mxu0
        %v2384 = vadd.f32 %v2092, %v2383
        %v2385 = vpop.f32.mrb[0].mxu0
        %v2386 = vadd.f32 %v2096, %v2385
        %v2387 = vpop.f32.mrb[0].mxu0
        %v2388 = vadd.f32 %v2092, %v2387
        %v2389 = vpop.f32.mrb[0].mxu0
        %v2390 = vadd.f32 %v2096, %v2389
        %2391 = vmatprep.mubr.bf16.mxu0 %v1727
        %2392 = vmatmul.mubr.bf16.gmra.mrb[0].mxu0 %v1726
        %v2393 = vpop.f32.mrb[0].mxu0
        %v2394 = vadd.f32 %v2092, %v2393
        %v2395 = vpop.f32.mrb[0].mxu0
        %v2396 = vadd.f32 %v2096, %v2395
        %v2397 = vpop.f32.mrb[0].mxu0
        %v2398 = vadd.f32 %v2092, %v2397
        %v2399 = vpop.f32.mrb[0].mxu0
        %v2400 = vadd.f32 %v2096, %v2399
        %2401 = vmatprep.mubr.bf16.mxu0 %v1729
        %2402 = vmatmul.mubr.bf16.gmra.mrb[0].mxu0 %v1728
        %v2403 = vpop.f32.mrb[0].mxu0
        %v2404 = vadd.f32 %v2092, %v2403
        %v2405 = vpop.f32.mrb[0].mxu0
        %v2406 = vadd.f32 %v2096, %v2405
        %v2407 = vpop.f32.mrb[0].mxu0
        %v2408 = vadd.f32 %v2092, %v2407
        %v2409 = vpop.f32.mrb[0].mxu0
        %v2410 = vadd.f32 %v2096, %v2409
        %2411 = vmatprep.mubr.bf16.mxu0 %v1731
        %2412 = vmatmul.mubr.bf16.gmra.mrb[0].mxu0 %v1730
        %v2413 = vpop.f32.mrb[0].mxu0
        %v2414 = vadd.f32 %v2092, %v2413
        %v2415 = vpop.f32.mrb[0].mxu0
        %v2416 = vadd.f32 %v2096, %v2415
        %v2417 = vpop.f32.mrb[0].mxu0
        %v2418 = vadd.f32 %v2092, %v2417
        %v2419 = vpop.f32.mrb[0].mxu0
        %v2420 = vadd.f32 %v2096, %v2419
        %2421 = vmatprep.mubr.bf16.mxu0 %v1733
        %2422 = vmatmul.mubr.bf16.gmra.mrb[0].mxu0 %v1732
        %v2423 = vpop.f32.mrb[0].mxu0
        %v2424 = vadd.f32 %v2092, %v2423
        %v2425 = vpop.f32.mrb[0].mxu0
        %v2426 = vadd.f32 %v2096, %v2425
        %v2427 = vpop.f32.mrb[0].mxu0
        %v2428 = vadd.f32 %v2092, %v2427
        %v2429 = vpop.f32.mrb[0].mxu0
        %v2430 = vadd.f32 %v2096, %v2429
        %2431 = vmatprep.mubr.bf16.mxu0 %v1735
        %2432 = vmatmul.mubr.bf16.gmra.mrb[0].mxu0 %v1734
        %v2433 = vpop.f32.mrb[0].mxu0
        %v2434 = vadd.f32 %v2092, %v2433
        %v2435 = vpop.f32.mrb[0].mxu0
        %v2436 = vadd.f32 %v2096, %v2435
        %v2437 = vpop.f32.mrb[0].mxu0
        %v2438 = vadd.f32 %v2092, %v2437
        %v2439 = vpop.f32.mrb[0].mxu0
        %v2440 = vadd.f32 %v2096, %v2439
        %2441 = vmatprep.mubr.bf16.mxu0 %v1737
        %2442 = vmatmul.mubr.bf16.gmra.mrb[0].mxu0 %v1736
        %v2443 = vpop.f32.mrb[0].mxu0
        %v2444 = vadd.f32 %v2092, %v2443
        %v2445 = vpop.f32.mrb[0].mxu0
        %v2446 = vadd.f32 %v2096, %v2445
        %v2447 = vpop.f32.mrb[0].mxu0
        %v2448 = vadd.f32 %v2092, %v2447
        %v2449 = vpop.f32.mrb[0].mxu0
        %v2450 = vadd.f32 %v2096, %v2449
        %2451 = vdwg.mxu0
        %v2452 = vld [vmem:[#allocation10] sm:$0xff]
        %v2453 = vld [vmem:[#allocation10 + $0x8] sm:$0xff]
        %v2454 = vld [vmem:[#allocation10 + $0x10] sm:$0xff]
        %v2455 = vld [vmem:[#allocation10 + $0x18] sm:$0xff]
        %v2456 = vld [vmem:[#allocation10 + $0x20] sm:$0xff]
        %v2457 = vld [vmem:[#allocation10 + $0x28] sm:$0xff]
        %v2458 = vld [vmem:[#allocation10 + $0x30] sm:$0xff]
        %v2459 = vld [vmem:[#allocation10 + $0x38] sm:$0xff]
        %v2460 = vld [vmem:[#allocation10 + $0x40] sm:$0xff]
        %v2461 = vld [vmem:[#allocation10 + $0x48] sm:$0xff]
        %v2462 = vld [vmem:[#allocation10 + $0x50] sm:$0xff]
        %v2463 = vld [vmem:[#allocation10 + $0x58] sm:$0xff]
        %v2464 = vld [vmem:[#allocation10 + $0x60] sm:$0xff]
        %v2465 = vld [vmem:[#allocation10 + $0x68] sm:$0xff]
        %v2466 = vld [vmem:[#allocation10 + $0x70] sm:$0xff]
        %v2467 = vld [vmem:[#allocation10 + $0x78] sm:$0xff]
        %v2468 = vld [vmem:[#allocation10 + $0x80] sm:$0xff]
        %v2469 = vld [vmem:[#allocation10 + $0x88] sm:$0xff]
        %v2470 = vld [vmem:[#allocation10 + $0x90] sm:$0xff]
        %v2471 = vld [vmem:[#allocation10 + $0x98] sm:$0xff]
        %v2472 = vld [vmem:[#allocation10 + $0xa0] sm:$0xff]
        %v2473 = vld [vmem:[#allocation10 + $0xa8] sm:$0xff]
        %v2474 = vld [vmem:[#allocation10 + $0xb0] sm:$0xff]
        %v2475 = vld [vmem:[#allocation10 + $0xb8] sm:$0xff]
        %v2476 = vld [vmem:[#allocation10 + $0xc0] sm:$0xff]
        %v2477 = vld [vmem:[#allocation10 + $0xc8] sm:$0xff]
        %v2478 = vld [vmem:[#allocation10 + $0xd0] sm:$0xff]
        %v2479 = vld [vmem:[#allocation10 + $0xd8] sm:$0xff]
        %v2480 = vld [vmem:[#allocation10 + $0xe0] sm:$0xff]
        %v2481 = vld [vmem:[#allocation10 + $0xe8] sm:$0xff]
        %v2482 = vld [vmem:[#allocation10 + $0xf0] sm:$0xff]
        %v2483 = vld [vmem:[#allocation10 + $0xf8] sm:$0xff]
        %v2484 = vld [vmem:[%s11] sm:$0x3]
        %v2486 = vlaneseq
        %v2487 = vshrl.u32 %v2486, 7
        %v2488 = vsub.s32 0, %v2487
        %v2489 = vrot.slane %v2484, %v2488
        %v2490 = vlaneseq
        %v2491 = vshrl.u32 %v2490, 7
        %v2492 = vsub.s32 1, %v2491
        %v2493 = vrot.slane %v2484, %v2492
        %v2528 = vunpack.c.l.b16 %v2452
        %v2529 = vunpack.c.h.b16 %v2452
        %v2530 = vunpack.c.l.b16 %v2453
        %v2531 = vunpack.c.h.b16 %v2453
        %v2532 = vunpack.c.l.b16 %v2454
        %v2533 = vunpack.c.h.b16 %v2454
        %v2534 = vunpack.c.l.b16 %v2455
        %v2535 = vunpack.c.h.b16 %v2455
        %v2536 = vunpack.c.l.b16 %v2456
        %v2537 = vunpack.c.h.b16 %v2456
        %v2538 = vunpack.c.l.b16 %v2457
        %v2539 = vunpack.c.h.b16 %v2457
        %v2540 = vunpack.c.l.b16 %v2458
        %v2541 = vunpack.c.h.b16 %v2458
        %v2542 = vunpack.c.l.b16 %v2459
        %v2543 = vunpack.c.h.b16 %v2459
        %v2544 = vunpack.c.l.b16 %v2460
        %v2545 = vunpack.c.h.b16 %v2460
        %v2546 = vunpack.c.l.b16 %v2461
        %v2547 = vunpack.c.h.b16 %v2461
        %v2548 = vunpack.c.l.b16 %v2462
        %v2549 = vunpack.c.h.b16 %v2462
        %v2550 = vunpack.c.l.b16 %v2463
        %v2551 = vunpack.c.h.b16 %v2463
        %v2552 = vunpack.c.l.b16 %v2464
        %v2553 = vunpack.c.h.b16 %v2464
        %v2554 = vunpack.c.l.b16 %v2465
        %v2555 = vunpack.c.h.b16 %v2465
        %v2556 = vunpack.c.l.b16 %v2466
        %v2557 = vunpack.c.h.b16 %v2466
        %v2558 = vunpack.c.l.b16 %v2467
        %v2559 = vunpack.c.h.b16 %v2467
        %v2560 = vunpack.c.l.b16 %v2468
        %v2561 = vunpack.c.h.b16 %v2468
        %v2562 = vunpack.c.l.b16 %v2469
        %v2563 = vunpack.c.h.b16 %v2469
        %v2564 = vunpack.c.l.b16 %v2470
        %v2565 = vunpack.c.h.b16 %v2470
        %v2566 = vunpack.c.l.b16 %v2471
        %v2567 = vunpack.c.h.b16 %v2471
        %v2568 = vunpack.c.l.b16 %v2472
        %v2569 = vunpack.c.h.b16 %v2472
        %v2570 = vunpack.c.l.b16 %v2473
        %v2571 = vunpack.c.h.b16 %v2473
        %v2572 = vunpack.c.l.b16 %v2474
        %v2573 = vunpack.c.h.b16 %v2474
        %v2574 = vunpack.c.l.b16 %v2475
        %v2575 = vunpack.c.h.b16 %v2475
        %v2576 = vunpack.c.l.b16 %v2476
        %v2577 = vunpack.c.h.b16 %v2476
        %v2578 = vunpack.c.l.b16 %v2477
        %v2579 = vunpack.c.h.b16 %v2477
        %v2580 = vunpack.c.l.b16 %v2478
        %v2581 = vunpack.c.h.b16 %v2478
        %v2582 = vunpack.c.l.b16 %v2479
        %v2583 = vunpack.c.h.b16 %v2479
        %v2584 = vunpack.c.l.b16 %v2480
        %v2585 = vunpack.c.h.b16 %v2480
        %v2586 = vunpack.c.l.b16 %v2481
        %v2587 = vunpack.c.h.b16 %v2481
        %v2588 = vunpack.c.l.b16 %v2482
        %v2589 = vunpack.c.h.b16 %v2482
        %v2590 = vunpack.c.l.b16 %v2483
        %v2591 = vunpack.c.h.b16 %v2483
        %v2592 = vpack.c.b16 %v2530, %v2528
        %v2593 = vpack.c.b16 %v2531, %v2529
        %v2594 = vpack.c.b16 %v2534, %v2532
        %v2595 = vpack.c.b16 %v2535, %v2533
        %v2596 = vpack.c.b16 %v2538, %v2536
        %v2597 = vpack.c.b16 %v2539, %v2537
        %v2598 = vpack.c.b16 %v2542, %v2540
        %v2599 = vpack.c.b16 %v2543, %v2541
        %v2600 = vpack.c.b16 %v2546, %v2544
        %v2601 = vpack.c.b16 %v2547, %v2545
        %v2602 = vpack.c.b16 %v2550, %v2548
        %v2603 = vpack.c.b16 %v2551, %v2549
        %v2604 = vpack.c.b16 %v2554, %v2552
        %v2605 = vpack.c.b16 %v2555, %v2553
        %v2606 = vpack.c.b16 %v2558, %v2556
        %v2607 = vpack.c.b16 %v2559, %v2557
        %v2608 = vpack.c.b16 %v2562, %v2560
        %v2609 = vpack.c.b16 %v2563, %v2561
        %v2610 = vpack.c.b16 %v2566, %v2564
        %v2611 = vpack.c.b16 %v2567, %v2565
        %v2612 = vpack.c.b16 %v2570, %v2568
        %v2613 = vpack.c.b16 %v2571, %v2569
        %v2614 = vpack.c.b16 %v2574, %v2572
        %v2615 = vpack.c.b16 %v2575, %v2573
        %v2616 = vpack.c.b16 %v2578, %v2576
        %v2617 = vpack.c.b16 %v2579, %v2577
        %v2618 = vpack.c.b16 %v2582, %v2580
        %v2619 = vpack.c.b16 %v2583, %v2581
        %v2620 = vpack.c.b16 %v2586, %v2584
        %v2621 = vpack.c.b16 %v2587, %v2585
        %v2622 = vpack.c.b16 %v2590, %v2588
        %v2623 = vpack.c.b16 %v2591, %v2589
        %2656 = vmatprep.subr.bf16.mxu0 %v2593
        %2657 = vmatpush1.bf16.msra.mxu0 %v2592
        %2658 = vmatprep.subr.bf16.mxu0 %v2595
        %2659 = vmatpush1.bf16.msra.mxu0 %v2594
        %2660 = vmatprep.subr.bf16.mxu0 %v2597
        %2661 = vmatpush1.bf16.msra.mxu0 %v2596
        %2662 = vmatprep.subr.bf16.mxu0 %v2599
        %2663 = vmatpush1.bf16.msra.mxu0 %v2598
        %2664 = vmatprep.subr.bf16.mxu0 %v2601
        %2665 = vmatpush1.bf16.msra.mxu0 %v2600
        %2666 = vmatprep.subr.bf16.mxu0 %v2603
        %2667 = vmatpush1.bf16.msra.mxu0 %v2602
        %2668 = vmatprep.subr.bf16.mxu0 %v2605
        %2669 = vmatpush1.bf16.msra.mxu0 %v2604
        %2670 = vmatprep.subr.bf16.mxu0 %v2607
        %2671 = vmatpush1.bf16.msra.mxu0 %v2606
        %2672 = vmatprep.subr.bf16.mxu0 %v2609
        %2673 = vmatpush1.bf16.msra.mxu0 %v2608
        %2674 = vmatprep.subr.bf16.mxu0 %v2611
        %2675 = vmatpush1.bf16.msra.mxu0 %v2610
        %2676 = vmatprep.subr.bf16.mxu0 %v2613
        %2677 = vmatpush1.bf16.msra.mxu0 %v2612
        %2678 = vmatprep.subr.bf16.mxu0 %v2615
        %2679 = vmatpush1.bf16.msra.mxu0 %v2614
        %2680 = vmatprep.subr.bf16.mxu0 %v2617
        %2681 = vmatpush1.bf16.msra.mxu0 %v2616
        %2682 = vmatprep.subr.bf16.mxu0 %v2619
        %2683 = vmatpush1.bf16.msra.mxu0 %v2618
        %2684 = vmatprep.subr.bf16.mxu0 %v2621
        %2685 = vmatpush1.bf16.msra.mxu0 %v2620
        %2686 = vmatprep.subr.bf16.mxu0 %v2623
        %2687 = vmatpush1.bf16.msra.mxu0 %v2622
        %2688 = vmatprep.mubr.bf16.mxu0 %v1707
        %2689 = vmatmul.mubr.bf16.gmra.mrb[0].mxu0 %v1706
        %v2690 = vpop.f32.mrb[0].mxu0
        %v2691 = vadd.f32 %v2489, %v2690
        %v2692 = vpop.f32.mrb[0].mxu0
        %v2693 = vadd.f32 %v2493, %v2692
        %v2694 = vpop.f32.mrb[0].mxu0
        %v2695 = vadd.f32 %v2489, %v2694
        %v2696 = vpop.f32.mrb[0].mxu0
        %v2697 = vadd.f32 %v2493, %v2696
        %2698 = vmatprep.mubr.bf16.mxu0 %v1709
        %2699 = vmatmul.mubr.bf16.gmra.mrb[0].mxu0 %v1708
        %v2700 = vpop.f32.mrb[0].mxu0
        %v2701 = vadd.f32 %v2489, %v2700
        %v2702 = vpop.f32.mrb[0].mxu0
        %v2703 = vadd.f32 %v2493, %v2702
        %v2704 = vpop.f32.mrb[0].mxu0
        %v2705 = vadd.f32 %v2489, %v2704
        %v2706 = vpop.f32.mrb[0].mxu0
        %v2707 = vadd.f32 %v2493, %v2706
        %2708 = vmatprep.mubr.bf16.mxu0 %v1711
        %2709 = vmatmul.mubr.bf16.gmra.mrb[0].mxu0 %v1710
        %v2710 = vpop.f32.mrb[0].mxu0
        %v2711 = vadd.f32 %v2489, %v2710
        %v2712 = vpop.f32.mrb[0].mxu0
        %v2713 = vadd.f32 %v2493, %v2712
        %v2714 = vpop.f32.mrb[0].mxu0
        %v2715 = vadd.f32 %v2489, %v2714
        %v2716 = vpop.f32.mrb[0].mxu0
        %v2717 = vadd.f32 %v2493, %v2716
        %2718 = vmatprep.mubr.bf16.mxu0 %v1713
        %2719 = vmatmul.mubr.bf16.gmra.mrb[0].mxu0 %v1712
        %v2720 = vpop.f32.mrb[0].mxu0
        %v2721 = vadd.f32 %v2489, %v2720
        %v2722 = vpop.f32.mrb[0].mxu0
        %v2723 = vadd.f32 %v2493, %v2722
        %v2724 = vpop.f32.mrb[0].mxu0
        %v2725 = vadd.f32 %v2489, %v2724
        %v2726 = vpop.f32.mrb[0].mxu0
        %v2727 = vadd.f32 %v2493, %v2726
        %2728 = vmatprep.mubr.bf16.mxu0 %v1715
        %2729 = vmatmul.mubr.bf16.gmra.mrb[0].mxu0 %v1714
        %v2730 = vpop.f32.mrb[0].mxu0
        %v2731 = vadd.f32 %v2489, %v2730
        %v2732 = vpop.f32.mrb[0].mxu0
        %v2733 = vadd.f32 %v2493, %v2732
        %v2734 = vpop.f32.mrb[0].mxu0
        %v2735 = vadd.f32 %v2489, %v2734
        %v2736 = vpop.f32.mrb[0].mxu0
        %v2737 = vadd.f32 %v2493, %v2736
        %2738 = vmatprep.mubr.bf16.mxu0 %v1717
        %2739 = vmatmul.mubr.bf16.gmra.mrb[0].mxu0 %v1716
        %v2740 = vpop.f32.mrb[0].mxu0
        %v2741 = vadd.f32 %v2489, %v2740
        %v2742 = vpop.f32.mrb[0].mxu0
        %v2743 = vadd.f32 %v2493, %v2742
        %v2744 = vpop.f32.mrb[0].mxu0
        %v2745 = vadd.f32 %v2489, %v2744
        %v2746 = vpop.f32.mrb[0].mxu0
        %v2747 = vadd.f32 %v2493, %v2746
        %2748 = vmatprep.mubr.bf16.mxu0 %v1719
        %2749 = vmatmul.mubr.bf16.gmra.mrb[0].mxu0 %v1718
        %v2750 = vpop.f32.mrb[0].mxu0
        %v2751 = vadd.f32 %v2489, %v2750
        %v2752 = vpop.f32.mrb[0].mxu0
        %v2753 = vadd.f32 %v2493, %v2752
        %v2754 = vpop.f32.mrb[0].mxu0
        %v2755 = vadd.f32 %v2489, %v2754
        %v2756 = vpop.f32.mrb[0].mxu0
        %v2757 = vadd.f32 %v2493, %v2756
        %2758 = vmatprep.mubr.bf16.mxu0 %v1721
        %2759 = vmatmul.mubr.bf16.gmra.mrb[0].mxu0 %v1720
        %v2760 = vpop.f32.mrb[0].mxu0
        %v2761 = vadd.f32 %v2489, %v2760
        %v2762 = vpop.f32.mrb[0].mxu0
        %v2763 = vadd.f32 %v2493, %v2762
        %v2764 = vpop.f32.mrb[0].mxu0
        %v2765 = vadd.f32 %v2489, %v2764
        %v2766 = vpop.f32.mrb[0].mxu0
        %v2767 = vadd.f32 %v2493, %v2766
        %2768 = vmatprep.mubr.bf16.mxu0 %v1723
        %2769 = vmatmul.mubr.bf16.gmra.mrb[0].mxu0 %v1722
        %v2770 = vpop.f32.mrb[0].mxu0
        %v2771 = vadd.f32 %v2489, %v2770
        %v2772 = vpop.f32.mrb[0].mxu0
        %v2773 = vadd.f32 %v2493, %v2772
        %v2774 = vpop.f32.mrb[0].mxu0
        %v2775 = vadd.f32 %v2489, %v2774
        %v2776 = vpop.f32.mrb[0].mxu0
        %v2777 = vadd.f32 %v2493, %v2776
        %2778 = vmatprep.mubr.bf16.mxu0 %v1725
        %2779 = vmatmul.mubr.bf16.gmra.mrb[0].mxu0 %v1724
        %v2780 = vpop.f32.mrb[0].mxu0
        %v2781 = vadd.f32 %v2489, %v2780
        %v2782 = vpop.f32.mrb[0].mxu0
        %v2783 = vadd.f32 %v2493, %v2782
        %v2784 = vpop.f32.mrb[0].mxu0
        %v2785 = vadd.f32 %v2489, %v2784
        %v2786 = vpop.f32.mrb[0].mxu0
        %v2787 = vadd.f32 %v2493, %v2786
        %2788 = vmatprep.mubr.bf16.mxu0 %v1727
        %2789 = vmatmul.mubr.bf16.gmra.mrb[0].mxu0 %v1726
        %v2790 = vpop.f32.mrb[0].mxu0
        %v2791 = vadd.f32 %v2489, %v2790
        %v2792 = vpop.f32.mrb[0].mxu0
        %v2793 = vadd.f32 %v2493, %v2792
        %v2794 = vpop.f32.mrb[0].mxu0
        %v2795 = vadd.f32 %v2489, %v2794
        %v2796 = vpop.f32.mrb[0].mxu0
        %v2797 = vadd.f32 %v2493, %v2796
        %2798 = vmatprep.mubr.bf16.mxu0 %v1729
        %2799 = vmatmul.mubr.bf16.gmra.mrb[0].mxu0 %v1728
        %v2800 = vpop.f32.mrb[0].mxu0
        %v2801 = vadd.f32 %v2489, %v2800
        %v2802 = vpop.f32.mrb[0].mxu0
        %v2803 = vadd.f32 %v2493, %v2802
        %v2804 = vpop.f32.mrb[0].mxu0
        %v2805 = vadd.f32 %v2489, %v2804
        %v2806 = vpop.f32.mrb[0].mxu0
        %v2807 = vadd.f32 %v2493, %v2806
        %2808 = vmatprep.mubr.bf16.mxu0 %v1731
        %2809 = vmatmul.mubr.bf16.gmra.mrb[0].mxu0 %v1730
        %v2810 = vpop.f32.mrb[0].mxu0
        %v2811 = vadd.f32 %v2489, %v2810
        %v2812 = vpop.f32.mrb[0].mxu0
        %v2813 = vadd.f32 %v2493, %v2812
        %v2814 = vpop.f32.mrb[0].mxu0
        %v2815 = vadd.f32 %v2489, %v2814
        %v2816 = vpop.f32.mrb[0].mxu0
        %v2817 = vadd.f32 %v2493, %v2816
        %2818 = vmatprep.mubr.bf16.mxu0 %v1733
        %2819 = vmatmul.mubr.bf16.gmra.mrb[0].mxu0 %v1732
        %v2820 = vpop.f32.mrb[0].mxu0
        %v2821 = vadd.f32 %v2489, %v2820
        %v2822 = vpop.f32.mrb[0].mxu0
        %v2823 = vadd.f32 %v2493, %v2822
        %v2824 = vpop.f32.mrb[0].mxu0
        %v2825 = vadd.f32 %v2489, %v2824
        %v2826 = vpop.f32.mrb[0].mxu0
        %v2827 = vadd.f32 %v2493, %v2826
        %2828 = vmatprep.mubr.bf16.mxu0 %v1735
        %2829 = vmatmul.mubr.bf16.gmra.mrb[0].mxu0 %v1734
        %v2830 = vpop.f32.mrb[0].mxu0
        %v2831 = vadd.f32 %v2489, %v2830
        %v2832 = vpop.f32.mrb[0].mxu0
        %v2833 = vadd.f32 %v2493, %v2832
        %v2834 = vpop.f32.mrb[0].mxu0
        %v2835 = vadd.f32 %v2489, %v2834
        %v2836 = vpop.f32.mrb[0].mxu0
        %v2837 = vadd.f32 %v2493, %v2836
        %2838 = vmatprep.mubr.bf16.mxu0 %v1737
        %2839 = vmatmul.mubr.bf16.gmra.mrb[0].mxu0 %v1736
        %v2840 = vpop.f32.mrb[0].mxu0
        %v2841 = vadd.f32 %v2489, %v2840
        %v2842 = vpop.f32.mrb[0].mxu0
        %v2843 = vadd.f32 %v2493, %v2842
        %v2844 = vpop.f32.mrb[0].mxu0
        %v2845 = vadd.f32 %v2489, %v2844
        %v2846 = vpop.f32.mrb[0].mxu0
        %v2847 = vadd.f32 %v2493, %v2846
        %2848 = vdwg.mxu0
        %v2849 = vmul.f32 %v1977, 0.088388346
        %v2850 = vmul.f32 %v1979, 0.088388346
        %v2851 = vmul.f32 %v1981, 0.088388346
        %v2852 = vmul.f32 %v1983, 0.088388346
        %v2853 = vmul.f32 %v1987, 0.088388346
        %v2854 = vmul.f32 %v1989, 0.088388346
        %v2855 = vmul.f32 %v1991, 0.088388346
        %v2856 = vmul.f32 %v1993, 0.088388346
        %v2857 = vmul.f32 %v1997, 0.088388346
        %v2858 = vmul.f32 %v1999, 0.088388346
        %v2859 = vmul.f32 %v2001, 0.088388346
        %v2860 = vmul.f32 %v2003, 0.088388346
        %v2861 = vmul.f32 %v2007, 0.088388346
        %v2862 = vmul.f32 %v2009, 0.088388346
        %v2863 = vmul.f32 %v2011, 0.088388346
        %v2864 = vmul.f32 %v2013, 0.088388346
        %v2865 = vmul.f32 %v2017, 0.088388346
        %v2866 = vmul.f32 %v2019, 0.088388346
        %v2867 = vmul.f32 %v2021, 0.088388346
        %v2868 = vmul.f32 %v2023, 0.088388346
        %v2869 = vmul.f32 %v2027, 0.088388346
        %v2870 = vmul.f32 %v2029, 0.088388346
        %v2871 = vmul.f32 %v2031, 0.088388346
        %v2872 = vmul.f32 %v2033, 0.088388346
        %v2873 = vmul.f32 %v2037, 0.088388346
        %v2874 = vmul.f32 %v2039, 0.088388346
        %v2875 = vmul.f32 %v2041, 0.088388346
        %v2876 = vmul.f32 %v2043, 0.088388346
        %v2877 = vmul.f32 %v2047, 0.088388346
        %v2878 = vmul.f32 %v2049, 0.088388346
        %v2879 = vmul.f32 %v2051, 0.088388346
        %v2880 = vmul.f32 %v2053, 0.088388346
        %v2881 = vld [vmem:[#allocation11] sm:$0xff]
        %v2882 = vld [vmem:[#allocation11 + $0x8] sm:$0xff]
        %v2883 = vld [vmem:[#allocation11 + $0x10] sm:$0xff]
        %v2884 = vld [vmem:[#allocation11 + $0x18] sm:$0xff]
        %v2885 = vld [vmem:[#allocation11 + $0x20] sm:$0xff]
        %v2886 = vld [vmem:[#allocation11 + $0x28] sm:$0xff]
        %v2887 = vld [vmem:[#allocation11 + $0x30] sm:$0xff]
        %v2888 = vld [vmem:[#allocation11 + $0x38] sm:$0xff]
        %v2889 = vld [vmem:[#allocation11 + $0x40] sm:$0xff]
        %v2890 = vld [vmem:[#allocation11 + $0x48] sm:$0xff]
        %v2891 = vld [vmem:[#allocation11 + $0x50] sm:$0xff]
        %v2892 = vld [vmem:[#allocation11 + $0x58] sm:$0xff]
        %v2893 = vld [vmem:[#allocation11 + $0x60] sm:$0xff]
        %v2894 = vld [vmem:[#allocation11 + $0x68] sm:$0xff]
        %v2895 = vld [vmem:[#allocation11 + $0x70] sm:$0xff]
        %v2896 = vld [vmem:[#allocation11 + $0x78] sm:$0xff]
        %v2897 = vld [vmem:[#allocation11 + $0x80] sm:$0xff]
        %v2898 = vld [vmem:[#allocation11 + $0x88] sm:$0xff]
        %v2899 = vld [vmem:[#allocation11 + $0x90] sm:$0xff]
        %v2900 = vld [vmem:[#allocation11 + $0x98] sm:$0xff]
        %v2901 = vld [vmem:[#allocation11 + $0xa0] sm:$0xff]
        %v2902 = vld [vmem:[#allocation11 + $0xa8] sm:$0xff]
        %v2903 = vld [vmem:[#allocation11 + $0xb0] sm:$0xff]
        %v2904 = vld [vmem:[#allocation11 + $0xb8] sm:$0xff]
        %v2905 = vld [vmem:[#allocation11 + $0xc0] sm:$0xff]
        %v2906 = vld [vmem:[#allocation11 + $0xc8] sm:$0xff]
        %v2907 = vld [vmem:[#allocation11 + $0xd0] sm:$0xff]
        %v2908 = vld [vmem:[#allocation11 + $0xd8] sm:$0xff]
        %v2909 = vld [vmem:[#allocation11 + $0xe0] sm:$0xff]
        %v2910 = vld [vmem:[#allocation11 + $0xe8] sm:$0xff]
        %v2911 = vld [vmem:[#allocation11 + $0xf0] sm:$0xff]
        %v2912 = vld [vmem:[#allocation11 + $0xf8] sm:$0xff]
        %v2913 = vpack.c.bf16 %v2851, %v2849
        %v2914 = vpack.c.bf16 %v2855, %v2853
        %v2915 = vpack.c.bf16 %v2859, %v2857
        %v2916 = vpack.c.bf16 %v2863, %v2861
        %v2917 = vpack.c.bf16 %v2867, %v2865
        %v2918 = vpack.c.bf16 %v2871, %v2869
        %v2919 = vpack.c.bf16 %v2875, %v2873
        %v2920 = vpack.c.bf16 %v2879, %v2877
        %v2921 = vpack.c.bf16 %v2298, %v2294
        %v2922 = vpack.c.bf16 %v2308, %v2304
        %v2923 = vpack.c.bf16 %v2318, %v2314
        %v2924 = vpack.c.bf16 %v2328, %v2324
        %v2925 = vpack.c.bf16 %v2338, %v2334
        %v2926 = vpack.c.bf16 %v2348, %v2344
        %v2927 = vpack.c.bf16 %v2358, %v2354
        %v2928 = vpack.c.bf16 %v2368, %v2364
        %v2929 = vpack.c.bf16 %v2378, %v2374
        %v2930 = vpack.c.bf16 %v2388, %v2384
        %v2931 = vpack.c.bf16 %v2398, %v2394
        %v2932 = vpack.c.bf16 %v2408, %v2404
        %v2933 = vpack.c.bf16 %v2418, %v2414
        %v2934 = vpack.c.bf16 %v2428, %v2424
        %v2935 = vpack.c.bf16 %v2438, %v2434
        %v2936 = vpack.c.bf16 %v2448, %v2444
        %v2937 = vpack.c.bf16 %v2695, %v2691
        %v2938 = vpack.c.bf16 %v2705, %v2701
        %v2939 = vpack.c.bf16 %v2715, %v2711
        %v2940 = vpack.c.bf16 %v2725, %v2721
        %v2941 = vpack.c.bf16 %v2735, %v2731
        %v2942 = vpack.c.bf16 %v2745, %v2741
        %v2943 = vpack.c.bf16 %v2755, %v2751
        %v2944 = vpack.c.bf16 %v2765, %v2761
        %v2945 = vpack.c.bf16 %v2775, %v2771
        %v2946 = vpack.c.bf16 %v2785, %v2781
        %v2947 = vpack.c.bf16 %v2795, %v2791
        %v2948 = vpack.c.bf16 %v2805, %v2801
        %v2949 = vpack.c.bf16 %v2815, %v2811
        %v2950 = vpack.c.bf16 %v2825, %v2821
        %v2951 = vpack.c.bf16 %v2835, %v2831
        %v2952 = vpack.c.bf16 %v2845, %v2841
        %2953 = vmatprep.subr.bf16.mxu0 0
        %2954 = vmatpush1.bf16.xpose.msra.mxu0 %v2921
        %2955 = vmatprep.subr.bf16.mxu0 0
        %2956 = vmatpush1.bf16.xpose.msra.mxu0 %v2922
        %2957 = vmatprep.subr.bf16.mxu0 0
        %2958 = vmatpush1.bf16.xpose.msra.mxu0 %v2923
        %2959 = vmatprep.subr.bf16.mxu0 0
        %2960 = vmatpush1.bf16.xpose.msra.mxu0 %v2924
        %2961 = vmatprep.subr.bf16.mxu0 0
        %2962 = vmatpush1.bf16.xpose.msra.mxu0 %v2925
        %2963 = vmatprep.subr.bf16.mxu0 0
        %2964 = vmatpush1.bf16.xpose.msra.mxu0 %v2926
        %2965 = vmatprep.subr.bf16.mxu0 0
        %2966 = vmatpush1.bf16.xpose.msra.mxu0 %v2927
        %2967 = vmatprep.subr.bf16.mxu0 0
        %2968 = vmatpush1.bf16.xpose.msra.mxu0 %v2928
        %2969 = vmatprep.subr.bf16.mxu0 0
        %2970 = vmatpush1.bf16.xpose.msra.mxu0 %v2929
        %2971 = vmatprep.subr.bf16.mxu0 0
        %2972 = vmatpush1.bf16.xpose.msra.mxu0 %v2930
        %2973 = vmatprep.subr.bf16.mxu0 0
        %2974 = vmatpush1.bf16.xpose.msra.mxu0 %v2931
        %2975 = vmatprep.subr.bf16.mxu0 0
        %2976 = vmatpush1.bf16.xpose.msra.mxu0 %v2932
        %2977 = vmatprep.subr.bf16.mxu0 0
        %2978 = vmatpush1.bf16.xpose.msra.mxu0 %v2933
        %2979 = vmatprep.subr.bf16.mxu0 0
        %2980 = vmatpush1.bf16.xpose.msra.mxu0 %v2934
        %2981 = vmatprep.subr.bf16.mxu0 0
        %2982 = vmatpush1.bf16.xpose.msra.mxu0 %v2935
        %2983 = vmatprep.subr.bf16.mxu0 0
        %2984 = vmatpush1.bf16.xpose.msra.mxu0 %v2936
        %2985 = vmatprep.mubr.bf16.mxu0 0
        %2986 = vmatmul.mubr.bf16.gmra.mrb[0].mxu0 %v2913
        %v2987 = vpop.f32.mrb[0].mxu0
        %v2988 = vadd.f32 0.0, %v2987
        %v2989 = vpop.f32.mrb[0].mxu0
        %v2990 = vadd.f32 0.0, %v2989
        %v2991 = vpop.f32.mrb[0].mxu0
        %v2992 = vadd.f32 0.0, %v2991
        %v2993 = vpop.f32.mrb[0].mxu0
        %v2994 = vadd.f32 0.0, %v2993
        %2995 = vmatprep.mubr.bf16.mxu0 0
        %2996 = vmatmul.mubr.bf16.gmra.mrb[0].mxu0 %v2914
        %v2997 = vpop.f32.mrb[0].mxu0
        %v2998 = vadd.f32 0.0, %v2997
        %v2999 = vpop.f32.mrb[0].mxu0
        %v3000 = vadd.f32 0.0, %v2999
        %v3001 = vpop.f32.mrb[0].mxu0
        %v3002 = vadd.f32 0.0, %v3001
        %v3003 = vpop.f32.mrb[0].mxu0
        %v3004 = vadd.f32 0.0, %v3003
        %3005 = vmatprep.mubr.bf16.mxu0 0
        %3006 = vmatmul.mubr.bf16.gmra.mrb[0].mxu0 %v2915
        %v3007 = vpop.f32.mrb[0].mxu0
        %v3008 = vadd.f32 0.0, %v3007
        %v3009 = vpop.f32.mrb[0].mxu0
        %v3010 = vadd.f32 0.0, %v3009
        %v3011 = vpop.f32.mrb[0].mxu0
        %v3012 = vadd.f32 0.0, %v3011
        %v3013 = vpop.f32.mrb[0].mxu0
        %v3014 = vadd.f32 0.0, %v3013
        %3015 = vmatprep.mubr.bf16.mxu0 0
        %3016 = vmatmul.mubr.bf16.gmra.mrb[0].mxu0 %v2916
        %v3017 = vpop.f32.mrb[0].mxu0
        %v3018 = vadd.f32 0.0, %v3017
        %v3019 = vpop.f32.mrb[0].mxu0
        %v3020 = vadd.f32 0.0, %v3019
        %v3021 = vpop.f32.mrb[0].mxu0
        %v3022 = vadd.f32 0.0, %v3021
        %v3023 = vpop.f32.mrb[0].mxu0
        %v3024 = vadd.f32 0.0, %v3023
        %3025 = vmatprep.mubr.bf16.mxu0 0
        %3026 = vmatmul.mubr.bf16.gmra.mrb[0].mxu0 %v2917
        %v3027 = vpop.f32.mrb[0].mxu0
        %v3028 = vadd.f32 0.0, %v3027
        %v3029 = vpop.f32.mrb[0].mxu0
        %v3030 = vadd.f32 0.0, %v3029
        %v3031 = vpop.f32.mrb[0].mxu0
        %v3032 = vadd.f32 0.0, %v3031
        %v3033 = vpop.f32.mrb[0].mxu0
        %v3034 = vadd.f32 0.0, %v3033
        %3035 = vmatprep.mubr.bf16.mxu0 0
        %3036 = vmatmul.mubr.bf16.gmra.mrb[0].mxu0 %v2918
        %v3037 = vpop.f32.mrb[0].mxu0
        %v3038 = vadd.f32 0.0, %v3037
        %v3039 = vpop.f32.mrb[0].mxu0
        %v3040 = vadd.f32 0.0, %v3039
        %v3041 = vpop.f32.mrb[0].mxu0
        %v3042 = vadd.f32 0.0, %v3041
        %v3043 = vpop.f32.mrb[0].mxu0
        %v3044 = vadd.f32 0.0, %v3043
        %3045 = vmatprep.mubr.bf16.mxu0 0
        %3046 = vmatmul.mubr.bf16.gmra.mrb[0].mxu0 %v2919
        %v3047 = vpop.f32.mrb[0].mxu0
        %v3048 = vadd.f32 0.0, %v3047
        %v3049 = vpop.f32.mrb[0].mxu0
        %v3050 = vadd.f32 0.0, %v3049
        %v3051 = vpop.f32.mrb[0].mxu0
        %v3052 = vadd.f32 0.0, %v3051
        %v3053 = vpop.f32.mrb[0].mxu0
        %v3054 = vadd.f32 0.0, %v3053
        %3055 = vmatprep.mubr.bf16.mxu0 0
        %3056 = vmatmul.mubr.bf16.gmra.mrb[0].mxu0 %v2920
        %v3057 = vpop.f32.mrb[0].mxu0
        %v3058 = vadd.f32 0.0, %v3057
        %v3059 = vpop.f32.mrb[0].mxu0
        %v3060 = vadd.f32 0.0, %v3059
        %v3061 = vpop.f32.mrb[0].mxu0
        %v3062 = vadd.f32 0.0, %v3061
        %v3063 = vpop.f32.mrb[0].mxu0
        %v3064 = vadd.f32 0.0, %v3063
        %3065 = vdwg.mxu0
        %v3066 = vmax.f32 %v2988, %v2990
        %3067 = vmax.xlane.f32.xlu0 %v3066
        %v3068 = vpop.xlane.xlu0 %3067
        %v3069 = vmax.f32 %v2992, %v2994
        %3070 = vmax.xlane.f32.xlu0 %v3069
        %v3071 = vpop.xlane.xlu0 %3070
        %v3072 = vmax.f32 %v2998, %v3000
        %3073 = vmax.xlane.f32.xlu0 %v3072
        %v3074 = vpop.xlane.xlu0 %3073
        %v3075 = vmax.f32 %v3002, %v3004
        %3076 = vmax.xlane.f32.xlu0 %v3075
        %v3077 = vpop.xlane.xlu0 %3076
        %v3078 = vmax.f32 %v3008, %v3010
        %3079 = vmax.xlane.f32.xlu0 %v3078
        %v3080 = vpop.xlane.xlu0 %3079
        %v3081 = vmax.f32 %v3012, %v3014
        %3082 = vmax.xlane.f32.xlu0 %v3081
        %v3083 = vpop.xlane.xlu0 %3082
        %v3084 = vmax.f32 %v3018, %v3020
        %3085 = vmax.xlane.f32.xlu0 %v3084
        %v3086 = vpop.xlane.xlu0 %3085
        %v3087 = vmax.f32 %v3022, %v3024
        %3088 = vmax.xlane.f32.xlu0 %v3087
        %v3089 = vpop.xlane.xlu0 %3088
        %v3090 = vmax.f32 %v3028, %v3030
        %3091 = vmax.xlane.f32.xlu0 %v3090
        %v3092 = vpop.xlane.xlu0 %3091
        %v3093 = vmax.f32 %v3032, %v3034
        %3094 = vmax.xlane.f32.xlu0 %v3093
        %v3095 = vpop.xlane.xlu0 %3094
        %v3096 = vmax.f32 %v3038, %v3040
        %3097 = vmax.xlane.f32.xlu0 %v3096
        %v3098 = vpop.xlane.xlu0 %3097
        %v3099 = vmax.f32 %v3042, %v3044
        %3100 = vmax.xlane.f32.xlu0 %v3099
        %v3101 = vpop.xlane.xlu0 %3100
        %v3102 = vmax.f32 %v3048, %v3050
        %3103 = vmax.xlane.f32.xlu0 %v3102
        %v3104 = vpop.xlane.xlu0 %3103
        %v3105 = vmax.f32 %v3052, %v3054
        %3106 = vmax.xlane.f32.xlu0 %v3105
        %v3107 = vpop.xlane.xlu0 %3106
        %v3108 = vmax.f32 %v3058, %v3060
        %3109 = vmax.xlane.f32.xlu0 %v3108
        %v3110 = vpop.xlane.xlu0 %3109
        %v3111 = vmax.f32 %v3062, %v3064
        %3112 = vmax.xlane.f32.xlu0 %v3111
        %v3113 = vpop.xlane.xlu0 %3112
        %v3114 = vsub.f32 %v2988, %v3068
        %v3115 = vsub.f32 %v2990, %v3068
        %v3116 = vsub.f32 %v2992, %v3071
        %v3117 = vsub.f32 %v2994, %v3071
        %v3118 = vsub.f32 %v2998, %v3074
        %v3119 = vsub.f32 %v3000, %v3074
        %v3120 = vsub.f32 %v3002, %v3077
        %v3121 = vsub.f32 %v3004, %v3077
        %v3122 = vsub.f32 %v3008, %v3080
        %v3123 = vsub.f32 %v3010, %v3080
        %v3124 = vsub.f32 %v3012, %v3083
        %v3125 = vsub.f32 %v3014, %v3083
        %v3126 = vsub.f32 %v3018, %v3086
        %v3127 = vsub.f32 %v3020, %v3086
        %v3128 = vsub.f32 %v3022, %v3089
        %v3129 = vsub.f32 %v3024, %v3089
        %v3130 = vsub.f32 %v3028, %v3092
        %v3131 = vsub.f32 %v3030, %v3092
        %v3132 = vsub.f32 %v3032, %v3095
        %v3133 = vsub.f32 %v3034, %v3095
        %v3134 = vsub.f32 %v3038, %v3098
        %v3135 = vsub.f32 %v3040, %v3098
        %v3136 = vsub.f32 %v3042, %v3101
        %v3137 = vsub.f32 %v3044, %v3101
        %v3138 = vsub.f32 %v3048, %v3104
        %v3139 = vsub.f32 %v3050, %v3104
        %v3140 = vsub.f32 %v3052, %v3107
        %v3141 = vsub.f32 %v3054, %v3107
        %v3142 = vsub.f32 %v3058, %v3110
        %v3143 = vsub.f32 %v3060, %v3110
        %v3144 = vsub.f32 %v3062, %v3113
        %v3145 = vsub.f32 %v3064, %v3113
        %v3146 = vmul.f32 %v3114, 1.442695
        %v3147 = vpow.pop %v3146
        %v3148 = vmul.f32 %v3115, 1.442695
        %v3149 = vpow.pop %v3148
        %v3150 = vmul.f32 %v3116, 1.442695
        %v3151 = vpow.pop %v3150
        %v3152 = vmul.f32 %v3117, 1.442695
        %v3153 = vpow.pop %v3152
        %v3154 = vmul.f32 %v3118, 1.442695
        %v3155 = vpow.pop %v3154
        %v3156 = vmul.f32 %v3119, 1.442695
        %v3157 = vpow.pop %v3156
        %v3158 = vmul.f32 %v3120, 1.442695
        %v3159 = vpow.pop %v3158
        %v3160 = vmul.f32 %v3121, 1.442695
        %v3161 = vpow.pop %v3160
        %v3162 = vmul.f32 %v3122, 1.442695
        %v3163 = vpow.pop %v3162
        %v3164 = vmul.f32 %v3123, 1.442695
        %v3165 = vpow.pop %v3164
        %v3166 = vmul.f32 %v3124, 1.442695
        %v3167 = vpow.pop %v3166
        %v3168 = vmul.f32 %v3125, 1.442695
        %v3169 = vpow.pop %v3168
        %v3170 = vmul.f32 %v3126, 1.442695
        %v3171 = vpow.pop %v3170
        %v3172 = vmul.f32 %v3127, 1.442695
        %v3173 = vpow.pop %v3172
        %v3174 = vmul.f32 %v3128, 1.442695
        %v3175 = vpow.pop %v3174
        %v3176 = vmul.f32 %v3129, 1.442695
        %v3177 = vpow.pop %v3176
        %v3178 = vmul.f32 %v3130, 1.442695
        %v3179 = vpow.pop %v3178
        %v3180 = vmul.f32 %v3131, 1.442695
        %v3181 = vpow.pop %v3180
        %v3182 = vmul.f32 %v3132, 1.442695
        %v3183 = vpow.pop %v3182
        %v3184 = vmul.f32 %v3133, 1.442695
        %v3185 = vpow.pop %v3184
        %v3186 = vmul.f32 %v3134, 1.442695
        %v3187 = vpow.pop %v3186
        %v3188 = vmul.f32 %v3135, 1.442695
        %v3189 = vpow.pop %v3188
        %v3190 = vmul.f32 %v3136, 1.442695
        %v3191 = vpow.pop %v3190
        %v3192 = vmul.f32 %v3137, 1.442695
        %v3193 = vpow.pop %v3192
        %v3194 = vmul.f32 %v3138, 1.442695
        %v3195 = vpow.pop %v3194
        %v3196 = vmul.f32 %v3139, 1.442695
        %v3197 = vpow.pop %v3196
        %v3198 = vmul.f32 %v3140, 1.442695
        %v3199 = vpow.pop %v3198
        %v3200 = vmul.f32 %v3141, 1.442695
        %v3201 = vpow.pop %v3200
        %v3202 = vmul.f32 %v3142, 1.442695
        %v3203 = vpow.pop %v3202
        %v3204 = vmul.f32 %v3143, 1.442695
        %v3205 = vpow.pop %v3204
        %v3206 = vmul.f32 %v3144, 1.442695
        %v3207 = vpow.pop %v3206
        %v3208 = vmul.f32 %v3145, 1.442695
        %v3209 = vpow.pop %v3208
        %v3210 = vadd.f32 %v3147, %v3149
        %3211 = vadd.xlane.f32.xlu0 %v3210
        %v3212 = vpop.xlane.xlu0 %3211
        %v3213 = vadd.f32 %v3151, %v3153
        %3214 = vadd.xlane.f32.xlu0 %v3213
        %v3215 = vpop.xlane.xlu0 %3214
        %v3216 = vadd.f32 %v3155, %v3157
        %3217 = vadd.xlane.f32.xlu0 %v3216
        %v3218 = vpop.xlane.xlu0 %3217
        %v3219 = vadd.f32 %v3159, %v3161
        %3220 = vadd.xlane.f32.xlu0 %v3219
        %v3221 = vpop.xlane.xlu0 %3220
        %v3222 = vadd.f32 %v3163, %v3165
        %3223 = vadd.xlane.f32.xlu0 %v3222
        %v3224 = vpop.xlane.xlu0 %3223
        %v3225 = vadd.f32 %v3167, %v3169
        %3226 = vadd.xlane.f32.xlu0 %v3225
        %v3227 = vpop.xlane.xlu0 %3226
        %v3228 = vadd.f32 %v3171, %v3173
        %3229 = vadd.xlane.f32.xlu0 %v3228
        %v3230 = vpop.xlane.xlu0 %3229
        %v3231 = vadd.f32 %v3175, %v3177
        %3232 = vadd.xlane.f32.xlu0 %v3231
        %v3233 = vpop.xlane.xlu0 %3232
        %v3234 = vadd.f32 %v3179, %v3181
        %3235 = vadd.xlane.f32.xlu0 %v3234
        %v3236 = vpop.xlane.xlu0 %3235
        %v3237 = vadd.f32 %v3183, %v3185
        %3238 = vadd.xlane.f32.xlu0 %v3237
        %v3239 = vpop.xlane.xlu0 %3238
        %v3240 = vadd.f32 %v3187, %v3189
        %3241 = vadd.xlane.f32.xlu0 %v3240
        %v3242 = vpop.xlane.xlu0 %3241
        %v3243 = vadd.f32 %v3191, %v3193
        %3244 = vadd.xlane.f32.xlu0 %v3243
        %v3245 = vpop.xlane.xlu0 %3244
        %v3246 = vadd.f32 %v3195, %v3197
        %3247 = vadd.xlane.f32.xlu0 %v3246
        %v3248 = vpop.xlane.xlu0 %3247
        %v3249 = vadd.f32 %v3199, %v3201
        %3250 = vadd.xlane.f32.xlu0 %v3249
        %v3251 = vpop.xlane.xlu0 %3250
        %v3252 = vadd.f32 %v3203, %v3205
        %3253 = vadd.xlane.f32.xlu0 %v3252
        %v3254 = vpop.xlane.xlu0 %3253
        %v3255 = vadd.f32 %v3207, %v3209
        %3256 = vadd.xlane.f32.xlu0 %v3255
        %v3257 = vpop.xlane.xlu0 %3256
        %v3258 = vrcp.pop %v3212
        %v3259 = vrcp.pop %v3215
        %v3260 = vrcp.pop %v3218
        %v3261 = vrcp.pop %v3221
        %v3262 = vrcp.pop %v3224
        %v3263 = vrcp.pop %v3227
        %v3264 = vrcp.pop %v3230
        %v3265 = vrcp.pop %v3233
        %v3266 = vrcp.pop %v3236
        %v3267 = vrcp.pop %v3239
        %v3268 = vrcp.pop %v3242
        %v3269 = vrcp.pop %v3245
        %v3270 = vrcp.pop %v3248
        %v3271 = vrcp.pop %v3251
        %v3272 = vrcp.pop %v3254
        %v3273 = vrcp.pop %v3257
        %v3274 = vmul.f32 %v3147, %v3258
        %v3275 = vmul.f32 %v3149, %v3258
        %v3276 = vmul.f32 %v3151, %v3259
        %v3277 = vmul.f32 %v3153, %v3259
        %v3278 = vmul.f32 %v3155, %v3260
        %v3279 = vmul.f32 %v3157, %v3260
        %v3280 = vmul.f32 %v3159, %v3261
        %v3281 = vmul.f32 %v3161, %v3261
        %v3282 = vmul.f32 %v3163, %v3262
        %v3283 = vmul.f32 %v3165, %v3262
        %v3284 = vmul.f32 %v3167, %v3263
        %v3285 = vmul.f32 %v3169, %v3263
        %v3286 = vmul.f32 %v3171, %v3264
        %v3287 = vmul.f32 %v3173, %v3264
        %v3288 = vmul.f32 %v3175, %v3265
        %v3289 = vmul.f32 %v3177, %v3265
        %v3290 = vmul.f32 %v3179, %v3266
        %v3291 = vmul.f32 %v3181, %v3266
        %v3292 = vmul.f32 %v3183, %v3267
        %v3293 = vmul.f32 %v3185, %v3267
        %v3294 = vmul.f32 %v3187, %v3268
        %v3295 = vmul.f32 %v3189, %v3268
        %v3296 = vmul.f32 %v3191, %v3269
        %v3297 = vmul.f32 %v3193, %v3269
        %v3298 = vmul.f32 %v3195, %v3270
        %v3299 = vmul.f32 %v3197, %v3270
        %v3300 = vmul.f32 %v3199, %v3271
        %v3301 = vmul.f32 %v3201, %v3271
        %v3302 = vmul.f32 %v3203, %v3272
        %v3303 = vmul.f32 %v3205, %v3272
        %v3304 = vmul.f32 %v3207, %v3273
        %v3305 = vmul.f32 %v3209, %v3273
        %v3306 = vpack.c.bf16 %v3276, %v3274
        %v3307 = vpack.c.bf16 %v3277, %v3275
        %v3308 = vpack.c.bf16 %v3280, %v3278
        %v3309 = vpack.c.bf16 %v3281, %v3279
        %v3310 = vpack.c.bf16 %v3284, %v3282
        %v3311 = vpack.c.bf16 %v3285, %v3283
        %v3312 = vpack.c.bf16 %v3288, %v3286
        %v3313 = vpack.c.bf16 %v3289, %v3287
        %v3314 = vpack.c.bf16 %v3292, %v3290
        %v3315 = vpack.c.bf16 %v3293, %v3291
        %v3316 = vpack.c.bf16 %v3296, %v3294
        %v3317 = vpack.c.bf16 %v3297, %v3295
        %v3318 = vpack.c.bf16 %v3300, %v3298
        %v3319 = vpack.c.bf16 %v3301, %v3299
        %v3320 = vpack.c.bf16 %v3304, %v3302
        %v3321 = vpack.c.bf16 %v3305, %v3303
        %3322 = vmatprep.subr.bf16.mxu0 0
        %3323 = vmatpush1.bf16.msra.mxu0 %v2937
        %3324 = vmatprep.subr.bf16.mxu0 0
        %3325 = vmatpush1.bf16.msra.mxu0 %v2938
        %3326 = vmatprep.subr.bf16.mxu0 0
        %3327 = vmatpush1.bf16.msra.mxu0 %v2939
        %3328 = vmatprep.subr.bf16.mxu0 0
        %3329 = vmatpush1.bf16.msra.mxu0 %v2940
        %3330 = vmatprep.subr.bf16.mxu0 0
        %3331 = vmatpush1.bf16.msra.mxu0 %v2941
        %3332 = vmatprep.subr.bf16.mxu0 0
        %3333 = vmatpush1.bf16.msra.mxu0 %v2942
        %3334 = vmatprep.subr.bf16.mxu0 0
        %3335 = vmatpush1.bf16.msra.mxu0 %v2943
        %3336 = vmatprep.subr.bf16.mxu0 0
        %3337 = vmatpush1.bf16.msra.mxu0 %v2944
        %3338 = vmatprep.subr.bf16.mxu0 0
        %3339 = vmatpush1.bf16.msra.mxu0 %v2945
        %3340 = vmatprep.subr.bf16.mxu0 0
        %3341 = vmatpush1.bf16.msra.mxu0 %v2946
        %3342 = vmatprep.subr.bf16.mxu0 0
        %3343 = vmatpush1.bf16.msra.mxu0 %v2947
        %3344 = vmatprep.subr.bf16.mxu0 0
        %3345 = vmatpush1.bf16.msra.mxu0 %v2948
        %3346 = vmatprep.subr.bf16.mxu0 0
        %3347 = vmatpush1.bf16.msra.mxu0 %v2949
        %3348 = vmatprep.subr.bf16.mxu0 0
        %3349 = vmatpush1.bf16.msra.mxu0 %v2950
        %3350 = vmatprep.subr.bf16.mxu0 0
        %3351 = vmatpush1.bf16.msra.mxu0 %v2951
        %3352 = vmatprep.subr.bf16.mxu0 0
        %3353 = vmatpush1.bf16.msra.mxu0 %v2952
        %3354 = vmatprep.mubr.bf16.mxu0 %v3307
        %3355 = vmatmul.mubr.bf16.gmra.mrb[0].mxu0 %v3306
        %v3356 = vpop.f32.mrb[0].mxu0
        %v3357 = vadd.f32 0.0, %v3356
        %v3358 = vpop.f32.mrb[0].mxu0
        %v3359 = vpop.f32.mrb[0].mxu0
        %v3360 = vadd.f32 0.0, %v3359
        %v3361 = vpop.f32.mrb[0].mxu0
        %3362 = vmatprep.mubr.bf16.mxu0 %v3309
        %3363 = vmatmul.mubr.bf16.gmra.mrb[0].mxu0 %v3308
        %v3364 = vpop.f32.mrb[0].mxu0
        %v3365 = vadd.f32 0.0, %v3364
        %v3366 = vpop.f32.mrb[0].mxu0
        %v3367 = vpop.f32.mrb[0].mxu0
        %v3368 = vadd.f32 0.0, %v3367
        %v3369 = vpop.f32.mrb[0].mxu0
        %3370 = vmatprep.mubr.bf16.mxu0 %v3311
        %3371 = vmatmul.mubr.bf16.gmra.mrb[0].mxu0 %v3310
        %v3372 = vpop.f32.mrb[0].mxu0
        %v3373 = vadd.f32 0.0, %v3372
        %v3374 = vpop.f32.mrb[0].mxu0
        %v3375 = vpop.f32.mrb[0].mxu0
        %v3376 = vadd.f32 0.0, %v3375
        %v3377 = vpop.f32.mrb[0].mxu0
        %3378 = vmatprep.mubr.bf16.mxu0 %v3313
        %3379 = vmatmul.mubr.bf16.gmra.mrb[0].mxu0 %v3312
        %v3380 = vpop.f32.mrb[0].mxu0
        %v3381 = vadd.f32 0.0, %v3380
        %v3382 = vpop.f32.mrb[0].mxu0
        %v3383 = vpop.f32.mrb[0].mxu0
        %v3384 = vadd.f32 0.0, %v3383
        %v3385 = vpop.f32.mrb[0].mxu0
        %3386 = vmatprep.mubr.bf16.mxu0 %v3315
        %3387 = vmatmul.mubr.bf16.gmra.mrb[0].mxu0 %v3314
        %v3388 = vpop.f32.mrb[0].mxu0
        %v3389 = vadd.f32 0.0, %v3388
        %v3390 = vpop.f32.mrb[0].mxu0
        %v3391 = vpop.f32.mrb[0].mxu0
        %v3392 = vadd.f32 0.0, %v3391
        %v3393 = vpop.f32.mrb[0].mxu0
        %3394 = vmatprep.mubr.bf16.mxu0 %v3317
        %3395 = vmatmul.mubr.bf16.gmra.mrb[0].mxu0 %v3316
        %v3396 = vpop.f32.mrb[0].mxu0
        %v3397 = vadd.f32 0.0, %v3396
        %v3398 = vpop.f32.mrb[0].mxu0
        %v3399 = vpop.f32.mrb[0].mxu0
        %v3400 = vadd.f32 0.0, %v3399
        %v3401 = vpop.f32.mrb[0].mxu0
        %3402 = vmatprep.mubr.bf16.mxu0 %v3319
        %3403 = vmatmul.mubr.bf16.gmra.mrb[0].mxu0 %v3318
        %v3404 = vpop.f32.mrb[0].mxu0
        %v3405 = vadd.f32 0.0, %v3404
        %v3406 = vpop.f32.mrb[0].mxu0
        %v3407 = vpop.f32.mrb[0].mxu0
        %v3408 = vadd.f32 0.0, %v3407
        %v3409 = vpop.f32.mrb[0].mxu0
        %3410 = vmatprep.mubr.bf16.mxu0 %v3321
        %3411 = vmatmul.mubr.bf16.gmra.mrb[0].mxu0 %v3320
        %v3412 = vpop.f32.mrb[0].mxu0
        %v3413 = vadd.f32 0.0, %v3412
        %v3414 = vpop.f32.mrb[0].mxu0
        %v3415 = vpop.f32.mrb[0].mxu0
        %v3416 = vadd.f32 0.0, %v3415
        %v3417 = vpop.f32.mrb[0].mxu0
        %3418 = vdwg.mxu0
        %v3419 = vpack.c.bf16 %v3360, %v3357
        %v3420 = vpack.c.bf16 %v3368, %v3365
        %v3421 = vpack.c.bf16 %v3376, %v3373
        %v3422 = vpack.c.bf16 %v3384, %v3381
        %v3423 = vpack.c.bf16 %v3392, %v3389
        %v3424 = vpack.c.bf16 %v3400, %v3397
        %v3425 = vpack.c.bf16 %v3408, %v3405
        %v3426 = vpack.c.bf16 %v3416, %v3413
        %v3427 = vpack.c.bf16 %v2852, %v2850
        %v3428 = vpack.c.bf16 %v2856, %v2854
        %v3429 = vpack.c.bf16 %v2860, %v2858
        %v3430 = vpack.c.bf16 %v2864, %v2862
        %v3431 = vpack.c.bf16 %v2868, %v2866
        %v3432 = vpack.c.bf16 %v2872, %v2870
        %v3433 = vpack.c.bf16 %v2876, %v2874
        %v3434 = vpack.c.bf16 %v2880, %v2878
        %v3435 = vpack.c.bf16 %v2300, %v2296
        %v3436 = vpack.c.bf16 %v2310, %v2306
        %v3437 = vpack.c.bf16 %v2320, %v2316
        %v3438 = vpack.c.bf16 %v2330, %v2326
        %v3439 = vpack.c.bf16 %v2340, %v2336
        %v3440 = vpack.c.bf16 %v2350, %v2346
        %v3441 = vpack.c.bf16 %v2360, %v2356
        %v3442 = vpack.c.bf16 %v2370, %v2366
        %v3443 = vpack.c.bf16 %v2380, %v2376
        %v3444 = vpack.c.bf16 %v2390, %v2386
        %v3445 = vpack.c.bf16 %v2400, %v2396
        %v3446 = vpack.c.bf16 %v2410, %v2406
        %v3447 = vpack.c.bf16 %v2420, %v2416
        %v3448 = vpack.c.bf16 %v2430, %v2426
        %v3449 = vpack.c.bf16 %v2440, %v2436
        %v3450 = vpack.c.bf16 %v2450, %v2446
        %v3451 = vpack.c.bf16 %v2697, %v2693
        %v3452 = vpack.c.bf16 %v2707, %v2703
        %v3453 = vpack.c.bf16 %v2717, %v2713
        %v3454 = vpack.c.bf16 %v2727, %v2723
        %v3455 = vpack.c.bf16 %v2737, %v2733
        %v3456 = vpack.c.bf16 %v2747, %v2743
        %v3457 = vpack.c.bf16 %v2757, %v2753
        %v3458 = vpack.c.bf16 %v2767, %v2763
        %v3459 = vpack.c.bf16 %v2777, %v2773
        %v3460 = vpack.c.bf16 %v2787, %v2783
        %v3461 = vpack.c.bf16 %v2797, %v2793
        %v3462 = vpack.c.bf16 %v2807, %v2803
        %v3463 = vpack.c.bf16 %v2817, %v2813
        %v3464 = vpack.c.bf16 %v2827, %v2823
        %v3465 = vpack.c.bf16 %v2837, %v2833
        %v3466 = vpack.c.bf16 %v2847, %v2843
        %3467 = vmatprep.subr.bf16.mxu0 0
        %3468 = vmatpush1.bf16.xpose.msra.mxu0 %v3435
        %3469 = vmatprep.subr.bf16.mxu0 0
        %3470 = vmatpush1.bf16.xpose.msra.mxu0 %v3436
        %3471 = vmatprep.subr.bf16.mxu0 0
        %3472 = vmatpush1.bf16.xpose.msra.mxu0 %v3437
        %3473 = vmatprep.subr.bf16.mxu0 0
        %3474 = vmatpush1.bf16.xpose.msra.mxu0 %v3438
        %3475 = vmatprep.subr.bf16.mxu0 0
        %3476 = vmatpush1.bf16.xpose.msra.mxu0 %v3439
        %3477 = vmatprep.subr.bf16.mxu0 0
        %3478 = vmatpush1.bf16.xpose.msra.mxu0 %v3440
        %3479 = vmatprep.subr.bf16.mxu0 0
        %3480 = vmatpush1.bf16.xpose.msra.mxu0 %v3441
        %3481 = vmatprep.subr.bf16.mxu0 0
        %3482 = vmatpush1.bf16.xpose.msra.mxu0 %v3442
        %3483 = vmatprep.subr.bf16.mxu0 0
        %3484 = vmatpush1.bf16.xpose.msra.mxu0 %v3443
        %3485 = vmatprep.subr.bf16.mxu0 0
        %3486 = vmatpush1.bf16.xpose.msra.mxu0 %v3444
        %3487 = vmatprep.subr.bf16.mxu0 0
        %3488 = vmatpush1.bf16.xpose.msra.mxu0 %v3445
        %3489 = vmatprep.subr.bf16.mxu0 0
        %3490 = vmatpush1.bf16.xpose.msra.mxu0 %v3446
        %3491 = vmatprep.subr.bf16.mxu0 0
        %3492 = vmatpush1.bf16.xpose.msra.mxu0 %v3447
        %3493 = vmatprep.subr.bf16.mxu0 0
        %3494 = vmatpush1.bf16.xpose.msra.mxu0 %v3448
        %3495 = vmatprep.subr.bf16.mxu0 0
        %3496 = vmatpush1.bf16.xpose.msra.mxu0 %v3449
        %3497 = vmatprep.subr.bf16.mxu0 0
        %3498 = vmatpush1.bf16.xpose.msra.mxu0 %v3450
        %3499 = vmatprep.mubr.bf16.mxu0 0
        %3500 = vmatmul.mubr.bf16.gmra.mrb[0].mxu0 %v3427
        %v3501 = vpop.f32.mrb[0].mxu0
        %v3502 = vadd.f32 0.0, %v3501
        %v3503 = vpop.f32.mrb[0].mxu0
        %v3504 = vadd.f32 0.0, %v3503
        %v3505 = vpop.f32.mrb[0].mxu0
        %v3506 = vadd.f32 0.0, %v3505
        %v3507 = vpop.f32.mrb[0].mxu0
        %v3508 = vadd.f32 0.0, %v3507
        %3509 = vmatprep.mubr.bf16.mxu0 0
        %3510 = vmatmul.mubr.bf16.gmra.mrb[0].mxu0 %v3428
        %v3511 = vpop.f32.mrb[0].mxu0
        %v3512 = vadd.f32 0.0, %v3511
        %v3513 = vpop.f32.mrb[0].mxu0
        %v3514 = vadd.f32 0.0, %v3513
        %v3515 = vpop.f32.mrb[0].mxu0
        %v3516 = vadd.f32 0.0, %v3515
        %v3517 = vpop.f32.mrb[0].mxu0
        %v3518 = vadd.f32 0.0, %v3517
        %3519 = vmatprep.mubr.bf16.mxu0 0
        %3520 = vmatmul.mubr.bf16.gmra.mrb[0].mxu0 %v3429
        %v3521 = vpop.f32.mrb[0].mxu0
        %v3522 = vadd.f32 0.0, %v3521
        %v3523 = vpop.f32.mrb[0].mxu0
        %v3524 = vadd.f32 0.0, %v3523
        %v3525 = vpop.f32.mrb[0].mxu0
        %v3526 = vadd.f32 0.0, %v3525
        %v3527 = vpop.f32.mrb[0].mxu0
        %v3528 = vadd.f32 0.0, %v3527
        %3529 = vmatprep.mubr.bf16.mxu0 0
        %3530 = vmatmul.mubr.bf16.gmra.mrb[0].mxu0 %v3430
        %v3531 = vpop.f32.mrb[0].mxu0
        %v3532 = vadd.f32 0.0, %v3531
        %v3533 = vpop.f32.mrb[0].mxu0
        %v3534 = vadd.f32 0.0, %v3533
        %v3535 = vpop.f32.mrb[0].mxu0
        %v3536 = vadd.f32 0.0, %v3535
        %v3537 = vpop.f32.mrb[0].mxu0
        %v3538 = vadd.f32 0.0, %v3537
        %3539 = vmatprep.mubr.bf16.mxu0 0
        %3540 = vmatmul.mubr.bf16.gmra.mrb[0].mxu0 %v3431
        %v3541 = vpop.f32.mrb[0].mxu0
        %v3542 = vadd.f32 0.0, %v3541
        %v3543 = vpop.f32.mrb[0].mxu0
        %v3544 = vadd.f32 0.0, %v3543
        %v3545 = vpop.f32.mrb[0].mxu0
        %v3546 = vadd.f32 0.0, %v3545
        %v3547 = vpop.f32.mrb[0].mxu0
        %v3548 = vadd.f32 0.0, %v3547
        %3549 = vmatprep.mubr.bf16.mxu0 0
        %3550 = vmatmul.mubr.bf16.gmra.mrb[0].mxu0 %v3432
        %v3551 = vpop.f32.mrb[0].mxu0
        %v3552 = vadd.f32 0.0, %v3551
        %v3553 = vpop.f32.mrb[0].mxu0
        %v3554 = vadd.f32 0.0, %v3553
        %v3555 = vpop.f32.mrb[0].mxu0
        %v3556 = vadd.f32 0.0, %v3555
        %v3557 = vpop.f32.mrb[0].mxu0
        %v3558 = vadd.f32 0.0, %v3557
        %3559 = vmatprep.mubr.bf16.mxu0 0
        %3560 = vmatmul.mubr.bf16.gmra.mrb[0].mxu0 %v3433
        %v3561 = vpop.f32.mrb[0].mxu0
        %v3562 = vadd.f32 0.0, %v3561
        %v3563 = vpop.f32.mrb[0].mxu0
        %v3564 = vadd.f32 0.0, %v3563
        %v3565 = vpop.f32.mrb[0].mxu0
        %v3566 = vadd.f32 0.0, %v3565
        %v3567 = vpop.f32.mrb[0].mxu0
        %v3568 = vadd.f32 0.0, %v3567
        %3569 = vmatprep.mubr.bf16.mxu0 0
        %3570 = vmatmul.mubr.bf16.gmra.mrb[0].mxu0 %v3434
        %v3571 = vpop.f32.mrb[0].mxu0
        %v3572 = vadd.f32 0.0, %v3571
        %v3573 = vpop.f32.mrb[0].mxu0
        %v3574 = vadd.f32 0.0, %v3573
        %v3575 = vpop.f32.mrb[0].mxu0
        %v3576 = vadd.f32 0.0, %v3575
        %v3577 = vpop.f32.mrb[0].mxu0
        %v3578 = vadd.f32 0.0, %v3577
        %3579 = vdwg.mxu0
        %v3580 = vmax.f32 %v3502, %v3504
        %3581 = vmax.xlane.f32.xlu0 %v3580
        %v3582 = vpop.xlane.xlu0 %3581
        %v3583 = vmax.f32 %v3506, %v3508
        %3584 = vmax.xlane.f32.xlu0 %v3583
        %v3585 = vpop.xlane.xlu0 %3584
        %v3586 = vmax.f32 %v3512, %v3514
        %3587 = vmax.xlane.f32.xlu0 %v3586
        %v3588 = vpop.xlane.xlu0 %3587
        %v3589 = vmax.f32 %v3516, %v3518
        %3590 = vmax.xlane.f32.xlu0 %v3589
        %v3591 = vpop.xlane.xlu0 %3590
        %v3592 = vmax.f32 %v3522, %v3524
        %3593 = vmax.xlane.f32.xlu0 %v3592
        %v3594 = vpop.xlane.xlu0 %3593
        %v3595 = vmax.f32 %v3526, %v3528
        %3596 = vmax.xlane.f32.xlu0 %v3595
        %v3597 = vpop.xlane.xlu0 %3596
        %v3598 = vmax.f32 %v3532, %v3534
        %3599 = vmax.xlane.f32.xlu0 %v3598
        %v3600 = vpop.xlane.xlu0 %3599
        %v3601 = vmax.f32 %v3536, %v3538
        %3602 = vmax.xlane.f32.xlu0 %v3601
        %v3603 = vpop.xlane.xlu0 %3602
        %v3604 = vmax.f32 %v3542, %v3544
        %3605 = vmax.xlane.f32.xlu0 %v3604
        %v3606 = vpop.xlane.xlu0 %3605
        %v3607 = vmax.f32 %v3546, %v3548
        %3608 = vmax.xlane.f32.xlu0 %v3607
        %v3609 = vpop.xlane.xlu0 %3608
        %v3610 = vmax.f32 %v3552, %v3554
        %3611 = vmax.xlane.f32.xlu0 %v3610
        %v3612 = vpop.xlane.xlu0 %3611
        %v3613 = vmax.f32 %v3556, %v3558
        %3614 = vmax.xlane.f32.xlu0 %v3613
        %v3615 = vpop.xlane.xlu0 %3614
        %v3616 = vmax.f32 %v3562, %v3564
        %3617 = vmax.xlane.f32.xlu0 %v3616
        %v3618 = vpop.xlane.xlu0 %3617
        %v3619 = vmax.f32 %v3566, %v3568
        %3620 = vmax.xlane.f32.xlu0 %v3619
        %v3621 = vpop.xlane.xlu0 %3620
        %v3622 = vmax.f32 %v3572, %v3574
        %3623 = vmax.xlane.f32.xlu0 %v3622
        %v3624 = vpop.xlane.xlu0 %3623
        %v3625 = vmax.f32 %v3576, %v3578
        %3626 = vmax.xlane.f32.xlu0 %v3625
        %v3627 = vpop.xlane.xlu0 %3626
        %v3628 = vsub.f32 %v3502, %v3582
        %v3629 = vsub.f32 %v3504, %v3582
        %v3630 = vsub.f32 %v3506, %v3585
        %v3631 = vsub.f32 %v3508, %v3585
        %v3632 = vsub.f32 %v3512, %v3588
        %v3633 = vsub.f32 %v3514, %v3588
        %v3634 = vsub.f32 %v3516, %v3591
        %v3635 = vsub.f32 %v3518, %v3591
        %v3636 = vsub.f32 %v3522, %v3594
        %v3637 = vsub.f32 %v3524, %v3594
        %v3638 = vsub.f32 %v3526, %v3597
        %v3639 = vsub.f32 %v3528, %v3597
        %v3640 = vsub.f32 %v3532, %v3600
        %v3641 = vsub.f32 %v3534, %v3600
        %v3642 = vsub.f32 %v3536, %v3603
        %v3643 = vsub.f32 %v3538, %v3603
        %v3644 = vsub.f32 %v3542, %v3606
        %v3645 = vsub.f32 %v3544, %v3606
        %v3646 = vsub.f32 %v3546, %v3609
        %v3647 = vsub.f32 %v3548, %v3609
        %v3648 = vsub.f32 %v3552, %v3612
        %v3649 = vsub.f32 %v3554, %v3612
        %v3650 = vsub.f32 %v3556, %v3615
        %v3651 = vsub.f32 %v3558, %v3615
        %v3652 = vsub.f32 %v3562, %v3618
        %v3653 = vsub.f32 %v3564, %v3618
        %v3654 = vsub.f32 %v3566, %v3621
        %v3655 = vsub.f32 %v3568, %v3621
        %v3656 = vsub.f32 %v3572, %v3624
        %v3657 = vsub.f32 %v3574, %v3624
        %v3658 = vsub.f32 %v3576, %v3627
        %v3659 = vsub.f32 %v3578, %v3627
        %v3660 = vmul.f32 %v3628, 1.442695
        %v3661 = vpow.pop %v3660
        %v3662 = vmul.f32 %v3629, 1.442695
        %v3663 = vpow.pop %v3662
        %v3664 = vmul.f32 %v3630, 1.442695
        %v3665 = vpow.pop %v3664
        %v3666 = vmul.f32 %v3631, 1.442695
        %v3667 = vpow.pop %v3666
        %v3668 = vmul.f32 %v3632, 1.442695
        %v3669 = vpow.pop %v3668
        %v3670 = vmul.f32 %v3633, 1.442695
        %v3671 = vpow.pop %v3670
        %v3672 = vmul.f32 %v3634, 1.442695
        %v3673 = vpow.pop %v3672
        %v3674 = vmul.f32 %v3635, 1.442695
        %v3675 = vpow.pop %v3674
        %v3676 = vmul.f32 %v3636, 1.442695
        %v3677 = vpow.pop %v3676
        %v3678 = vmul.f32 %v3637, 1.442695
        %v3679 = vpow.pop %v3678
        %v3680 = vmul.f32 %v3638, 1.442695
        %v3681 = vpow.pop %v3680
        %v3682 = vmul.f32 %v3639, 1.442695
        %v3683 = vpow.pop %v3682
        %v3684 = vmul.f32 %v3640, 1.442695
        %v3685 = vpow.pop %v3684
        %v3686 = vmul.f32 %v3641, 1.442695
        %v3687 = vpow.pop %v3686
        %v3688 = vmul.f32 %v3642, 1.442695
        %v3689 = vpow.pop %v3688
        %v3690 = vmul.f32 %v3643, 1.442695
        %v3691 = vpow.pop %v3690
        %v3692 = vmul.f32 %v3644, 1.442695
        %v3693 = vpow.pop %v3692
        %v3694 = vmul.f32 %v3645, 1.442695
        %v3695 = vpow.pop %v3694
        %v3696 = vmul.f32 %v3646, 1.442695
        %v3697 = vpow.pop %v3696
        %v3698 = vmul.f32 %v3647, 1.442695
        %v3699 = vpow.pop %v3698
        %v3700 = vmul.f32 %v3648, 1.442695
        %v3701 = vpow.pop %v3700
        %v3702 = vmul.f32 %v3649, 1.442695
        %v3703 = vpow.pop %v3702
        %v3704 = vmul.f32 %v3650, 1.442695
        %v3705 = vpow.pop %v3704
        %v3706 = vmul.f32 %v3651, 1.442695
        %v3707 = vpow.pop %v3706
        %v3708 = vmul.f32 %v3652, 1.442695
        %v3709 = vpow.pop %v3708
        %v3710 = vmul.f32 %v3653, 1.442695
        %v3711 = vpow.pop %v3710
        %v3712 = vmul.f32 %v3654, 1.442695
        %v3713 = vpow.pop %v3712
        %v3714 = vmul.f32 %v3655, 1.442695
        %v3715 = vpow.pop %v3714
        %v3716 = vmul.f32 %v3656, 1.442695
        %v3717 = vpow.pop %v3716
        %v3718 = vmul.f32 %v3657, 1.442695
        %v3719 = vpow.pop %v3718
        %v3720 = vmul.f32 %v3658, 1.442695
        %v3721 = vpow.pop %v3720
        %v3722 = vmul.f32 %v3659, 1.442695
        %v3723 = vpow.pop %v3722
        %v3724 = vadd.f32 %v3661, %v3663
        %3725 = vadd.xlane.f32.xlu0 %v3724
        %v3726 = vpop.xlane.xlu0 %3725
        %v3727 = vadd.f32 %v3665, %v3667
        %3728 = vadd.xlane.f32.xlu0 %v3727
        %v3729 = vpop.xlane.xlu0 %3728
        %v3730 = vadd.f32 %v3669, %v3671
        %3731 = vadd.xlane.f32.xlu0 %v3730
        %v3732 = vpop.xlane.xlu0 %3731
        %v3733 = vadd.f32 %v3673, %v3675
        %3734 = vadd.xlane.f32.xlu0 %v3733
        %v3735 = vpop.xlane.xlu0 %3734
        %v3736 = vadd.f32 %v3677, %v3679
        %3737 = vadd.xlane.f32.xlu0 %v3736
        %v3738 = vpop.xlane.xlu0 %3737
        %v3739 = vadd.f32 %v3681, %v3683
        %3740 = vadd.xlane.f32.xlu0 %v3739
        %v3741 = vpop.xlane.xlu0 %3740
        %v3742 = vadd.f32 %v3685, %v3687
        %3743 = vadd.xlane.f32.xlu0 %v3742
        %v3744 = vpop.xlane.xlu0 %3743
        %v3745 = vadd.f32 %v3689, %v3691
        %3746 = vadd.xlane.f32.xlu0 %v3745
        %v3747 = vpop.xlane.xlu0 %3746
        %v3748 = vadd.f32 %v3693, %v3695
        %3749 = vadd.xlane.f32.xlu0 %v3748
        %v3750 = vpop.xlane.xlu0 %3749
        %v3751 = vadd.f32 %v3697, %v3699
        %3752 = vadd.xlane.f32.xlu0 %v3751
        %v3753 = vpop.xlane.xlu0 %3752
        %v3754 = vadd.f32 %v3701, %v3703
        %3755 = vadd.xlane.f32.xlu0 %v3754
        %v3756 = vpop.xlane.xlu0 %3755
        %v3757 = vadd.f32 %v3705, %v3707
        %3758 = vadd.xlane.f32.xlu0 %v3757
        %v3759 = vpop.xlane.xlu0 %3758
        %v3760 = vadd.f32 %v3709, %v3711
        %3761 = vadd.xlane.f32.xlu0 %v3760
        %v3762 = vpop.xlane.xlu0 %3761
        %v3763 = vadd.f32 %v3713, %v3715
        %3764 = vadd.xlane.f32.xlu0 %v3763
        %v3765 = vpop.xlane.xlu0 %3764
        %v3766 = vadd.f32 %v3717, %v3719
        %3767 = vadd.xlane.f32.xlu0 %v3766
        %v3768 = vpop.xlane.xlu0 %3767
        %v3769 = vadd.f32 %v3721, %v3723
        %3770 = vadd.xlane.f32.xlu0 %v3769
        %v3771 = vpop.xlane.xlu0 %3770
        %v3772 = vrcp.pop %v3726
        %v3773 = vrcp.pop %v3729
        %v3774 = vrcp.pop %v3732
        %v3775 = vrcp.pop %v3735
        %v3776 = vrcp.pop %v3738
        %v3777 = vrcp.pop %v3741
        %v3778 = vrcp.pop %v3744
        %v3779 = vrcp.pop %v3747
        %v3780 = vrcp.pop %v3750
        %v3781 = vrcp.pop %v3753
        %v3782 = vrcp.pop %v3756
        %v3783 = vrcp.pop %v3759
        %v3784 = vrcp.pop %v3762
        %v3785 = vrcp.pop %v3765
        %v3786 = vrcp.pop %v3768
        %v3787 = vrcp.pop %v3771
        %v3788 = vmul.f32 %v3661, %v3772
        %v3789 = vmul.f32 %v3663, %v3772
        %v3790 = vmul.f32 %v3665, %v3773
        %v3791 = vmul.f32 %v3667, %v3773
        %v3792 = vmul.f32 %v3669, %v3774
        %v3793 = vmul.f32 %v3671, %v3774
        %v3794 = vmul.f32 %v3673, %v3775
        %v3795 = vmul.f32 %v3675, %v3775
        %v3796 = vmul.f32 %v3677, %v3776
        %v3797 = vmul.f32 %v3679, %v3776
        %v3798 = vmul.f32 %v3681, %v3777
        %v3799 = vmul.f32 %v3683, %v3777
        %v3800 = vmul.f32 %v3685, %v3778
        %v3801 = vmul.f32 %v3687, %v3778
        %v3802 = vmul.f32 %v3689, %v3779
        %v3803 = vmul.f32 %v3691, %v3779
        %v3804 = vmul.f32 %v3693, %v3780
        %v3805 = vmul.f32 %v3695, %v3780
        %v3806 = vmul.f32 %v3697, %v3781
        %v3807 = vmul.f32 %v3699, %v3781
        %v3808 = vmul.f32 %v3701, %v3782
        %v3809 = vmul.f32 %v3703, %v3782
        %v3810 = vmul.f32 %v3705, %v3783
        %v3811 = vmul.f32 %v3707, %v3783
        %v3812 = vmul.f32 %v3709, %v3784
        %v3813 = vmul.f32 %v3711, %v3784
        %v3814 = vmul.f32 %v3713, %v3785
        %v3815 = vmul.f32 %v3715, %v3785
        %v3816 = vmul.f32 %v3717, %v3786
        %v3817 = vmul.f32 %v3719, %v3786
        %v3818 = vmul.f32 %v3721, %v3787
        %v3819 = vmul.f32 %v3723, %v3787
        %v3820 = vpack.c.bf16 %v3790, %v3788
        %v3821 = vpack.c.bf16 %v3791, %v3789
        %v3822 = vpack.c.bf16 %v3794, %v3792
        %v3823 = vpack.c.bf16 %v3795, %v3793
        %v3824 = vpack.c.bf16 %v3798, %v3796
        %v3825 = vpack.c.bf16 %v3799, %v3797
        %v3826 = vpack.c.bf16 %v3802, %v3800
        %v3827 = vpack.c.bf16 %v3803, %v3801
        %v3828 = vpack.c.bf16 %v3806, %v3804
        %v3829 = vpack.c.bf16 %v3807, %v3805
        %v3830 = vpack.c.bf16 %v3810, %v3808
        %v3831 = vpack.c.bf16 %v3811, %v3809
        %v3832 = vpack.c.bf16 %v3814, %v3812
        %v3833 = vpack.c.bf16 %v3815, %v3813
        %v3834 = vpack.c.bf16 %v3818, %v3816
        %v3835 = vpack.c.bf16 %v3819, %v3817
        %3836 = vmatprep.subr.bf16.mxu0 0
        %3837 = vmatpush1.bf16.msra.mxu0 %v3451
        %3838 = vmatprep.subr.bf16.mxu0 0
        %3839 = vmatpush1.bf16.msra.mxu0 %v3452
        %3840 = vmatprep.subr.bf16.mxu0 0
        %3841 = vmatpush1.bf16.msra.mxu0 %v3453
        %3842 = vmatprep.subr.bf16.mxu0 0
        %3843 = vmatpush1.bf16.msra.mxu0 %v3454
        %3844 = vmatprep.subr.bf16.mxu0 0
        %3845 = vmatpush1.bf16.msra.mxu0 %v3455
        %3846 = vmatprep.subr.bf16.mxu0 0
        %3847 = vmatpush1.bf16.msra.mxu0 %v3456
        %3848 = vmatprep.subr.bf16.mxu0 0
        %3849 = vmatpush1.bf16.msra.mxu0 %v3457
        %3850 = vmatprep.subr.bf16.mxu0 0
        %3851 = vmatpush1.bf16.msra.mxu0 %v3458
        %3852 = vmatprep.subr.bf16.mxu0 0
        %3853 = vmatpush1.bf16.msra.mxu0 %v3459
        %3854 = vmatprep.subr.bf16.mxu0 0
        %3855 = vmatpush1.bf16.msra.mxu0 %v3460
        %3856 = vmatprep.subr.bf16.mxu0 0
        %3857 = vmatpush1.bf16.msra.mxu0 %v3461
        %3858 = vmatprep.subr.bf16.mxu0 0
        %3859 = vmatpush1.bf16.msra.mxu0 %v3462
        %3860 = vmatprep.subr.bf16.mxu0 0
        %3861 = vmatpush1.bf16.msra.mxu0 %v3463
        %3862 = vmatprep.subr.bf16.mxu0 0
        %3863 = vmatpush1.bf16.msra.mxu0 %v3464
        %3864 = vmatprep.subr.bf16.mxu0 0
        %3865 = vmatpush1.bf16.msra.mxu0 %v3465
        %3866 = vmatprep.subr.bf16.mxu0 0
        %3867 = vmatpush1.bf16.msra.mxu0 %v3466
        %3868 = vmatprep.mubr.bf16.mxu0 %v3821
        %3869 = vmatmul.mubr.bf16.gmra.mrb[0].mxu0 %v3820
        %v3870 = vpop.f32.mrb[0].mxu0
        %v3871 = vadd.f32 0.0, %v3870
        %v3872 = vpop.f32.mrb[0].mxu0
        %v3873 = vpop.f32.mrb[0].mxu0
        %v3874 = vadd.f32 0.0, %v3873
        %v3875 = vpop.f32.mrb[0].mxu0
        %3876 = vmatprep.mubr.bf16.mxu0 %v3823
        %3877 = vmatmul.mubr.bf16.gmra.mrb[0].mxu0 %v3822
        %v3878 = vpop.f32.mrb[0].mxu0
        %v3879 = vadd.f32 0.0, %v3878
        %v3880 = vpop.f32.mrb[0].mxu0
        %v3881 = vpop.f32.mrb[0].mxu0
        %v3882 = vadd.f32 0.0, %v3881
        %v3883 = vpop.f32.mrb[0].mxu0
        %3884 = vmatprep.mubr.bf16.mxu0 %v3825
        %3885 = vmatmul.mubr.bf16.gmra.mrb[0].mxu0 %v3824
        %v3886 = vpop.f32.mrb[0].mxu0
        %v3887 = vadd.f32 0.0, %v3886
        %v3888 = vpop.f32.mrb[0].mxu0
        %v3889 = vpop.f32.mrb[0].mxu0
        %v3890 = vadd.f32 0.0, %v3889
        %v3891 = vpop.f32.mrb[0].mxu0
        %3892 = vmatprep.mubr.bf16.mxu0 %v3827
        %3893 = vmatmul.mubr.bf16.gmra.mrb[0].mxu0 %v3826
        %v3894 = vpop.f32.mrb[0].mxu0
        %v3895 = vadd.f32 0.0, %v3894
        %v3896 = vpop.f32.mrb[0].mxu0
        %v3897 = vpop.f32.mrb[0].mxu0
        %v3898 = vadd.f32 0.0, %v3897
        %v3899 = vpop.f32.mrb[0].mxu0
        %3900 = vmatprep.mubr.bf16.mxu0 %v3829
        %3901 = vmatmul.mubr.bf16.gmra.mrb[0].mxu0 %v3828
        %v3902 = vpop.f32.mrb[0].mxu0
        %v3903 = vadd.f32 0.0, %v3902
        %v3904 = vpop.f32.mrb[0].mxu0
        %v3905 = vpop.f32.mrb[0].mxu0
        %v3906 = vadd.f32 0.0, %v3905
        %v3907 = vpop.f32.mrb[0].mxu0
        %3908 = vmatprep.mubr.bf16.mxu0 %v3831
        %3909 = vmatmul.mubr.bf16.gmra.mrb[0].mxu0 %v3830
        %v3910 = vpop.f32.mrb[0].mxu0
        %v3911 = vadd.f32 0.0, %v3910
        %v3912 = vpop.f32.mrb[0].mxu0
        %v3913 = vpop.f32.mrb[0].mxu0
        %v3914 = vadd.f32 0.0, %v3913
        %v3915 = vpop.f32.mrb[0].mxu0
        %3916 = vmatprep.mubr.bf16.mxu0 %v3833
        %3917 = vmatmul.mubr.bf16.gmra.mrb[0].mxu0 %v3832
        %v3918 = vpop.f32.mrb[0].mxu0
        %v3919 = vadd.f32 0.0, %v3918
        %v3920 = vpop.f32.mrb[0].mxu0
        %v3921 = vpop.f32.mrb[0].mxu0
        %v3922 = vadd.f32 0.0, %v3921
        %v3923 = vpop.f32.mrb[0].mxu0
        %3924 = vmatprep.mubr.bf16.mxu0 %v3835
        %3925 = vmatmul.mubr.bf16.gmra.mrb[0].mxu0 %v3834
        %v3926 = vpop.f32.mrb[0].mxu0
        %v3927 = vadd.f32 0.0, %v3926
        %v3928 = vpop.f32.mrb[0].mxu0
        %v3929 = vpop.f32.mrb[0].mxu0
        %v3930 = vadd.f32 0.0, %v3929
        %v3931 = vpop.f32.mrb[0].mxu0
        %3932 = vdwg.mxu0
        %v3933 = vpack.c.bf16 %v3874, %v3871
        %v3934 = vpack.c.bf16 %v3882, %v3879
        %v3935 = vpack.c.bf16 %v3890, %v3887
        %v3936 = vpack.c.bf16 %v3898, %v3895
        %v3937 = vpack.c.bf16 %v3906, %v3903
        %v3938 = vpack.c.bf16 %v3914, %v3911
        %v3939 = vpack.c.bf16 %v3922, %v3919
        %v3940 = vpack.c.bf16 %v3930, %v3927
        %v3957 = vunpack.c.l.b16 %v2897
        %v3958 = vunpack.c.h.b16 %v2897
        %v3959 = vunpack.c.l.b16 %v2898
        %v3960 = vunpack.c.h.b16 %v2898
        %v3961 = vunpack.c.l.b16 %v2899
        %v3962 = vunpack.c.h.b16 %v2899
        %v3963 = vunpack.c.l.b16 %v2900
        %v3964 = vunpack.c.h.b16 %v2900
        %v3965 = vunpack.c.l.b16 %v2901
        %v3966 = vunpack.c.h.b16 %v2901
        %v3967 = vunpack.c.l.b16 %v2902
        %v3968 = vunpack.c.h.b16 %v2902
        %v3969 = vunpack.c.l.b16 %v2903
        %v3970 = vunpack.c.h.b16 %v2903
        %v3971 = vunpack.c.l.b16 %v2904
        %v3972 = vunpack.c.h.b16 %v2904
        %v3973 = vunpack.c.l.b16 %v2905
        %v3974 = vunpack.c.h.b16 %v2905
        %v3975 = vunpack.c.l.b16 %v2906
        %v3976 = vunpack.c.h.b16 %v2906
        %v3977 = vunpack.c.l.b16 %v2907
        %v3978 = vunpack.c.h.b16 %v2907
        %v3979 = vunpack.c.l.b16 %v2908
        %v3980 = vunpack.c.h.b16 %v2908
        %v3981 = vunpack.c.l.b16 %v2909
        %v3982 = vunpack.c.h.b16 %v2909
        %v3983 = vunpack.c.l.b16 %v2910
        %v3984 = vunpack.c.h.b16 %v2910
        %v3985 = vunpack.c.l.b16 %v2911
        %v3986 = vunpack.c.h.b16 %v2911
        %v3987 = vunpack.c.l.b16 %v2912
        %v3988 = vunpack.c.h.b16 %v2912
        %v3989 = vpack.c.b16 %v3959, %v3957
        %v3990 = vpack.c.b16 %v3960, %v3958
        %v3991 = vpack.c.b16 %v3963, %v3961
        %v3992 = vpack.c.b16 %v3964, %v3962
        %v3993 = vpack.c.b16 %v3967, %v3965
        %v3994 = vpack.c.b16 %v3968, %v3966
        %v3995 = vpack.c.b16 %v3971, %v3969
        %v3996 = vpack.c.b16 %v3972, %v3970
        %v3997 = vpack.c.b16 %v3975, %v3973
        %v3998 = vpack.c.b16 %v3976, %v3974
        %v3999 = vpack.c.b16 %v3979, %v3977
        %v4000 = vpack.c.b16 %v3980, %v3978
        %v4001 = vpack.c.b16 %v3983, %v3981
        %v4002 = vpack.c.b16 %v3984, %v3982
        %v4003 = vpack.c.b16 %v3987, %v3985
        %v4004 = vpack.c.b16 %v3988, %v3986
        %4021 = vmatprep.subr.bf16.mxu0 %v3990
        %4022 = vmatpush1.bf16.msra.mxu0 %v3989
        %4023 = vmatprep.subr.bf16.mxu0 %v3992
        %4024 = vmatpush1.bf16.msra.mxu0 %v3991
        %4025 = vmatprep.subr.bf16.mxu0 %v3994
        %4026 = vmatpush1.bf16.msra.mxu0 %v3993
        %4027 = vmatprep.subr.bf16.mxu0 %v3996
        %4028 = vmatpush1.bf16.msra.mxu0 %v3995
        %4029 = vmatprep.subr.bf16.mxu0 %v3998
        %4030 = vmatpush1.bf16.msra.mxu0 %v3997
        %4031 = vmatprep.subr.bf16.mxu0 %v4000
        %4032 = vmatpush1.bf16.msra.mxu0 %v3999
        %4033 = vmatprep.subr.bf16.mxu0 %v4002
        %4034 = vmatpush1.bf16.msra.mxu0 %v4001
        %4035 = vmatprep.subr.bf16.mxu0 %v4004
        %4036 = vmatpush1.bf16.msra.mxu0 %v4003
        %4037 = vmatprep.subr.bf16.mxu0 0
        %4038 = vmatpush1.bf16.msra.mxu0 0
        %4039 = vmatprep.subr.bf16.mxu0 0
        %4040 = vmatpush1.bf16.msra.mxu0 0
        %4041 = vmatprep.subr.bf16.mxu0 0
        %4042 = vmatpush1.bf16.msra.mxu0 0
        %4043 = vmatprep.subr.bf16.mxu0 0
        %4044 = vmatpush1.bf16.msra.mxu0 0
        %4045 = vmatprep.subr.bf16.mxu0 0
        %4046 = vmatpush1.bf16.msra.mxu0 0
        %4047 = vmatprep.subr.bf16.mxu0 0
        %4048 = vmatpush1.bf16.msra.mxu0 0
        %4049 = vmatprep.subr.bf16.mxu0 0
        %4050 = vmatpush1.bf16.msra.mxu0 0
        %4051 = vmatprep.subr.bf16.mxu0 0
        %4052 = vmatpush1.bf16.msra.mxu0 0
        %4053 = vmatprep.mubr.bf16.mxu0 0
        %4054 = vmatmul.mubr.bf16.gmra.mrb[0].mxu0 %v3933
        %v4055 = vpop.f32.mrb[0].mxu0
        %v4056 = vadd.f32 0.0, %v4055
        %v4057 = vpop.f32.mrb[0].mxu0
        %v4058 = vadd.f32 0.0, %v4057
        %v4059 = vpop.f32.mrb[0].mxu0
        %v4060 = vadd.f32 0.0, %v4059
        %v4061 = vpop.f32.mrb[0].mxu0
        %v4062 = vadd.f32 0.0, %v4061
        %4063 = vmatprep.mubr.bf16.mxu0 0
        %4064 = vmatmul.mubr.bf16.gmra.mrb[0].mxu0 %v3934
        %v4065 = vpop.f32.mrb[0].mxu0
        %v4066 = vadd.f32 0.0, %v4065
        %v4067 = vpop.f32.mrb[0].mxu0
        %v4068 = vadd.f32 0.0, %v4067
        %v4069 = vpop.f32.mrb[0].mxu0
        %v4070 = vadd.f32 0.0, %v4069
        %v4071 = vpop.f32.mrb[0].mxu0
        %v4072 = vadd.f32 0.0, %v4071
        %4073 = vmatprep.mubr.bf16.mxu0 0
        %4074 = vmatmul.mubr.bf16.gmra.mrb[0].mxu0 %v3935
        %v4075 = vpop.f32.mrb[0].mxu0
        %v4076 = vadd.f32 0.0, %v4075
        %v4077 = vpop.f32.mrb[0].mxu0
        %v4078 = vadd.f32 0.0, %v4077
        %v4079 = vpop.f32.mrb[0].mxu0
        %v4080 = vadd.f32 0.0, %v4079
        %v4081 = vpop.f32.mrb[0].mxu0
        %v4082 = vadd.f32 0.0, %v4081
        %4083 = vmatprep.mubr.bf16.mxu0 0
        %4084 = vmatmul.mubr.bf16.gmra.mrb[0].mxu0 %v3936
        %v4085 = vpop.f32.mrb[0].mxu0
        %v4086 = vadd.f32 0.0, %v4085
        %v4087 = vpop.f32.mrb[0].mxu0
        %v4088 = vadd.f32 0.0, %v4087
        %v4089 = vpop.f32.mrb[0].mxu0
        %v4090 = vadd.f32 0.0, %v4089
        %v4091 = vpop.f32.mrb[0].mxu0
        %v4092 = vadd.f32 0.0, %v4091
        %4093 = vmatprep.mubr.bf16.mxu0 0
        %4094 = vmatmul.mubr.bf16.gmra.mrb[0].mxu0 %v3937
        %v4095 = vpop.f32.mrb[0].mxu0
        %v4096 = vadd.f32 0.0, %v4095
        %v4097 = vpop.f32.mrb[0].mxu0
        %v4098 = vadd.f32 0.0, %v4097
        %v4099 = vpop.f32.mrb[0].mxu0
        %v4100 = vadd.f32 0.0, %v4099
        %v4101 = vpop.f32.mrb[0].mxu0
        %v4102 = vadd.f32 0.0, %v4101
        %4103 = vmatprep.mubr.bf16.mxu0 0
        %4104 = vmatmul.mubr.bf16.gmra.mrb[0].mxu0 %v3938
        %v4105 = vpop.f32.mrb[0].mxu0
        %v4106 = vadd.f32 0.0, %v4105
        %v4107 = vpop.f32.mrb[0].mxu0
        %v4108 = vadd.f32 0.0, %v4107
        %v4109 = vpop.f32.mrb[0].mxu0
        %v4110 = vadd.f32 0.0, %v4109
        %v4111 = vpop.f32.mrb[0].mxu0
        %v4112 = vadd.f32 0.0, %v4111
        %4113 = vmatprep.mubr.bf16.mxu0 0
        %4114 = vmatmul.mubr.bf16.gmra.mrb[0].mxu0 %v3939
        %v4115 = vpop.f32.mrb[0].mxu0
        %v4116 = vadd.f32 0.0, %v4115
        %v4117 = vpop.f32.mrb[0].mxu0
        %v4118 = vadd.f32 0.0, %v4117
        %v4119 = vpop.f32.mrb[0].mxu0
        %v4120 = vadd.f32 0.0, %v4119
        %v4121 = vpop.f32.mrb[0].mxu0
        %v4122 = vadd.f32 0.0, %v4121
        %4123 = vmatprep.mubr.bf16.mxu0 0
        %4124 = vmatmul.mubr.bf16.gmra.mrb[0].mxu0 %v3940
        %v4125 = vpop.f32.mrb[0].mxu0
        %v4126 = vadd.f32 0.0, %v4125
        %v4127 = vpop.f32.mrb[0].mxu0
        %v4128 = vadd.f32 0.0, %v4127
        %v4129 = vpop.f32.mrb[0].mxu0
        %v4130 = vadd.f32 0.0, %v4129
        %v4131 = vpop.f32.mrb[0].mxu0
        %v4132 = vadd.f32 0.0, %v4131
        %4133 = vdwg.mxu0
        %v4150 = vunpack.c.l.b16 %v2881
        %v4151 = vunpack.c.h.b16 %v2881
        %v4152 = vunpack.c.l.b16 %v2882
        %v4153 = vunpack.c.h.b16 %v2882
        %v4154 = vunpack.c.l.b16 %v2883
        %v4155 = vunpack.c.h.b16 %v2883
        %v4156 = vunpack.c.l.b16 %v2884
        %v4157 = vunpack.c.h.b16 %v2884
        %v4158 = vunpack.c.l.b16 %v2885
        %v4159 = vunpack.c.h.b16 %v2885
        %v4160 = vunpack.c.l.b16 %v2886
        %v4161 = vunpack.c.h.b16 %v2886
        %v4162 = vunpack.c.l.b16 %v2887
        %v4163 = vunpack.c.h.b16 %v2887
        %v4164 = vunpack.c.l.b16 %v2888
        %v4165 = vunpack.c.h.b16 %v2888
        %v4166 = vunpack.c.l.b16 %v2889
        %v4167 = vunpack.c.h.b16 %v2889
        %v4168 = vunpack.c.l.b16 %v2890
        %v4169 = vunpack.c.h.b16 %v2890
        %v4170 = vunpack.c.l.b16 %v2891
        %v4171 = vunpack.c.h.b16 %v2891
        %v4172 = vunpack.c.l.b16 %v2892
        %v4173 = vunpack.c.h.b16 %v2892
        %v4174 = vunpack.c.l.b16 %v2893
        %v4175 = vunpack.c.h.b16 %v2893
        %v4176 = vunpack.c.l.b16 %v2894
        %v4177 = vunpack.c.h.b16 %v2894
        %v4178 = vunpack.c.l.b16 %v2895
        %v4179 = vunpack.c.h.b16 %v2895
        %v4180 = vunpack.c.l.b16 %v2896
        %v4181 = vunpack.c.h.b16 %v2896
        %v4182 = vpack.c.b16 %v4152, %v4150
        %v4183 = vpack.c.b16 %v4153, %v4151
        %v4184 = vpack.c.b16 %v4156, %v4154
        %v4185 = vpack.c.b16 %v4157, %v4155
        %v4186 = vpack.c.b16 %v4160, %v4158
        %v4187 = vpack.c.b16 %v4161, %v4159
        %v4188 = vpack.c.b16 %v4164, %v4162
        %v4189 = vpack.c.b16 %v4165, %v4163
        %v4190 = vpack.c.b16 %v4168, %v4166
        %v4191 = vpack.c.b16 %v4169, %v4167
        %v4192 = vpack.c.b16 %v4172, %v4170
        %v4193 = vpack.c.b16 %v4173, %v4171
        %v4194 = vpack.c.b16 %v4176, %v4174
        %v4195 = vpack.c.b16 %v4177, %v4175
        %v4196 = vpack.c.b16 %v4180, %v4178
        %v4197 = vpack.c.b16 %v4181, %v4179
        %4214 = vmatprep.subr.bf16.mxu0 %v4183
        %4215 = vmatpush1.bf16.msra.mxu0 %v4182
        %4216 = vmatprep.subr.bf16.mxu0 %v4185
        %4217 = vmatpush1.bf16.msra.mxu0 %v4184
        %4218 = vmatprep.subr.bf16.mxu0 %v4187
        %4219 = vmatpush1.bf16.msra.mxu0 %v4186
        %4220 = vmatprep.subr.bf16.mxu0 %v4189
        %4221 = vmatpush1.bf16.msra.mxu0 %v4188
        %4222 = vmatprep.subr.bf16.mxu0 %v4191
        %4223 = vmatpush1.bf16.msra.mxu0 %v4190
        %4224 = vmatprep.subr.bf16.mxu0 %v4193
        %4225 = vmatpush1.bf16.msra.mxu0 %v4192
        %4226 = vmatprep.subr.bf16.mxu0 %v4195
        %4227 = vmatpush1.bf16.msra.mxu0 %v4194
        %4228 = vmatprep.subr.bf16.mxu0 %v4197
        %4229 = vmatpush1.bf16.msra.mxu0 %v4196
        %4230 = vmatprep.subr.bf16.mxu0 0
        %4231 = vmatpush1.bf16.msra.mxu0 0
        %4232 = vmatprep.subr.bf16.mxu0 0
        %4233 = vmatpush1.bf16.msra.mxu0 0
        %4234 = vmatprep.subr.bf16.mxu0 0
        %4235 = vmatpush1.bf16.msra.mxu0 0
        %4236 = vmatprep.subr.bf16.mxu0 0
        %4237 = vmatpush1.bf16.msra.mxu0 0
        %4238 = vmatprep.subr.bf16.mxu0 0
        %4239 = vmatpush1.bf16.msra.mxu0 0
        %4240 = vmatprep.subr.bf16.mxu0 0
        %4241 = vmatpush1.bf16.msra.mxu0 0
        %4242 = vmatprep.subr.bf16.mxu0 0
        %4243 = vmatpush1.bf16.msra.mxu0 0
        %4244 = vmatprep.subr.bf16.mxu0 0
        %4245 = vmatpush1.bf16.msra.mxu0 0
        %4246 = vmatprep.mubr.bf16.mxu0 0
        %4247 = vmatmul.mubr.bf16.gmra.mrb[0].mxu0 %v3419
        %v4248 = vpop.f32.mrb[0].mxu0
        %v4249 = vadd.f32 %v4056, %v4248
        %v4250 = vpop.f32.mrb[0].mxu0
        %v4251 = vadd.f32 %v4058, %v4250
        %v4252 = vpop.f32.mrb[0].mxu0
        %v4253 = vadd.f32 %v4060, %v4252
        %v4254 = vpop.f32.mrb[0].mxu0
        %v4255 = vadd.f32 %v4062, %v4254
        %4256 = vmatprep.mubr.bf16.mxu0 0
        %4257 = vmatmul.mubr.bf16.gmra.mrb[0].mxu0 %v3420
        %v4258 = vpop.f32.mrb[0].mxu0
        %v4259 = vadd.f32 %v4066, %v4258
        %v4260 = vpop.f32.mrb[0].mxu0
        %v4261 = vadd.f32 %v4068, %v4260
        %v4262 = vpop.f32.mrb[0].mxu0
        %v4263 = vadd.f32 %v4070, %v4262
        %v4264 = vpop.f32.mrb[0].mxu0
        %v4265 = vadd.f32 %v4072, %v4264
        %4266 = vmatprep.mubr.bf16.mxu0 0
        %4267 = vmatmul.mubr.bf16.gmra.mrb[0].mxu0 %v3421
        %v4268 = vpop.f32.mrb[0].mxu0
        %v4269 = vadd.f32 %v4076, %v4268
        %v4270 = vpop.f32.mrb[0].mxu0
        %v4271 = vadd.f32 %v4078, %v4270
        %v4272 = vpop.f32.mrb[0].mxu0
        %v4273 = vadd.f32 %v4080, %v4272
        %v4274 = vpop.f32.mrb[0].mxu0
        %v4275 = vadd.f32 %v4082, %v4274
        %4276 = vmatprep.mubr.bf16.mxu0 0
        %4277 = vmatmul.mubr.bf16.gmra.mrb[0].mxu0 %v3422
        %v4278 = vpop.f32.mrb[0].mxu0
        %v4279 = vadd.f32 %v4086, %v4278
        %v4280 = vpop.f32.mrb[0].mxu0
        %v4281 = vadd.f32 %v4088, %v4280
        %v4282 = vpop.f32.mrb[0].mxu0
        %v4283 = vadd.f32 %v4090, %v4282
        %v4284 = vpop.f32.mrb[0].mxu0
        %v4285 = vadd.f32 %v4092, %v4284
        %4286 = vmatprep.mubr.bf16.mxu0 0
        %4287 = vmatmul.mubr.bf16.gmra.mrb[0].mxu0 %v3423
        %v4288 = vpop.f32.mrb[0].mxu0
        %v4289 = vadd.f32 %v4096, %v4288
        %v4290 = vpop.f32.mrb[0].mxu0
        %v4291 = vadd.f32 %v4098, %v4290
        %v4292 = vpop.f32.mrb[0].mxu0
        %v4293 = vadd.f32 %v4100, %v4292
        %v4294 = vpop.f32.mrb[0].mxu0
        %v4295 = vadd.f32 %v4102, %v4294
        %4296 = vmatprep.mubr.bf16.mxu0 0
        %4297 = vmatmul.mubr.bf16.gmra.mrb[0].mxu0 %v3424
        %v4298 = vpop.f32.mrb[0].mxu0
        %v4299 = vadd.f32 %v4106, %v4298
        %v4300 = vpop.f32.mrb[0].mxu0
        %v4301 = vadd.f32 %v4108, %v4300
        %v4302 = vpop.f32.mrb[0].mxu0
        %v4303 = vadd.f32 %v4110, %v4302
        %v4304 = vpop.f32.mrb[0].mxu0
        %v4305 = vadd.f32 %v4112, %v4304
        %4306 = vmatprep.mubr.bf16.mxu0 0
        %4307 = vmatmul.mubr.bf16.gmra.mrb[0].mxu0 %v3425
        %v4308 = vpop.f32.mrb[0].mxu0
        %v4309 = vadd.f32 %v4116, %v4308
        %v4310 = vpop.f32.mrb[0].mxu0
        %v4311 = vadd.f32 %v4118, %v4310
        %v4312 = vpop.f32.mrb[0].mxu0
        %v4313 = vadd.f32 %v4120, %v4312
        %v4314 = vpop.f32.mrb[0].mxu0
        %v4315 = vadd.f32 %v4122, %v4314
        %4316 = vmatprep.mubr.bf16.mxu0 0
        %4317 = vmatmul.mubr.bf16.gmra.mrb[0].mxu0 %v3426
        %v4318 = vpop.f32.mrb[0].mxu0
        %v4319 = vadd.f32 %v4126, %v4318
        %v4320 = vpop.f32.mrb[0].mxu0
        %v4321 = vadd.f32 %v4128, %v4320
        %v4322 = vpop.f32.mrb[0].mxu0
        %v4323 = vadd.f32 %v4130, %v4322
        %v4324 = vpop.f32.mrb[0].mxu0
        %v4325 = vadd.f32 %v4132, %v4324
        %4326 = vdwg.mxu0
        %v4327 = vadd.f32 %v585, %v4249
        %v4328 = vadd.f32 %v586, %v4251
        %v4329 = vadd.f32 %v587, %v4253
        %v4330 = vadd.f32 %v588, %v4255
        %v4331 = vadd.f32 %v589, %v4259
        %v4332 = vadd.f32 %v590, %v4261
        %v4333 = vadd.f32 %v591, %v4263
        %v4334 = vadd.f32 %v592, %v4265
        %v4335 = vadd.f32 %v593, %v4269
        %v4336 = vadd.f32 %v594, %v4271
        %v4337 = vadd.f32 %v595, %v4273
        %v4338 = vadd.f32 %v596, %v4275
        %v4339 = vadd.f32 %v597, %v4279
        %v4340 = vadd.f32 %v598, %v4281
        %v4341 = vadd.f32 %v599, %v4283
        %v4342 = vadd.f32 %v600, %v4285
        %v4343 = vadd.f32 %v601, %v4289
        %v4344 = vadd.f32 %v602, %v4291
        %v4345 = vadd.f32 %v603, %v4293
        %v4346 = vadd.f32 %v604, %v4295
        %v4347 = vadd.f32 %v605, %v4299
        %v4348 = vadd.f32 %v606, %v4301
        %v4349 = vadd.f32 %v607, %v4303
        %v4350 = vadd.f32 %v608, %v4305
        %v4351 = vadd.f32 %v609, %v4309
        %v4352 = vadd.f32 %v610, %v4311
        %v4353 = vadd.f32 %v611, %v4313
        %v4354 = vadd.f32 %v612, %v4315
        %v4355 = vadd.f32 %v613, %v4319
        %v4356 = vadd.f32 %v614, %v4321
        %v4357 = vadd.f32 %v615, %v4323
        %v4358 = vadd.f32 %v616, %v4325
        %v4359 = vld [vmem:[%s13] sm:$0x3]
        %v4361 = vlaneseq
        %v4362 = vshrl.u32 %v4361, 7
        %v4363 = vsub.s32 0, %v4362
        %v4364 = vrot.slane %v4359, %v4363
        %v4365 = vlaneseq
        %v4366 = vshrl.u32 %v4365, 7
        %v4367 = vsub.s32 1, %v4366
        %v4368 = vrot.slane %v4359, %v4367
        %v4371 = vadd.f32 %v4327, %v4364
        %v4372 = vadd.f32 %v4328, %v4368
        %v4373 = vadd.f32 %v4329, %v4364
        %v4374 = vadd.f32 %v4330, %v4368
        %v4375 = vadd.f32 %v4331, %v4364
        %v4376 = vadd.f32 %v4332, %v4368
        %v4377 = vadd.f32 %v4333, %v4364
        %v4378 = vadd.f32 %v4334, %v4368
        %v4379 = vadd.f32 %v4335, %v4364
        %v4380 = vadd.f32 %v4336, %v4368
        %v4381 = vadd.f32 %v4337, %v4364
        %v4382 = vadd.f32 %v4338, %v4368
        %v4383 = vadd.f32 %v4339, %v4364
        %v4384 = vadd.f32 %v4340, %v4368
        %v4385 = vadd.f32 %v4341, %v4364
        %v4386 = vadd.f32 %v4342, %v4368
        %v4387 = vadd.f32 %v4343, %v4364
        %v4388 = vadd.f32 %v4344, %v4368
        %v4389 = vadd.f32 %v4345, %v4364
        %v4390 = vadd.f32 %v4346, %v4368
        %v4391 = vadd.f32 %v4347, %v4364
        %v4392 = vadd.f32 %v4348, %v4368
        %v4393 = vadd.f32 %v4349, %v4364
        %v4394 = vadd.f32 %v4350, %v4368
        %v4395 = vadd.f32 %v4351, %v4364
        %v4396 = vadd.f32 %v4352, %v4368
        %v4397 = vadd.f32 %v4353, %v4364
        %v4398 = vadd.f32 %v4354, %v4368
        %v4399 = vadd.f32 %v4355, %v4364
        %v4400 = vadd.f32 %v4356, %v4368
        %v4401 = vadd.f32 %v4357, %v4364
        %v4402 = vadd.f32 %v4358, %v4368
        %4403 = vst [vmem:[%s583] sm:$0xff] %v4371
        %4404 = vst [vmem:[%s583 + $0x8] sm:$0xff] %v4372
        %4405 = vst [vmem:[%s583 + $0x10] sm:$0xff] %v4373
        %4406 = vst [vmem:[%s583 + $0x18] sm:$0xff] %v4374
        %4407 = vst [vmem:[%s583 + $0x20] sm:$0xff] %v4375
        %4408 = vst [vmem:[%s583 + $0x28] sm:$0xff] %v4376
        %4409 = vst [vmem:[%s583 + $0x30] sm:$0xff] %v4377
        %4410 = vst [vmem:[%s583 + $0x38] sm:$0xff] %v4378
        %4411 = vst [vmem:[%s583 + $0x40] sm:$0xff] %v4379
        %4412 = vst [vmem:[%s583 + $0x48] sm:$0xff] %v4380
        %4413 = vst [vmem:[%s583 + $0x50] sm:$0xff] %v4381
        %4414 = vst [vmem:[%s583 + $0x58] sm:$0xff] %v4382
        %4415 = vst [vmem:[%s583 + $0x60] sm:$0xff] %v4383
        %4416 = vst [vmem:[%s583 + $0x68] sm:$0xff] %v4384
        %4417 = vst [vmem:[%s583 + $0x70] sm:$0xff] %v4385
        %4418 = vst [vmem:[%s583 + $0x78] sm:$0xff] %v4386
        %4419 = vst [vmem:[%s583 + $0x80] sm:$0xff] %v4387
        %4420 = vst [vmem:[%s583 + $0x88] sm:$0xff] %v4388
        %4421 = vst [vmem:[%s583 + $0x90] sm:$0xff] %v4389
        %4422 = vst [vmem:[%s583 + $0x98] sm:$0xff] %v4390
        %4423 = vst [vmem:[%s583 + $0xa0] sm:$0xff] %v4391
        %4424 = vst [vmem:[%s583 + $0xa8] sm:$0xff] %v4392
        %4425 = vst [vmem:[%s583 + $0xb0] sm:$0xff] %v4393
        %4426 = vst [vmem:[%s583 + $0xb8] sm:$0xff] %v4394
        %4427 = vst [vmem:[%s583 + $0xc0] sm:$0xff] %v4395
        %4428 = vst [vmem:[%s583 + $0xc8] sm:$0xff] %v4396
        %4429 = vst [vmem:[%s583 + $0xd0] sm:$0xff] %v4397
        %4430 = vst [vmem:[%s583 + $0xd8] sm:$0xff] %v4398
        %4431 = vst [vmem:[%s583 + $0xe0] sm:$0xff] %v4399
        %4432 = vst [vmem:[%s583 + $0xe8] sm:$0xff] %v4400
        %4433 = vst [vmem:[%s583 + $0xf0] sm:$0xff] %v4401
        %4434 = vst [vmem:[%s583 + $0xf8] sm:$0xff] %v4402
        %s4435 = sand.u32 %s348, 1
        %s4436 = scalar_lea.sflag [#allocation4], %s4435
        %s4437 = sand.u32 %s348, 1
        %s4438 = smul.addr %s4437, 256
        %s4439 = scalar_lea.vmem [#allocation13], %s4438
        // Predicated region
        $region101: #{tpu_custom_call.1} parent=75 // pred_check
          %p4440 = pneg %p358
        $region102: #{tpu_custom_call.1} parent=75 // pred_check_branch
          %4442 = sbr.rel (%p4440) target = $region104
        $region103: #{tpu_custom_call.1} parent=75 // pred_region
          %s4444 = ssub.s32 4096, 4096
          %4445 = vsyncadd %s4436, %s4444
          %s4446 = smul.addr %s36, 32
          %s4447 = smul.addr %s4446, 128
          %s4448 = scalar_lea.hbm %s14, %s4447
          %s4449 = sshll.u32 %s4439, 4
          %s4450 = int_to_ptr.vmem [resolvable:$true] %s4449
          %4455 = dma.vmem_to_hbm [thread:$0]  %s4450, 4096, %s4448, %s4436, 256, 256, 16
        $region104: #{tpu_custom_call.1} parent=75 // pred_fallthru
          _
      $region76: #{tpu_custom_call.1} parent=5 // pred_fallthru
        _
      %p4456 = scmp.le.s32.totalorder 2, %s31
      // Predicated region
      $region105: #{tpu_custom_call.1} parent=5 // pred_check
        %p4457 = pneg %p4456
      $region106: #{tpu_custom_call.1} parent=5 // pred_check_branch
        %4459 = sbr.rel (%p4457) target = $region108
      $region107: #{tpu_custom_call.1} parent=5 // pred_region
        %s4460 = ssub.s32 %s31, 2
        // Predicated region
        $region109: #{tpu_custom_call.1} parent=107 // pred_check
          %p4461 = pneg %p364
        $region110: #{tpu_custom_call.1} parent=107 // pred_check_branch
          %4463 = sbr.rel (%p4461) target = $region112
        $region111: #{tpu_custom_call.1} parent=107 // pred_region
          %s4464 = sand.u32 %s349, 1
          %s4465 = scalar_lea.sflag [#allocation4], %s4464
          %s4466 = sand.u32 %s349, 1
          %s4467 = smul.addr %s4466, 256
          %s4468 = scalar_lea.vmem [#allocation13], %s4467
          %4469 = dma.done %s4465, 4096
        $region112: #{tpu_custom_call.1} parent=107 // pred_fallthru
          _
      $region108: #{tpu_custom_call.1} parent=5 // pred_fallthru
        _
    $region6: #{tpu_custom_call.1} parent=1 // loop_footer
      %s35 = sadd.s32 1, %s31
    $region7: #{tpu_custom_call.1} parent=1 // loop_footer_branch
      %30 = sbr.rel target = $region3
    $region8: #{tpu_custom_call.1} parent=1 // loop_exit
      _
    %4470 = vsyncpa [#allocation3], 1
    %s4471 = scalar_lea.sflag [#allocation3], 1
    %4472 = vsyncpa %s4471, 1
    %4473 = vsyncpa [#allocation6], 1
    %s4474 = scalar_lea.sflag [#allocation6], 1
    %4475 = vsyncpa %s4474, 1
    %4476 = vsyncpa [#allocation9], 1
    %4477 = vsyncpa [#allocation12], 1
    %4478 = vsyncpa [#allocation4], 1
    %s4479 = scalar_lea.sflag [#allocation4], 1
    %4480 = vsyncpa %s4479, 1

</llo_original>
